<compile_context>
chip_gen: v5e
topology: v5e:2x2
jax: 0.10.0
libtpu: 0.0.40
codegen_flags: <defaults>
</compile_context>

<pallas_src>
import math

import jax
import jax.numpy as jnp
from jax.experimental import pallas as pl
from jax.experimental.pallas import tpu as pltpu

D_MODEL = 32
N_HEADS = 4
D_K = D_MODEL // N_HEADS
D_FF = 64
EPS = 1e-6  # torch LayerNorm in the spec adds eps to std


# ============================== fused kernel ==============================

def _decoder_layer_kernel(x_ref, mem_ref, trg_mask_ref, src_mask_ref, p_ref,
                          o_ref, ctx_ref):
    f32 = jnp.float32
    B, Tq, D = x_ref.shape
    Tk = mem_ref.shape[1]
    H = N_HEADS
    dk = D // H
    DFF = D_FF

    # ---- unpack the single packed parameter blob (static slices, stays in VMEM) ----
    P = p_ref[...]
    wqkv = P[0:D, 0:3 * D]                     # (D, 3D)  [Wq*(1/sqrt(dk)) | Wk | Wv]
    wo = P[0:D, 3 * D:4 * D]                   # (D, D)
    w1 = P[0:D, 4 * D:4 * D + DFF]             # (D, DFF)
    w2 = P[D:D + DFF, 0:D]                     # (DFF, D)
    v0 = P[D + DFF:D + DFF + 1, :]             # (1, 256)
    v1 = P[D + DFF + 1:D + DFF + 2, :]         # (1, 256)
    bqkv = v0[:, 0:3 * D]
    bo = v0[:, 3 * D:4 * D]
    b1 = v0[:, 4 * D:4 * D + DFF]
    b2 = v0[:, 4 * D + DFF:5 * D + DFF]
    g1 = v0[:, 5 * D + DFF:6 * D + DFF]
    be1 = v1[:, 0:D]
    g2 = v1[:, D:2 * D]
    be2 = v1[:, 2 * D:3 * D]
    g3 = v1[:, 3 * D:4 * D]
    be3 = v1[:, 4 * D:5 * D]

    def layer_norm(y, g, b):
        # torch: a_2 * (y - mean) / (std + eps) + b_2, std unbiased (n-1)
        mean = jnp.mean(y, axis=-1, keepdims=True)
        var = jnp.sum((y - mean) ** 2, axis=-1, keepdims=True) * (1.0 / (D - 1))
        inv = pl.reciprocal(jnp.sqrt(var) + EPS, approx=False)     # EUP, exact
        return g * ((y - mean) * inv) + b

    def mha(q, k, v, mask):
        # q:(Tq,D), k/v:(Nk,D) already projected (Q pre-scaled by 1/sqrt(dk)).
        nk = k.shape[0]
        keep = jnp.broadcast_to(mask, (Tq, nk)) != 0       # hoisted out of head loop
        for h in range(H):                                 # unrolled, H=4
            sl = slice(h * dk, (h + 1) * dk)
            s = jnp.dot(q[:, sl], k[:, sl].T, preferred_element_type=f32)
            s = jnp.where(keep, s, jnp.float32(-1e9))      # torch masked_fill
            p = jnp.exp(s - jnp.max(s, axis=-1, keepdims=True))
            p = p * pl.reciprocal(jnp.sum(p, axis=-1, keepdims=True), approx=True)
            ctx_ref[:, sl] = jnp.dot(p, v[:, sl], preferred_element_type=f32)
        # single K=D output projection instead of 4 depth-dk per-head folds
        return jnp.dot(ctx_ref[...], wo, preferred_element_type=f32) + bo

    x3 = x_ref[...].astype(f32)
    m3 = mem_ref[...].astype(f32)
    tm = trg_mask_ref[...]
    sm = src_mask_ref[...]

    for b in range(B):                                     # unrolled, independent elems
        xb = x3[b]                                         # (Tq, D)
        mb = m3[b]                                         # (Tk, D)

        # shared QKV projection for x and memory in one MXU launch
        xm = jnp.concatenate([xb, mb], axis=0)                        # (Tq+Tk, D)
        qkv = jnp.dot(xm, wqkv, preferred_element_type=f32) + bqkv    # (Tq+Tk, 3D)

        # sublayer 0: masked self-attention, Add & Norm (post-norm)
        a1 = mha(qkv[0:Tq, 0:D], qkv[0:Tq, D:2 * D], qkv[0:Tq, 2 * D:3 * D], tm[b])
        l1 = layer_norm(xb + a1, g1, be1)

        # sublayer 1: cross-attention over encoder memory, Add & Norm
        q2 = jnp.dot(l1, wqkv[:, 0:D], preferred_element_type=f32) + bqkv[:, 0:D]
        a2 = mha(q2, qkv[Tq:, D:2 * D], qkv[Tq:, 2 * D:3 * D], sm[b])
        l2 = layer_norm(l1 + a2, g2, be2)

        # last sublayer: position-wise FFN, Add & Norm
        h1 = jnp.maximum(jnp.dot(l2, w1, preferred_element_type=f32) + b1, 0.0)
        ff = jnp.dot(h1, w2, preferred_element_type=f32) + b2
        l3 = layer_norm(l2 + ff, g3, be3)

        o_ref[b] = l3.astype(o_ref.dtype)
        # TODO(synk): lane-dense (B, Tq*D) output packing for the store path at scale.


# ============================== python wrapper ==============================

def decoder_layer(packed_params, x, memory, src_mask, trg_mask):
    """Fused DecoderLayer forward (r2l_memory=None path).

    x: (B, Tq, D) f32, memory: (B, Tk, D) f32,
    src_mask: (B, 1, Tk) int, trg_mask: (B, Tq, Tq) int.  Returns (B, Tq, D).
    """
    B, Tq, D = x.shape
    Tk = memory.shape[1]

    def full(shape):
        return pl.BlockSpec(shape, lambda i, _n=len(shape): (0,) * _n)

    return pl.pallas_call(
        _decoder_layer_kernel,
        grid=(1,),                               # single step; whole problem resident in VMEM
        out_shape=jax.ShapeDtypeStruct((B, Tq, D), x.dtype),
        in_specs=[
            full((B, Tq, D)),                    # x
            full((B, Tk, D)),                    # memory
            full((B, Tq, Tq)),                   # trg_mask
            full((B, 1, Tk)),                    # src_mask
            full(packed_params.shape),           # packed parameter blob
        ],
        out_specs=full((B, Tq, D)),
        scratch_shapes=[pltpu.VMEM((Tq, D), jnp.float32)],   # per-head ctx assembly buffer
        compiler_params=pltpu.CompilerParams(
            dimension_semantics=("arbitrary",),
        ),
    )(x, memory, trg_mask.astype(jnp.int32), src_mask.astype(jnp.int32),
      packed_params)


# ============================== parameter packing ==============================

def pack_params(params):
    """Pack all weights/biases/LN params into one lane-dense f32 blob (98, 256).

    Layout (C = 4*D + 2*D_FF = 256 cols):
      rows [0, D):        [ wqkv(Q cols pre-scaled by 1/sqrt(dk)) | wo | w1 | pad ]
      rows [D, D+DFF):    [ w2 | pad ]
      row  D+DFF:         [ bqkv | bo | b1 | b2 | ln1_g ]
      row  D+DFF+1:       [ ln1_b | ln2_g | ln2_b | ln3_g | ln3_b | pad ]
    Done once at parameter-build time (includes the softmax-scale fold).
    """
    D, DFF = D_MODEL, D_FF
    C = 4 * D + 2 * DFF
    scale = 1.0 / math.sqrt(D // N_HEADS)
    wqkv = params["wqkv"].at[:, :D].multiply(scale)   # fold 1/sqrt(dk) into Wq
    bqkv = params["bqkv"].at[:, :D].multiply(scale)
    z = lambda r, c: jnp.zeros((r, c), jnp.float32)
    row_w = jnp.concatenate(
        [wqkv, params["wo"], params["ff_w1"], z(D, C - 4 * D - DFF)], axis=1)
    row_w2 = jnp.concatenate([params["ff_w2"], z(DFF, C - D)], axis=1)
    vec0 = jnp.concatenate(
        [bqkv, params["bo"], params["ff_b1"], params["ff_b2"], params["ln1_g"]], axis=1)
    vec1 = jnp.concatenate(
        [params["ln1_b"], params["ln2_g"], params["ln2_b"],
         params["ln3_g"], params["ln3_b"], z(1, C - 5 * D)], axis=1)
    return jnp.concatenate([row_w, row_w2, vec0, vec1], axis=0)   # (D + DFF + 2, C)


# ============================== parameter init ==============================

def _linear_init(key, fan_in, fan_out):
    kw, kb = jax.random.split(key)
    bound = 1.0 / math.sqrt(fan_in)
    w = jax.random.uniform(kw, (fan_in, fan_out), jnp.float32, -bound, bound)
    b = jax.random.uniform(kb, (1, fan_out), jnp.float32, -bound, bound)
    return w, b


def init_params(key):
    ks = jax.random.split(key, 6)
    wq, bq = _linear_init(ks[0], D_MODEL, D_MODEL)
    wk, bk = _linear_init(ks[1], D_MODEL, D_MODEL)
    wv, bv = _linear_init(ks[2], D_MODEL, D_MODEL)
    wo, bo = _linear_init(ks[3], D_MODEL, D_MODEL)
    ff_w1, ff_b1 = _linear_init(ks[4], D_MODEL, D_FF)
    ff_w2, ff_b2 = _linear_init(ks[5], D_FF, D_MODEL)
    ones = jnp.ones((1, D_MODEL), jnp.float32)
    zeros = jnp.zeros((1, D_MODEL), jnp.float32)
    return dict(
        # the SAME attention module (shared weights) is used for self- and
        # cross-attention in the spec's DecoderLayer.forward
        wqkv=jnp.concatenate([wq, wk, wv], axis=1),     # (D, 3D)
        bqkv=jnp.concatenate([bq, bk, bv], axis=1),     # (1, 3D)
        wo=wo, bo=bo,
        ff_w1=ff_w1, ff_b1=ff_b1, ff_w2=ff_w2, ff_b2=ff_b2,
        ln1_g=ones, ln1_b=zeros,
        ln2_g=ones, ln2_b=zeros,
        ln3_g=ones, ln3_b=zeros,
    )


# ============================== pure-JAX reference ==============================

def _reference(params, x, memory, src_mask, trg_mask):
    D, H = D_MODEL, N_HEADS
    dk = D // H

    def ln(y, g, b):
        mu = jnp.mean(y, axis=-1, keepdims=True)
        sd = jnp.sqrt(jnp.sum((y - mu) ** 2, axis=-1, keepdims=True) / (y.shape[-1] - 1))
        return g * (y - mu) / (sd + EPS) + b

    def attn(q_in, k_in, v_in, mask):
        wqkv, bqkv = params["wqkv"], params["bqkv"]
        q = q_in @ wqkv[:, :D] + bqkv[:, :D]
        k = k_in @ wqkv[:, D:2 * D] + bqkv[:, D:2 * D]
        v = v_in @ wqkv[:, 2 * D:] + bqkv[:, 2 * D:]
        Bq, Nq, _ = q.shape
        Nk = k.shape[1]
        q = q.reshape(Bq, Nq, H, dk).transpose(0, 2, 1, 3)
        k = k.reshape(Bq, Nk, H, dk).transpose(0, 2, 1, 3)
        v = v.reshape(Bq, Nk, H, dk).transpose(0, 2, 1, 3)
        s = jnp.einsum("bhqd,bhkd->bhqk", q, k) / math.sqrt(dk)
        s = jnp.where(mask[:, None] == 0, -1e9, s)
        p = jax.nn.softmax(s, axis=-1)
        ctx = jnp.einsum("bhqk,bhkd->bhqd", p, v)
        ctx = ctx.transpose(0, 2, 1, 3).reshape(Bq, Nq, D)
        return ctx @ params["wo"] + params["bo"]

    l1 = ln(x + attn(x, x, x, trg_mask), params["ln1_g"], params["ln1_b"])
    l2 = ln(l1 + attn(l1, memory, memory, src_mask), params["ln2_g"], params["ln2_b"])
    ff = jnp.maximum(l2 @ params["ff_w1"] + params["ff_b1"], 0.0) @ params["ff_w2"] + params["ff_b2"]
    return ln(l2 + ff, params["ln3_g"], params["ln3_b"])


# ================================== main ==================================

if __name__ == "__main__":
    B, T_TRG, T_SRC = 2, 8, 10

    key = jax.random.PRNGKey(0)
    k_x, k_mem, k_p = jax.random.split(key, 3)

    x = jax.random.normal(k_x, (B, T_TRG, D_MODEL), jnp.float32)
    memory = jax.random.normal(k_mem, (B, T_SRC, D_MODEL), jnp.float32)

    # src_mask: (B, 1, T_SRC) -- all source positions valid
    src_mask = jnp.ones((B, 1, T_SRC), jnp.int32)
    # trg_mask: (B, T_TRG, T_TRG) causal (subsequent-position) mask
    trg_mask = jnp.broadcast_to(
        jnp.tril(jnp.ones((T_TRG, T_TRG), jnp.int32))[None], (B, T_TRG, T_TRG))

    params = init_params(k_p)
    packed = pack_params(params)

    out = decoder_layer(packed, x, memory, src_mask, trg_mask)
    out = jax.block_until_ready(out)

    assert out.shape == (B, T_TRG, D_MODEL)
    assert bool(jnp.isfinite(out).all())

    ref = _reference(params, x, memory, src_mask, trg_mask)
    assert bool(jnp.allclose(out, ref, rtol=2e-2, atol=2e-2)), \
        float(jnp.max(jnp.abs(out - ref)))

    print("KERNEL_OK")
</pallas_src>

<mosaic_0001>
module attributes {stable_mosaic.version = 11 : i64} {
  func.func @_decoder_layer_kernel(%arg0: i32, %arg1: memref<2x8x32xf32, #tpu.memory_space<vmem>>, %arg2: memref<2x10x32xf32, #tpu.memory_space<vmem>>, %arg3: memref<2x8x8xi32, #tpu.memory_space<vmem>>, %arg4: memref<2x1x10xi32, #tpu.memory_space<vmem>>, %arg5: memref<98x256xf32, #tpu.memory_space<vmem>>, %arg6: memref<2x8x32xf32, #tpu.memory_space<vmem>>, %arg7: memref<8x32xf32, #tpu.memory_space<vmem>>) attributes {dimension_semantics = [#tpu.dimension_semantics<arbitrary>], iteration_bounds = array<i64: 1>, scalar_prefetch = 0 : i64, scratch_operands = 1 : i64, tpu.core_type = #tpu.core_type<tc>, window_params = [{pipeline_mode = #tpu.pipeline_mode<synchronous>, transform_indices = @transform_0, window_bounds = array<i64: 2, 8, 32>}, {pipeline_mode = #tpu.pipeline_mode<synchronous>, transform_indices = @transform_1, window_bounds = array<i64: 2, 10, 32>}, {pipeline_mode = #tpu.pipeline_mode<synchronous>, transform_indices = @transform_2, window_bounds = array<i64: 2, 8, 8>}, {pipeline_mode = #tpu.pipeline_mode<synchronous>, transform_indices = @transform_3, window_bounds = array<i64: 2, 1, 10>}, {pipeline_mode = #tpu.pipeline_mode<synchronous>, transform_indices = @transform_4, window_bounds = array<i64: 98, 256>}, {pipeline_mode = #tpu.pipeline_mode<synchronous>, transform_indices = @transform_5, window_bounds = array<i64: 2, 8, 32>}]} {
    %c0 = arith.constant 0 : index
    %c0_0 = arith.constant 0 : index
    %0 = vector.load %arg5[%c0, %c0_0] : memref<98x256xf32, #tpu.memory_space<vmem>>, vector<98x256xf32>
    %1 = vector.extract_strided_slice %0 {offsets = [0, 0], sizes = [32, 96], strides = [1, 1]} : vector<98x256xf32> to vector<32x96xf32>
    %2 = vector.extract_strided_slice %0 {offsets = [0, 96], sizes = [32, 32], strides = [1, 1]} : vector<98x256xf32> to vector<32x32xf32>
    %3 = vector.extract_strided_slice %0 {offsets = [0, 128], sizes = [32, 64], strides = [1, 1]} : vector<98x256xf32> to vector<32x64xf32>
    %4 = vector.extract_strided_slice %0 {offsets = [32, 0], sizes = [64, 32], strides = [1, 1]} : vector<98x256xf32> to vector<64x32xf32>
    %5 = vector.extract_strided_slice %0 {offsets = [96, 0], sizes = [1, 256], strides = [1, 1]} : vector<98x256xf32> to vector<1x256xf32>
    %6 = vector.extract_strided_slice %0 {offsets = [97, 0], sizes = [1, 256], strides = [1, 1]} : vector<98x256xf32> to vector<1x256xf32>
    %7 = vector.extract_strided_slice %5 {offsets = [0, 0], sizes = [1, 96], strides = [1, 1]} : vector<1x256xf32> to vector<1x96xf32>
    %8 = vector.extract_strided_slice %5 {offsets = [0, 96], sizes = [1, 32], strides = [1, 1]} : vector<1x256xf32> to vector<1x32xf32>
    %9 = vector.extract_strided_slice %5 {offsets = [0, 128], sizes = [1, 64], strides = [1, 1]} : vector<1x256xf32> to vector<1x64xf32>
    %10 = vector.extract_strided_slice %5 {offsets = [0, 192], sizes = [1, 32], strides = [1, 1]} : vector<1x256xf32> to vector<1x32xf32>
    %11 = vector.extract_strided_slice %5 {offsets = [0, 224], sizes = [1, 32], strides = [1, 1]} : vector<1x256xf32> to vector<1x32xf32>
    %12 = vector.extract_strided_slice %6 {offsets = [0, 0], sizes = [1, 32], strides = [1, 1]} : vector<1x256xf32> to vector<1x32xf32>
    %13 = vector.extract_strided_slice %6 {offsets = [0, 32], sizes = [1, 32], strides = [1, 1]} : vector<1x256xf32> to vector<1x32xf32>
    %14 = vector.extract_strided_slice %6 {offsets = [0, 64], sizes = [1, 32], strides = [1, 1]} : vector<1x256xf32> to vector<1x32xf32>
    %15 = vector.extract_strided_slice %6 {offsets = [0, 96], sizes = [1, 32], strides = [1, 1]} : vector<1x256xf32> to vector<1x32xf32>
    %16 = vector.extract_strided_slice %6 {offsets = [0, 128], sizes = [1, 32], strides = [1, 1]} : vector<1x256xf32> to vector<1x32xf32>
    %c0_1 = arith.constant 0 : index
    %c0_2 = arith.constant 0 : index
    %c0_3 = arith.constant 0 : index
    %17 = vector.load %arg1[%c0_1, %c0_2, %c0_3] : memref<2x8x32xf32, #tpu.memory_space<vmem>>, vector<2x8x32xf32>
    %c0_4 = arith.constant 0 : index
    %c0_5 = arith.constant 0 : index
    %c0_6 = arith.constant 0 : index
    %18 = vector.load %arg2[%c0_4, %c0_5, %c0_6] : memref<2x10x32xf32, #tpu.memory_space<vmem>>, vector<2x10x32xf32>
    %c0_7 = arith.constant 0 : index
    %c0_8 = arith.constant 0 : index
    %c0_9 = arith.constant 0 : index
    %19 = vector.load %arg3[%c0_7, %c0_8, %c0_9] : memref<2x8x8xi32, #tpu.memory_space<vmem>>, vector<2x8x8xi32>
    %c0_10 = arith.constant 0 : index
    %c0_11 = arith.constant 0 : index
    %c0_12 = arith.constant 0 : index
    %20 = vector.load %arg4[%c0_10, %c0_11, %c0_12] : memref<2x1x10xi32, #tpu.memory_space<vmem>>, vector<2x1x10xi32>
    %21 = vector.extract_strided_slice %17 {offsets = [0, 0, 0], sizes = [1, 8, 32], strides = [1, 1, 1]} : vector<2x8x32xf32> to vector<1x8x32xf32>
    %22 = vector.shape_cast %21 : vector<1x8x32xf32> to vector<8x32xf32>
    %23 = vector.extract_strided_slice %18 {offsets = [0, 0, 0], sizes = [1, 10, 32], strides = [1, 1, 1]} : vector<2x10x32xf32> to vector<1x10x32xf32>
    %24 = vector.shape_cast %23 : vector<1x10x32xf32> to vector<10x32xf32>
    %25 = tpu.concatenate %22, %24 in 0 : vector<8x32xf32>, vector<10x32xf32> -> vector<18x32xf32>
    %cst = arith.constant dense<0.000000e+00> : vector<18x96xf32>
    %26 = tpu.matmul %25, %1, %cst {dimension_numbers = #tpu.dot_dimension_numbers<[1], [0], [0], [1], [0, 0, 1, 1], [], []>} : vector<18x32xf32>, vector<32x96xf32>, vector<18x96xf32> -> vector<18x96xf32>
    %27 = vector.broadcast %7 : vector<1x96xf32> to vector<18x96xf32>
    %28 = arith.addf %26, %27 : vector<18x96xf32>
    %29 = vector.extract_strided_slice %28 {offsets = [0, 0], sizes = [8, 32], strides = [1, 1]} : vector<18x96xf32> to vector<8x32xf32>
    %30 = vector.extract_strided_slice %28 {offsets = [0, 32], sizes = [8, 32], strides = [1, 1]} : vector<18x96xf32> to vector<8x32xf32>
    %31 = vector.extract_strided_slice %28 {offsets = [0, 64], sizes = [8, 32], strides = [1, 1]} : vector<18x96xf32> to vector<8x32xf32>
    %32 = vector.extract_strided_slice %19 {offsets = [0, 0, 0], sizes = [1, 8, 8], strides = [1, 1, 1]} : vector<2x8x8xi32> to vector<1x8x8xi32>
    %33 = vector.shape_cast %32 : vector<1x8x8xi32> to vector<8x8xi32>
    %c0_i32 = arith.constant 0 : i32
    %34 = vector.broadcast %c0_i32 : i32 to vector<8x8xi32>
    %35 = arith.cmpi ne, %33, %34 : vector<8x8xi32>
    %36 = vector.extract_strided_slice %29 {offsets = [0, 0], sizes = [8, 8], strides = [1, 1]} : vector<8x32xf32> to vector<8x8xf32>
    %37 = vector.extract_strided_slice %30 {offsets = [0, 0], sizes = [8, 8], strides = [1, 1]} : vector<8x32xf32> to vector<8x8xf32>
    %38 = tpu.transpose %37, [1, 0] : vector<8x8xf32> -> vector<8x8xf32>
    %cst_13 = arith.constant dense<0.000000e+00> : vector<8x8xf32>
    %39 = tpu.matmul %36, %38, %cst_13 {dimension_numbers = #tpu.dot_dimension_numbers<[1], [0], [0], [1], [0, 0, 1, 1], [], []>} : vector<8x8xf32>, vector<8x8xf32>, vector<8x8xf32> -> vector<8x8xf32>
    %cst_14 = arith.constant -1.000000e+09 : f32
    %40 = vector.broadcast %cst_14 : f32 to vector<8x8xf32>
    %41 = arith.select %35, %39, %40 : vector<8x8xi1>, vector<8x8xf32>
    %cst_15 = arith.constant dense<0xFF800000> : vector<8xf32>
    %42 = vector.multi_reduction <maximumf>, %41, %cst_15 [1] : vector<8x8xf32> to vector<8xf32>
    %43 = vector.shape_cast %42 : vector<8xf32> to vector<8x1xf32>
    %44 = vector.broadcast %43 : vector<8x1xf32> to vector<8x8xf32>
    %45 = arith.subf %41, %44 : vector<8x8xf32>
    %46 = math.exp %45 : vector<8x8xf32>
    %cst_16 = arith.constant dense<0.000000e+00> : vector<8xf32>
    %47 = vector.multi_reduction <add>, %46, %cst_16 [1] : vector<8x8xf32> to vector<8xf32>
    %48 = vector.shape_cast %47 : vector<8xf32> to vector<8x1xf32>
    %49 = tpu.reciprocal %48 {approx = true} : vector<8x1xf32> -> vector<8x1xf32>
    %50 = vector.broadcast %49 : vector<8x1xf32> to vector<8x8xf32>
    %51 = arith.mulf %46, %50 : vector<8x8xf32>
    %52 = vector.extract_strided_slice %31 {offsets = [0, 0], sizes = [8, 8], strides = [1, 1]} : vector<8x32xf32> to vector<8x8xf32>
    %cst_17 = arith.constant dense<0.000000e+00> : vector<8x8xf32>
    %53 = tpu.matmul %51, %52, %cst_17 {dimension_numbers = #tpu.dot_dimension_numbers<[1], [0], [0], [1], [0, 0, 1, 1], [], []>} : vector<8x8xf32>, vector<8x8xf32>, vector<8x8xf32> -> vector<8x8xf32>
    %c0_18 = arith.constant 0 : index
    %c0_19 = arith.constant 0 : index
    %54 = vector.load %arg7[%c0_18, %c0_19] : memref<8x32xf32, #tpu.memory_space<vmem>>, vector<8x8xf32>
    tpu.vector_store %arg7[%c0_18, %c0_19], %53 {strides = array<i32>} : memref<8x32xf32, #tpu.memory_space<vmem>>, vector<8x8xf32>,
    %55 = vector.extract_strided_slice %29 {offsets = [0, 8], sizes = [8, 8], strides = [1, 1]} : vector<8x32xf32> to vector<8x8xf32>
    %56 = vector.extract_strided_slice %30 {offsets = [0, 8], sizes = [8, 8], strides = [1, 1]} : vector<8x32xf32> to vector<8x8xf32>
    %57 = tpu.transpose %56, [1, 0] : vector<8x8xf32> -> vector<8x8xf32>
    %cst_20 = arith.constant dense<0.000000e+00> : vector<8x8xf32>
    %58 = tpu.matmul %55, %57, %cst_20 {dimension_numbers = #tpu.dot_dimension_numbers<[1], [0], [0], [1], [0, 0, 1, 1], [], []>} : vector<8x8xf32>, vector<8x8xf32>, vector<8x8xf32> -> vector<8x8xf32>
    %cst_21 = arith.constant -1.000000e+09 : f32
    %59 = vector.broadcast %cst_21 : f32 to vector<8x8xf32>
    %60 = arith.select %35, %58, %59 : vector<8x8xi1>, vector<8x8xf32>
    %cst_22 = arith.constant dense<0xFF800000> : vector<8xf32>
    %61 = vector.multi_reduction <maximumf>, %60, %cst_22 [1] : vector<8x8xf32> to vector<8xf32>
    %62 = vector.shape_cast %61 : vector<8xf32> to vector<8x1xf32>
    %63 = vector.broadcast %62 : vector<8x1xf32> to vector<8x8xf32>
    %64 = arith.subf %60, %63 : vector<8x8xf32>
    %65 = math.exp %64 : vector<8x8xf32>
    %cst_23 = arith.constant dense<0.000000e+00> : vector<8xf32>
    %66 = vector.multi_reduction <add>, %65, %cst_23 [1] : vector<8x8xf32> to vector<8xf32>
    %67 = vector.shape_cast %66 : vector<8xf32> to vector<8x1xf32>
    %68 = tpu.reciprocal %67 {approx = true} : vector<8x1xf32> -> vector<8x1xf32>
    %69 = vector.broadcast %68 : vector<8x1xf32> to vector<8x8xf32>
    %70 = arith.mulf %65, %69 : vector<8x8xf32>
    %71 = vector.extract_strided_slice %31 {offsets = [0, 8], sizes = [8, 8], strides = [1, 1]} : vector<8x32xf32> to vector<8x8xf32>
    %cst_24 = arith.constant dense<0.000000e+00> : vector<8x8xf32>
    %72 = tpu.matmul %70, %71, %cst_24 {dimension_numbers = #tpu.dot_dimension_numbers<[1], [0], [0], [1], [0, 0, 1, 1], [], []>} : vector<8x8xf32>, vector<8x8xf32>, vector<8x8xf32> -> vector<8x8xf32>
    %c0_25 = arith.constant 0 : index
    %c8 = arith.constant 8 : index
    %73 = vector.load %arg7[%c0_25, %c8] : memref<8x32xf32, #tpu.memory_space<vmem>>, vector<8x8xf32>
    tpu.vector_store %arg7[%c0_25, %c8], %72 {strides = array<i32>} : memref<8x32xf32, #tpu.memory_space<vmem>>, vector<8x8xf32>,
    %74 = vector.extract_strided_slice %29 {offsets = [0, 16], sizes = [8, 8], strides = [1, 1]} : vector<8x32xf32> to vector<8x8xf32>
    %75 = vector.extract_strided_slice %30 {offsets = [0, 16], sizes = [8, 8], strides = [1, 1]} : vector<8x32xf32> to vector<8x8xf32>
    %76 = tpu.transpose %75, [1, 0] : vector<8x8xf32> -> vector<8x8xf32>
    %cst_26 = arith.constant dense<0.000000e+00> : vector<8x8xf32>
    %77 = tpu.matmul %74, %76, %cst_26 {dimension_numbers = #tpu.dot_dimension_numbers<[1], [0], [0], [1], [0, 0, 1, 1], [], []>} : vector<8x8xf32>, vector<8x8xf32>, vector<8x8xf32> -> vector<8x8xf32>
    %cst_27 = arith.constant -1.000000e+09 : f32
    %78 = vector.broadcast %cst_27 : f32 to vector<8x8xf32>
    %79 = arith.select %35, %77, %78 : vector<8x8xi1>, vector<8x8xf32>
    %cst_28 = arith.constant dense<0xFF800000> : vector<8xf32>
    %80 = vector.multi_reduction <maximumf>, %79, %cst_28 [1] : vector<8x8xf32> to vector<8xf32>
    %81 = vector.shape_cast %80 : vector<8xf32> to vector<8x1xf32>
    %82 = vector.broadcast %81 : vector<8x1xf32> to vector<8x8xf32>
    %83 = arith.subf %79, %82 : vector<8x8xf32>
    %84 = math.exp %83 : vector<8x8xf32>
    %cst_29 = arith.constant dense<0.000000e+00> : vector<8xf32>
    %85 = vector.multi_reduction <add>, %84, %cst_29 [1] : vector<8x8xf32> to vector<8xf32>
    %86 = vector.shape_cast %85 : vector<8xf32> to vector<8x1xf32>
    %87 = tpu.reciprocal %86 {approx = true} : vector<8x1xf32> -> vector<8x1xf32>
    %88 = vector.broadcast %87 : vector<8x1xf32> to vector<8x8xf32>
    %89 = arith.mulf %84, %88 : vector<8x8xf32>
    %90 = vector.extract_strided_slice %31 {offsets = [0, 16], sizes = [8, 8], strides = [1, 1]} : vector<8x32xf32> to vector<8x8xf32>
    %cst_30 = arith.constant dense<0.000000e+00> : vector<8x8xf32>
    %91 = tpu.matmul %89, %90, %cst_30 {dimension_numbers = #tpu.dot_dimension_numbers<[1], [0], [0], [1], [0, 0, 1, 1], [], []>} : vector<8x8xf32>, vector<8x8xf32>, vector<8x8xf32> -> vector<8x8xf32>
    %c0_31 = arith.constant 0 : index
    %c16 = arith.constant 16 : index
    %92 = vector.load %arg7[%c0_31, %c16] : memref<8x32xf32, #tpu.memory_space<vmem>>, vector<8x8xf32>
    tpu.vector_store %arg7[%c0_31, %c16], %91 {strides = array<i32>} : memref<8x32xf32, #tpu.memory_space<vmem>>, vector<8x8xf32>,
    %93 = vector.extract_strided_slice %29 {offsets = [0, 24], sizes = [8, 8], strides = [1, 1]} : vector<8x32xf32> to vector<8x8xf32>
    %94 = vector.extract_strided_slice %30 {offsets = [0, 24], sizes = [8, 8], strides = [1, 1]} : vector<8x32xf32> to vector<8x8xf32>
    %95 = tpu.transpose %94, [1, 0] : vector<8x8xf32> -> vector<8x8xf32>
    %cst_32 = arith.constant dense<0.000000e+00> : vector<8x8xf32>
    %96 = tpu.matmul %93, %95, %cst_32 {dimension_numbers = #tpu.dot_dimension_numbers<[1], [0], [0], [1], [0, 0, 1, 1], [], []>} : vector<8x8xf32>, vector<8x8xf32>, vector<8x8xf32> -> vector<8x8xf32>
    %cst_33 = arith.constant -1.000000e+09 : f32
    %97 = vector.broadcast %cst_33 : f32 to vector<8x8xf32>
    %98 = arith.select %35, %96, %97 : vector<8x8xi1>, vector<8x8xf32>
    %cst_34 = arith.constant dense<0xFF800000> : vector<8xf32>
    %99 = vector.multi_reduction <maximumf>, %98, %cst_34 [1] : vector<8x8xf32> to vector<8xf32>
    %100 = vector.shape_cast %99 : vector<8xf32> to vector<8x1xf32>
    %101 = vector.broadcast %100 : vector<8x1xf32> to vector<8x8xf32>
    %102 = arith.subf %98, %101 : vector<8x8xf32>
    %103 = math.exp %102 : vector<8x8xf32>
    %cst_35 = arith.constant dense<0.000000e+00> : vector<8xf32>
    %104 = vector.multi_reduction <add>, %103, %cst_35 [1] : vector<8x8xf32> to vector<8xf32>
    %105 = vector.shape_cast %104 : vector<8xf32> to vector<8x1xf32>
    %106 = tpu.reciprocal %105 {approx = true} : vector<8x1xf32> -> vector<8x1xf32>
    %107 = vector.broadcast %106 : vector<8x1xf32> to vector<8x8xf32>
    %108 = arith.mulf %103, %107 : vector<8x8xf32>
    %109 = vector.extract_strided_slice %31 {offsets = [0, 24], sizes = [8, 8], strides = [1, 1]} : vector<8x32xf32> to vector<8x8xf32>
    %cst_36 = arith.constant dense<0.000000e+00> : vector<8x8xf32>
    %110 = tpu.matmul %108, %109, %cst_36 {dimension_numbers = #tpu.dot_dimension_numbers<[1], [0], [0], [1], [0, 0, 1, 1], [], []>} : vector<8x8xf32>, vector<8x8xf32>, vector<8x8xf32> -> vector<8x8xf32>
    %c0_37 = arith.constant 0 : index
    %c24 = arith.constant 24 : index
    %111 = vector.load %arg7[%c0_37, %c24] : memref<8x32xf32, #tpu.memory_space<vmem>>, vector<8x8xf32>
    tpu.vector_store %arg7[%c0_37, %c24], %110 {strides = array<i32>} : memref<8x32xf32, #tpu.memory_space<vmem>>, vector<8x8xf32>,
    %c0_38 = arith.constant 0 : index
    %c0_39 = arith.constant 0 : index
    %112 = vector.load %arg7[%c0_38, %c0_39] : memref<8x32xf32, #tpu.memory_space<vmem>>, vector<8x32xf32>
    %cst_40 = arith.constant dense<0.000000e+00> : vector<8x32xf32>
    %113 = tpu.matmul %112, %2, %cst_40 {dimension_numbers = #tpu.dot_dimension_numbers<[1], [0], [0], [1], [0, 0, 1, 1], [], []>} : vector<8x32xf32>, vector<32x32xf32>, vector<8x32xf32> -> vector<8x32xf32>
    %114 = vector.broadcast %8 : vector<1x32xf32> to vector<8x32xf32>
    %115 = arith.addf %113, %114 : vector<8x32xf32>
    %116 = arith.addf %22, %115 : vector<8x32xf32>
    %cst_41 = arith.constant dense<0.000000e+00> : vector<8xf32>
    %117 = vector.multi_reduction <add>, %116, %cst_41 [1] : vector<8x32xf32> to vector<8xf32>
    %118 = vector.shape_cast %117 : vector<8xf32> to vector<8x1xf32>
    %cst_42 = arith.constant 3.200000e+01 : f32
    %119 = vector.broadcast %cst_42 : f32 to vector<8x1xf32>
    %120 = arith.divf %118, %119 : vector<8x1xf32>
    %121 = vector.broadcast %120 : vector<8x1xf32> to vector<8x32xf32>
    %122 = arith.subf %116, %121 : vector<8x32xf32>
    %123 = arith.mulf %122, %122 : vector<8x32xf32>
    %cst_43 = arith.constant dense<0.000000e+00> : vector<8xf32>
    %124 = vector.multi_reduction <add>, %123, %cst_43 [1] : vector<8x32xf32> to vector<8xf32>
    %125 = vector.shape_cast %124 : vector<8xf32> to vector<8x1xf32>
    %cst_44 = arith.constant 0.0322580636 : f32
    %126 = vector.broadcast %cst_44 : f32 to vector<8x1xf32>
    %127 = arith.mulf %125, %126 : vector<8x1xf32>
    %128 = math.sqrt %127 : vector<8x1xf32>
    %cst_45 = arith.constant 9.99999997E-7 : f32
    %129 = vector.broadcast %cst_45 : f32 to vector<8x1xf32>
    %130 = arith.addf %128, %129 : vector<8x1xf32>
    %131 = tpu.reciprocal %130 : vector<8x1xf32> -> vector<8x1xf32>
    %132 = vector.broadcast %120 : vector<8x1xf32> to vector<8x32xf32>
    %133 = arith.subf %116, %132 : vector<8x32xf32>
    %134 = vector.broadcast %131 : vector<8x1xf32> to vector<8x32xf32>
    %135 = arith.mulf %133, %134 : vector<8x32xf32>
    %136 = vector.broadcast %11 : vector<1x32xf32> to vector<8x32xf32>
    %137 = arith.mulf %136, %135 : vector<8x32xf32>
    %138 = vector.broadcast %12 : vector<1x32xf32> to vector<8x32xf32>
    %139 = arith.addf %137, %138 : vector<8x32xf32>
    %140 = vector.extract_strided_slice %1 {offsets = [0, 0], sizes = [32, 32], strides = [1, 1]} : vector<32x96xf32> to vector<32x32xf32>
    %cst_46 = arith.constant dense<0.000000e+00> : vector<8x32xf32>
    %141 = tpu.matmul %139, %140, %cst_46 {dimension_numbers = #tpu.dot_dimension_numbers<[1], [0], [0], [1], [0, 0, 1, 1], [], []>} : vector<8x32xf32>, vector<32x32xf32>, vector<8x32xf32> -> vector<8x32xf32>
    %142 = vector.extract_strided_slice %7 {offsets = [0, 0], sizes = [1, 32], strides = [1, 1]} : vector<1x96xf32> to vector<1x32xf32>
    %143 = vector.broadcast %142 : vector<1x32xf32> to vector<8x32xf32>
    %144 = arith.addf %141, %143 : vector<8x32xf32>
    %145 = vector.extract_strided_slice %28 {offsets = [8, 32], sizes = [10, 32], strides = [1, 1]} : vector<18x96xf32> to vector<10x32xf32>
    %146 = vector.extract_strided_slice %28 {offsets = [8, 64], sizes = [10, 32], strides = [1, 1]} : vector<18x96xf32> to vector<10x32xf32>
    %147 = vector.extract_strided_slice %20 {offsets = [0, 0, 0], sizes = [1, 1, 10], strides = [1, 1, 1]} : vector<2x1x10xi32> to vector<1x1x10xi32>
    %148 = vector.shape_cast %147 : vector<1x1x10xi32> to vector<1x10xi32>
    %149 = vector.shape_cast %148 : vector<1x10xi32> to vector<1x10xi32>
    %150 = vector.broadcast %149 : vector<1x10xi32> to vector<8x10xi32>
    %c0_i32_47 = arith.constant 0 : i32
    %151 = vector.broadcast %c0_i32_47 : i32 to vector<8x10xi32>
    %152 = arith.cmpi ne, %150, %151 : vector<8x10xi32>
    %153 = vector.extract_strided_slice %144 {offsets = [0, 0], sizes = [8, 8], strides = [1, 1]} : vector<8x32xf32> to vector<8x8xf32>
    %154 = vector.extract_strided_slice %145 {offsets = [0, 0], sizes = [10, 8], strides = [1, 1]} : vector<10x32xf32> to vector<10x8xf32>
    %155 = tpu.transpose %154, [1, 0] : vector<10x8xf32> -> vector<8x10xf32>
    %cst_48 = arith.constant dense<0.000000e+00> : vector<8x10xf32>
    %156 = tpu.matmul %153, %155, %cst_48 {dimension_numbers = #tpu.dot_dimension_numbers<[1], [0], [0], [1], [0, 0, 1, 1], [], []>} : vector<8x8xf32>, vector<8x10xf32>, vector<8x10xf32> -> vector<8x10xf32>
    %cst_49 = arith.constant -1.000000e+09 : f32
    %157 = vector.broadcast %cst_49 : f32 to vector<8x10xf32>
    %158 = arith.select %152, %156, %157 : vector<8x10xi1>, vector<8x10xf32>
    %cst_50 = arith.constant dense<0xFF800000> : vector<8xf32>
    %159 = vector.multi_reduction <maximumf>, %158, %cst_50 [1] : vector<8x10xf32> to vector<8xf32>
    %160 = vector.shape_cast %159 : vector<8xf32> to vector<8x1xf32>
    %161 = vector.broadcast %160 : vector<8x1xf32> to vector<8x10xf32>
    %162 = arith.subf %158, %161 : vector<8x10xf32>
    %163 = math.exp %162 : vector<8x10xf32>
    %cst_51 = arith.constant dense<0.000000e+00> : vector<8xf32>
    %164 = vector.multi_reduction <add>, %163, %cst_51 [1] : vector<8x10xf32> to vector<8xf32>
    %165 = vector.shape_cast %164 : vector<8xf32> to vector<8x1xf32>
    %166 = tpu.reciprocal %165 {approx = true} : vector<8x1xf32> -> vector<8x1xf32>
    %167 = vector.broadcast %166 : vector<8x1xf32> to vector<8x10xf32>
    %168 = arith.mulf %163, %167 : vector<8x10xf32>
    %169 = vector.extract_strided_slice %146 {offsets = [0, 0], sizes = [10, 8], strides = [1, 1]} : vector<10x32xf32> to vector<10x8xf32>
    %cst_52 = arith.constant dense<0.000000e+00> : vector<8x8xf32>
    %170 = tpu.matmul %168, %169, %cst_52 {dimension_numbers = #tpu.dot_dimension_numbers<[1], [0], [0], [1], [0, 0, 1, 1], [], []>} : vector<8x10xf32>, vector<10x8xf32>, vector<8x8xf32> -> vector<8x8xf32>
    %c0_53 = arith.constant 0 : index
    %c0_54 = arith.constant 0 : index
    %171 = vector.load %arg7[%c0_53, %c0_54] : memref<8x32xf32, #tpu.memory_space<vmem>>, vector<8x8xf32>
    tpu.vector_store %arg7[%c0_53, %c0_54], %170 {strides = array<i32>} : memref<8x32xf32, #tpu.memory_space<vmem>>, vector<8x8xf32>,
    %172 = vector.extract_strided_slice %144 {offsets = [0, 8], sizes = [8, 8], strides = [1, 1]} : vector<8x32xf32> to vector<8x8xf32>
    %173 = vector.extract_strided_slice %145 {offsets = [0, 8], sizes = [10, 8], strides = [1, 1]} : vector<10x32xf32> to vector<10x8xf32>
    %174 = tpu.transpose %173, [1, 0] : vector<10x8xf32> -> vector<8x10xf32>
    %cst_55 = arith.constant dense<0.000000e+00> : vector<8x10xf32>
    %175 = tpu.matmul %172, %174, %cst_55 {dimension_numbers = #tpu.dot_dimension_numbers<[1], [0], [0], [1], [0, 0, 1, 1], [], []>} : vector<8x8xf32>, vector<8x10xf32>, vector<8x10xf32> -> vector<8x10xf32>
    %cst_56 = arith.constant -1.000000e+09 : f32
    %176 = vector.broadcast %cst_56 : f32 to vector<8x10xf32>
    %177 = arith.select %152, %175, %176 : vector<8x10xi1>, vector<8x10xf32>
    %cst_57 = arith.constant dense<0xFF800000> : vector<8xf32>
    %178 = vector.multi_reduction <maximumf>, %177, %cst_57 [1] : vector<8x10xf32> to vector<8xf32>
    %179 = vector.shape_cast %178 : vector<8xf32> to vector<8x1xf32>
    %180 = vector.broadcast %179 : vector<8x1xf32> to vector<8x10xf32>
    %181 = arith.subf %177, %180 : vector<8x10xf32>
    %182 = math.exp %181 : vector<8x10xf32>
    %cst_58 = arith.constant dense<0.000000e+00> : vector<8xf32>
    %183 = vector.multi_reduction <add>, %182, %cst_58 [1] : vector<8x10xf32> to vector<8xf32>
    %184 = vector.shape_cast %183 : vector<8xf32> to vector<8x1xf32>
    %185 = tpu.reciprocal %184 {approx = true} : vector<8x1xf32> -> vector<8x1xf32>
    %186 = vector.broadcast %185 : vector<8x1xf32> to vector<8x10xf32>
    %187 = arith.mulf %182, %186 : vector<8x10xf32>
    %188 = vector.extract_strided_slice %146 {offsets = [0, 8], sizes = [10, 8], strides = [1, 1]} : vector<10x32xf32> to vector<10x8xf32>
    %cst_59 = arith.constant dense<0.000000e+00> : vector<8x8xf32>
    %189 = tpu.matmul %187, %188, %cst_59 {dimension_numbers = #tpu.dot_dimension_numbers<[1], [0], [0], [1], [0, 0, 1, 1], [], []>} : vector<8x10xf32>, vector<10x8xf32>, vector<8x8xf32> -> vector<8x8xf32>
    %c0_60 = arith.constant 0 : index
    %c8_61 = arith.constant 8 : index
    %190 = vector.load %arg7[%c0_60, %c8_61] : memref<8x32xf32, #tpu.memory_space<vmem>>, vector<8x8xf32>
    tpu.vector_store %arg7[%c0_60, %c8_61], %189 {strides = array<i32>} : memref<8x32xf32, #tpu.memory_space<vmem>>, vector<8x8xf32>,
    %191 = vector.extract_strided_slice %144 {offsets = [0, 16], sizes = [8, 8], strides = [1, 1]} : vector<8x32xf32> to vector<8x8xf32>
    %192 = vector.extract_strided_slice %145 {offsets = [0, 16], sizes = [10, 8], strides = [1, 1]} : vector<10x32xf32> to vector<10x8xf32>
    %193 = tpu.transpose %192, [1, 0] : vector<10x8xf32> -> vector<8x10xf32>
    %cst_62 = arith.constant dense<0.000000e+00> : vector<8x10xf32>
    %194 = tpu.matmul %191, %193, %cst_62 {dimension_numbers = #tpu.dot_dimension_numbers<[1], [0], [0], [1], [0, 0, 1, 1], [], []>} : vector<8x8xf32>, vector<8x10xf32>, vector<8x10xf32> -> vector<8x10xf32>
    %cst_63 = arith.constant -1.000000e+09 : f32
    %195 = vector.broadcast %cst_63 : f32 to vector<8x10xf32>
    %196 = arith.select %152, %194, %195 : vector<8x10xi1>, vector<8x10xf32>
    %cst_64 = arith.constant dense<0xFF800000> : vector<8xf32>
    %197 = vector.multi_reduction <maximumf>, %196, %cst_64 [1] : vector<8x10xf32> to vector<8xf32>
    %198 = vector.shape_cast %197 : vector<8xf32> to vector<8x1xf32>
    %199 = vector.broadcast %198 : vector<8x1xf32> to vector<8x10xf32>
    %200 = arith.subf %196, %199 : vector<8x10xf32>
    %201 = math.exp %200 : vector<8x10xf32>
    %cst_65 = arith.constant dense<0.000000e+00> : vector<8xf32>
    %202 = vector.multi_reduction <add>, %201, %cst_65 [1] : vector<8x10xf32> to vector<8xf32>
    %203 = vector.shape_cast %202 : vector<8xf32> to vector<8x1xf32>
    %204 = tpu.reciprocal %203 {approx = true} : vector<8x1xf32> -> vector<8x1xf32>
    %205 = vector.broadcast %204 : vector<8x1xf32> to vector<8x10xf32>
    %206 = arith.mulf %201, %205 : vector<8x10xf32>
    %207 = vector.extract_strided_slice %146 {offsets = [0, 16], sizes = [10, 8], strides = [1, 1]} : vector<10x32xf32> to vector<10x8xf32>
    %cst_66 = arith.constant dense<0.000000e+00> : vector<8x8xf32>
    %208 = tpu.matmul %206, %207, %cst_66 {dimension_numbers = #tpu.dot_dimension_numbers<[1], [0], [0], [1], [0, 0, 1, 1], [], []>} : vector<8x10xf32>, vector<10x8xf32>, vector<8x8xf32> -> vector<8x8xf32>
    %c0_67 = arith.constant 0 : index
    %c16_68 = arith.constant 16 : index
    %209 = vector.load %arg7[%c0_67, %c16_68] : memref<8x32xf32, #tpu.memory_space<vmem>>, vector<8x8xf32>
    tpu.vector_store %arg7[%c0_67, %c16_68], %208 {strides = array<i32>} : memref<8x32xf32, #tpu.memory_space<vmem>>, vector<8x8xf32>,
    %210 = vector.extract_strided_slice %144 {offsets = [0, 24], sizes = [8, 8], strides = [1, 1]} : vector<8x32xf32> to vector<8x8xf32>
    %211 = vector.extract_strided_slice %145 {offsets = [0, 24], sizes = [10, 8], strides = [1, 1]} : vector<10x32xf32> to vector<10x8xf32>
    %212 = tpu.transpose %211, [1, 0] : vector<10x8xf32> -> vector<8x10xf32>
    %cst_69 = arith.constant dense<0.000000e+00> : vector<8x10xf32>
    %213 = tpu.matmul %210, %212, %cst_69 {dimension_numbers = #tpu.dot_dimension_numbers<[1], [0], [0], [1], [0, 0, 1, 1], [], []>} : vector<8x8xf32>, vector<8x10xf32>, vector<8x10xf32> -> vector<8x10xf32>
    %cst_70 = arith.constant -1.000000e+09 : f32
    %214 = vector.broadcast %cst_70 : f32 to vector<8x10xf32>
    %215 = arith.select %152, %213, %214 : vector<8x10xi1>, vector<8x10xf32>
    %cst_71 = arith.constant dense<0xFF800000> : vector<8xf32>
    %216 = vector.multi_reduction <maximumf>, %215, %cst_71 [1] : vector<8x10xf32> to vector<8xf32>
    %217 = vector.shape_cast %216 : vector<8xf32> to vector<8x1xf32>
    %218 = vector.broadcast %217 : vector<8x1xf32> to vector<8x10xf32>
    %219 = arith.subf %215, %218 : vector<8x10xf32>
    %220 = math.exp %219 : vector<8x10xf32>
    %cst_72 = arith.constant dense<0.000000e+00> : vector<8xf32>
    %221 = vector.multi_reduction <add>, %220, %cst_72 [1] : vector<8x10xf32> to vector<8xf32>
    %222 = vector.shape_cast %221 : vector<8xf32> to vector<8x1xf32>
    %223 = tpu.reciprocal %222 {approx = true} : vector<8x1xf32> -> vector<8x1xf32>
    %224 = vector.broadcast %223 : vector<8x1xf32> to vector<8x10xf32>
    %225 = arith.mulf %220, %224 : vector<8x10xf32>
    %226 = vector.extract_strided_slice %146 {offsets = [0, 24], sizes = [10, 8], strides = [1, 1]} : vector<10x32xf32> to vector<10x8xf32>
    %cst_73 = arith.constant dense<0.000000e+00> : vector<8x8xf32>
    %227 = tpu.matmul %225, %226, %cst_73 {dimension_numbers = #tpu.dot_dimension_numbers<[1], [0], [0], [1], [0, 0, 1, 1], [], []>} : vector<8x10xf32>, vector<10x8xf32>, vector<8x8xf32> -> vector<8x8xf32>
    %c0_74 = arith.constant 0 : index
    %c24_75 = arith.constant 24 : index
    %228 = vector.load %arg7[%c0_74, %c24_75] : memref<8x32xf32, #tpu.memory_space<vmem>>, vector<8x8xf32>
    tpu.vector_store %arg7[%c0_74, %c24_75], %227 {strides = array<i32>} : memref<8x32xf32, #tpu.memory_space<vmem>>, vector<8x8xf32>,
    %c0_76 = arith.constant 0 : index
    %c0_77 = arith.constant 0 : index
    %229 = vector.load %arg7[%c0_76, %c0_77] : memref<8x32xf32, #tpu.memory_space<vmem>>, vector<8x32xf32>
    %cst_78 = arith.constant dense<0.000000e+00> : vector<8x32xf32>
    %230 = tpu.matmul %229, %2, %cst_78 {dimension_numbers = #tpu.dot_dimension_numbers<[1], [0], [0], [1], [0, 0, 1, 1], [], []>} : vector<8x32xf32>, vector<32x32xf32>, vector<8x32xf32> -> vector<8x32xf32>
    %231 = vector.broadcast %8 : vector<1x32xf32> to vector<8x32xf32>
    %232 = arith.addf %230, %231 : vector<8x32xf32>
    %233 = arith.addf %139, %232 : vector<8x32xf32>
    %cst_79 = arith.constant dense<0.000000e+00> : vector<8xf32>
    %234 = vector.multi_reduction <add>, %233, %cst_79 [1] : vector<8x32xf32> to vector<8xf32>
    %235 = vector.shape_cast %234 : vector<8xf32> to vector<8x1xf32>
    %cst_80 = arith.constant 3.200000e+01 : f32
    %236 = vector.broadcast %cst_80 : f32 to vector<8x1xf32>
    %237 = arith.divf %235, %236 : vector<8x1xf32>
    %238 = vector.broadcast %237 : vector<8x1xf32> to vector<8x32xf32>
    %239 = arith.subf %233, %238 : vector<8x32xf32>
    %240 = arith.mulf %239, %239 : vector<8x32xf32>
    %cst_81 = arith.constant dense<0.000000e+00> : vector<8xf32>
    %241 = vector.multi_reduction <add>, %240, %cst_81 [1] : vector<8x32xf32> to vector<8xf32>
    %242 = vector.shape_cast %241 : vector<8xf32> to vector<8x1xf32>
    %cst_82 = arith.constant 0.0322580636 : f32
    %243 = vector.broadcast %cst_82 : f32 to vector<8x1xf32>
    %244 = arith.mulf %242, %243 : vector<8x1xf32>
    %245 = math.sqrt %244 : vector<8x1xf32>
    %cst_83 = arith.constant 9.99999997E-7 : f32
    %246 = vector.broadcast %cst_83 : f32 to vector<8x1xf32>
    %247 = arith.addf %245, %246 : vector<8x1xf32>
    %248 = tpu.reciprocal %247 : vector<8x1xf32> -> vector<8x1xf32>
    %249 = vector.broadcast %237 : vector<8x1xf32> to vector<8x32xf32>
    %250 = arith.subf %233, %249 : vector<8x32xf32>
    %251 = vector.broadcast %248 : vector<8x1xf32> to vector<8x32xf32>
    %252 = arith.mulf %250, %251 : vector<8x32xf32>
    %253 = vector.broadcast %13 : vector<1x32xf32> to vector<8x32xf32>
    %254 = arith.mulf %253, %252 : vector<8x32xf32>
    %255 = vector.broadcast %14 : vector<1x32xf32> to vector<8x32xf32>
    %256 = arith.addf %254, %255 : vector<8x32xf32>
    %cst_84 = arith.constant dense<0.000000e+00> : vector<8x64xf32>
    %257 = tpu.matmul %256, %3, %cst_84 {dimension_numbers = #tpu.dot_dimension_numbers<[1], [0], [0], [1], [0, 0, 1, 1], [], []>} : vector<8x32xf32>, vector<32x64xf32>, vector<8x64xf32> -> vector<8x64xf32>
    %258 = vector.broadcast %9 : vector<1x64xf32> to vector<8x64xf32>
    %259 = arith.addf %257, %258 : vector<8x64xf32>
    %cst_85 = arith.constant 0.000000e+00 : f32
    %260 = vector.broadcast %cst_85 : f32 to vector<8x64xf32>
    %261 = arith.maximumf %259, %260 : vector<8x64xf32>
    %cst_86 = arith.constant dense<0.000000e+00> : vector<8x32xf32>
    %262 = tpu.matmul %261, %4, %cst_86 {dimension_numbers = #tpu.dot_dimension_numbers<[1], [0], [0], [1], [0, 0, 1, 1], [], []>} : vector<8x64xf32>, vector<64x32xf32>, vector<8x32xf32> -> vector<8x32xf32>
    %263 = vector.broadcast %10 : vector<1x32xf32> to vector<8x32xf32>
    %264 = arith.addf %262, %263 : vector<8x32xf32>
    %265 = arith.addf %256, %264 : vector<8x32xf32>
    %cst_87 = arith.constant dense<0.000000e+00> : vector<8xf32>
    %266 = vector.multi_reduction <add>, %265, %cst_87 [1] : vector<8x32xf32> to vector<8xf32>
    %267 = vector.shape_cast %266 : vector<8xf32> to vector<8x1xf32>
    %cst_88 = arith.constant 3.200000e+01 : f32
    %268 = vector.broadcast %cst_88 : f32 to vector<8x1xf32>
    %269 = arith.divf %267, %268 : vector<8x1xf32>
    %270 = vector.broadcast %269 : vector<8x1xf32> to vector<8x32xf32>
    %271 = arith.subf %265, %270 : vector<8x32xf32>
    %272 = arith.mulf %271, %271 : vector<8x32xf32>
    %cst_89 = arith.constant dense<0.000000e+00> : vector<8xf32>
    %273 = vector.multi_reduction <add>, %272, %cst_89 [1] : vector<8x32xf32> to vector<8xf32>
    %274 = vector.shape_cast %273 : vector<8xf32> to vector<8x1xf32>
    %cst_90 = arith.constant 0.0322580636 : f32
    %275 = vector.broadcast %cst_90 : f32 to vector<8x1xf32>
    %276 = arith.mulf %274, %275 : vector<8x1xf32>
    %277 = math.sqrt %276 : vector<8x1xf32>
    %cst_91 = arith.constant 9.99999997E-7 : f32
    %278 = vector.broadcast %cst_91 : f32 to vector<8x1xf32>
    %279 = arith.addf %277, %278 : vector<8x1xf32>
    %280 = tpu.reciprocal %279 : vector<8x1xf32> -> vector<8x1xf32>
    %281 = vector.broadcast %269 : vector<8x1xf32> to vector<8x32xf32>
    %282 = arith.subf %265, %281 : vector<8x32xf32>
    %283 = vector.broadcast %280 : vector<8x1xf32> to vector<8x32xf32>
    %284 = arith.mulf %282, %283 : vector<8x32xf32>
    %285 = vector.broadcast %15 : vector<1x32xf32> to vector<8x32xf32>
    %286 = arith.mulf %285, %284 : vector<8x32xf32>
    %287 = vector.broadcast %16 : vector<1x32xf32> to vector<8x32xf32>
    %288 = arith.addf %286, %287 : vector<8x32xf32>
    %c0_92 = arith.constant 0 : index
    %c0_93 = arith.constant 0 : index
    %c0_94 = arith.constant 0 : index
    %289 = vector.load %arg6[%c0_92, %c0_93, %c0_94] : memref<2x8x32xf32, #tpu.memory_space<vmem>>, vector<1x8x32xf32>
    %290 = vector.shape_cast %289 : vector<1x8x32xf32> to vector<8x32xf32>
    %291 = vector.shape_cast %288 : vector<8x32xf32> to vector<1x8x32xf32>
    tpu.vector_store %arg6[%c0_92, %c0_93, %c0_94], %291 {strides = array<i32>} : memref<2x8x32xf32, #tpu.memory_space<vmem>>, vector<1x8x32xf32>,
    %292 = vector.extract_strided_slice %17 {offsets = [1, 0, 0], sizes = [1, 8, 32], strides = [1, 1, 1]} : vector<2x8x32xf32> to vector<1x8x32xf32>
    %293 = vector.shape_cast %292 : vector<1x8x32xf32> to vector<8x32xf32>
    %294 = vector.extract_strided_slice %18 {offsets = [1, 0, 0], sizes = [1, 10, 32], strides = [1, 1, 1]} : vector<2x10x32xf32> to vector<1x10x32xf32>
    %295 = vector.shape_cast %294 : vector<1x10x32xf32> to vector<10x32xf32>
    %296 = tpu.concatenate %293, %295 in 0 : vector<8x32xf32>, vector<10x32xf32> -> vector<18x32xf32>
    %cst_95 = arith.constant dense<0.000000e+00> : vector<18x96xf32>
    %297 = tpu.matmul %296, %1, %cst_95 {dimension_numbers = #tpu.dot_dimension_numbers<[1], [0], [0], [1], [0, 0, 1, 1], [], []>} : vector<18x32xf32>, vector<32x96xf32>, vector<18x96xf32> -> vector<18x96xf32>
    %298 = vector.broadcast %7 : vector<1x96xf32> to vector<18x96xf32>
    %299 = arith.addf %297, %298 : vector<18x96xf32>
    %300 = vector.extract_strided_slice %299 {offsets = [0, 0], sizes = [8, 32], strides = [1, 1]} : vector<18x96xf32> to vector<8x32xf32>
    %301 = vector.extract_strided_slice %299 {offsets = [0, 32], sizes = [8, 32], strides = [1, 1]} : vector<18x96xf32> to vector<8x32xf32>
    %302 = vector.extract_strided_slice %299 {offsets = [0, 64], sizes = [8, 32], strides = [1, 1]} : vector<18x96xf32> to vector<8x32xf32>
    %303 = vector.extract_strided_slice %19 {offsets = [1, 0, 0], sizes = [1, 8, 8], strides = [1, 1, 1]} : vector<2x8x8xi32> to vector<1x8x8xi32>
    %304 = vector.shape_cast %303 : vector<1x8x8xi32> to vector<8x8xi32>
    %c0_i32_96 = arith.constant 0 : i32
    %305 = vector.broadcast %c0_i32_96 : i32 to vector<8x8xi32>
    %306 = arith.cmpi ne, %304, %305 : vector<8x8xi32>
    %307 = vector.extract_strided_slice %300 {offsets = [0, 0], sizes = [8, 8], strides = [1, 1]} : vector<8x32xf32> to vector<8x8xf32>
    %308 = vector.extract_strided_slice %301 {offsets = [0, 0], sizes = [8, 8], strides = [1, 1]} : vector<8x32xf32> to vector<8x8xf32>
    %309 = tpu.transpose %308, [1, 0] : vector<8x8xf32> -> vector<8x8xf32>
    %cst_97 = arith.constant dense<0.000000e+00> : vector<8x8xf32>
    %310 = tpu.matmul %307, %309, %cst_97 {dimension_numbers = #tpu.dot_dimension_numbers<[1], [0], [0], [1], [0, 0, 1, 1], [], []>} : vector<8x8xf32>, vector<8x8xf32>, vector<8x8xf32> -> vector<8x8xf32>
    %cst_98 = arith.constant -1.000000e+09 : f32
    %311 = vector.broadcast %cst_98 : f32 to vector<8x8xf32>
    %312 = arith.select %306, %310, %311 : vector<8x8xi1>, vector<8x8xf32>
    %cst_99 = arith.constant dense<0xFF800000> : vector<8xf32>
    %313 = vector.multi_reduction <maximumf>, %312, %cst_99 [1] : vector<8x8xf32> to vector<8xf32>
    %314 = vector.shape_cast %313 : vector<8xf32> to vector<8x1xf32>
    %315 = vector.broadcast %314 : vector<8x1xf32> to vector<8x8xf32>
    %316 = arith.subf %312, %315 : vector<8x8xf32>
    %317 = math.exp %316 : vector<8x8xf32>
    %cst_100 = arith.constant dense<0.000000e+00> : vector<8xf32>
    %318 = vector.multi_reduction <add>, %317, %cst_100 [1] : vector<8x8xf32> to vector<8xf32>
    %319 = vector.shape_cast %318 : vector<8xf32> to vector<8x1xf32>
    %320 = tpu.reciprocal %319 {approx = true} : vector<8x1xf32> -> vector<8x1xf32>
    %321 = vector.broadcast %320 : vector<8x1xf32> to vector<8x8xf32>
    %322 = arith.mulf %317, %321 : vector<8x8xf32>
    %323 = vector.extract_strided_slice %302 {offsets = [0, 0], sizes = [8, 8], strides = [1, 1]} : vector<8x32xf32> to vector<8x8xf32>
    %cst_101 = arith.constant dense<0.000000e+00> : vector<8x8xf32>
    %324 = tpu.matmul %322, %323, %cst_101 {dimension_numbers = #tpu.dot_dimension_numbers<[1], [0], [0], [1], [0, 0, 1, 1], [], []>} : vector<8x8xf32>, vector<8x8xf32>, vector<8x8xf32> -> vector<8x8xf32>
    %c0_102 = arith.constant 0 : index
    %c0_103 = arith.constant 0 : index
    %325 = vector.load %arg7[%c0_102, %c0_103] : memref<8x32xf32, #tpu.memory_space<vmem>>, vector<8x8xf32>
    tpu.vector_store %arg7[%c0_102, %c0_103], %324 {strides = array<i32>} : memref<8x32xf32, #tpu.memory_space<vmem>>, vector<8x8xf32>,
    %326 = vector.extract_strided_slice %300 {offsets = [0, 8], sizes = [8, 8], strides = [1, 1]} : vector<8x32xf32> to vector<8x8xf32>
    %327 = vector.extract_strided_slice %301 {offsets = [0, 8], sizes = [8, 8], strides = [1, 1]} : vector<8x32xf32> to vector<8x8xf32>
    %328 = tpu.transpose %327, [1, 0] : vector<8x8xf32> -> vector<8x8xf32>
    %cst_104 = arith.constant dense<0.000000e+00> : vector<8x8xf32>
    %329 = tpu.matmul %326, %328, %cst_104 {dimension_numbers = #tpu.dot_dimension_numbers<[1], [0], [0], [1], [0, 0, 1, 1], [], []>} : vector<8x8xf32>, vector<8x8xf32>, vector<8x8xf32> -> vector<8x8xf32>
    %cst_105 = arith.constant -1.000000e+09 : f32
    %330 = vector.broadcast %cst_105 : f32 to vector<8x8xf32>
    %331 = arith.select %306, %329, %330 : vector<8x8xi1>, vector<8x8xf32>
    %cst_106 = arith.constant dense<0xFF800000> : vector<8xf32>
    %332 = vector.multi_reduction <maximumf>, %331, %cst_106 [1] : vector<8x8xf32> to vector<8xf32>
    %333 = vector.shape_cast %332 : vector<8xf32> to vector<8x1xf32>
    %334 = vector.broadcast %333 : vector<8x1xf32> to vector<8x8xf32>
    %335 = arith.subf %331, %334 : vector<8x8xf32>
    %336 = math.exp %335 : vector<8x8xf32>
    %cst_107 = arith.constant dense<0.000000e+00> : vector<8xf32>
    %337 = vector.multi_reduction <add>, %336, %cst_107 [1] : vector<8x8xf32> to vector<8xf32>
    %338 = vector.shape_cast %337 : vector<8xf32> to vector<8x1xf32>
    %339 = tpu.reciprocal %338 {approx = true} : vector<8x1xf32> -> vector<8x1xf32>
    %340 = vector.broadcast %339 : vector<8x1xf32> to vector<8x8xf32>
    %341 = arith.mulf %336, %340 : vector<8x8xf32>
    %342 = vector.extract_strided_slice %302 {offsets = [0, 8], sizes = [8, 8], strides = [1, 1]} : vector<8x32xf32> to vector<8x8xf32>
    %cst_108 = arith.constant dense<0.000000e+00> : vector<8x8xf32>
    %343 = tpu.matmul %341, %342, %cst_108 {dimension_numbers = #tpu.dot_dimension_numbers<[1], [0], [0], [1], [0, 0, 1, 1], [], []>} : vector<8x8xf32>, vector<8x8xf32>, vector<8x8xf32> -> vector<8x8xf32>
    %c0_109 = arith.constant 0 : index
    %c8_110 = arith.constant 8 : index
    %344 = vector.load %arg7[%c0_109, %c8_110] : memref<8x32xf32, #tpu.memory_space<vmem>>, vector<8x8xf32>
    tpu.vector_store %arg7[%c0_109, %c8_110], %343 {strides = array<i32>} : memref<8x32xf32, #tpu.memory_space<vmem>>, vector<8x8xf32>,
    %345 = vector.extract_strided_slice %300 {offsets = [0, 16], sizes = [8, 8], strides = [1, 1]} : vector<8x32xf32> to vector<8x8xf32>
    %346 = vector.extract_strided_slice %301 {offsets = [0, 16], sizes = [8, 8], strides = [1, 1]} : vector<8x32xf32> to vector<8x8xf32>
    %347 = tpu.transpose %346, [1, 0] : vector<8x8xf32> -> vector<8x8xf32>
    %cst_111 = arith.constant dense<0.000000e+00> : vector<8x8xf32>
    %348 = tpu.matmul %345, %347, %cst_111 {dimension_numbers = #tpu.dot_dimension_numbers<[1], [0], [0], [1], [0, 0, 1, 1], [], []>} : vector<8x8xf32>, vector<8x8xf32>, vector<8x8xf32> -> vector<8x8xf32>
    %cst_112 = arith.constant -1.000000e+09 : f32
    %349 = vector.broadcast %cst_112 : f32 to vector<8x8xf32>
    %350 = arith.select %306, %348, %349 : vector<8x8xi1>, vector<8x8xf32>
    %cst_113 = arith.constant dense<0xFF800000> : vector<8xf32>
    %351 = vector.multi_reduction <maximumf>, %350, %cst_113 [1] : vector<8x8xf32> to vector<8xf32>
    %352 = vector.shape_cast %351 : vector<8xf32> to vector<8x1xf32>
    %353 = vector.broadcast %352 : vector<8x1xf32> to vector<8x8xf32>
    %354 = arith.subf %350, %353 : vector<8x8xf32>
    %355 = math.exp %354 : vector<8x8xf32>
    %cst_114 = arith.constant dense<0.000000e+00> : vector<8xf32>
    %356 = vector.multi_reduction <add>, %355, %cst_114 [1] : vector<8x8xf32> to vector<8xf32>
    %357 = vector.shape_cast %356 : vector<8xf32> to vector<8x1xf32>
    %358 = tpu.reciprocal %357 {approx = true} : vector<8x1xf32> -> vector<8x1xf32>
    %359 = vector.broadcast %358 : vector<8x1xf32> to vector<8x8xf32>
    %360 = arith.mulf %355, %359 : vector<8x8xf32>
    %361 = vector.extract_strided_slice %302 {offsets = [0, 16], sizes = [8, 8], strides = [1, 1]} : vector<8x32xf32> to vector<8x8xf32>
    %cst_115 = arith.constant dense<0.000000e+00> : vector<8x8xf32>
    %362 = tpu.matmul %360, %361, %cst_115 {dimension_numbers = #tpu.dot_dimension_numbers<[1], [0], [0], [1], [0, 0, 1, 1], [], []>} : vector<8x8xf32>, vector<8x8xf32>, vector<8x8xf32> -> vector<8x8xf32>
    %c0_116 = arith.constant 0 : index
    %c16_117 = arith.constant 16 : index
    %363 = vector.load %arg7[%c0_116, %c16_117] : memref<8x32xf32, #tpu.memory_space<vmem>>, vector<8x8xf32>
    tpu.vector_store %arg7[%c0_116, %c16_117], %362 {strides = array<i32>} : memref<8x32xf32, #tpu.memory_space<vmem>>, vector<8x8xf32>,
    %364 = vector.extract_strided_slice %300 {offsets = [0, 24], sizes = [8, 8], strides = [1, 1]} : vector<8x32xf32> to vector<8x8xf32>
    %365 = vector.extract_strided_slice %301 {offsets = [0, 24], sizes = [8, 8], strides = [1, 1]} : vector<8x32xf32> to vector<8x8xf32>
    %366 = tpu.transpose %365, [1, 0] : vector<8x8xf32> -> vector<8x8xf32>
    %cst_118 = arith.constant dense<0.000000e+00> : vector<8x8xf32>
    %367 = tpu.matmul %364, %366, %cst_118 {dimension_numbers = #tpu.dot_dimension_numbers<[1], [0], [0], [1], [0, 0, 1, 1], [], []>} : vector<8x8xf32>, vector<8x8xf32>, vector<8x8xf32> -> vector<8x8xf32>
    %cst_119 = arith.constant -1.000000e+09 : f32
    %368 = vector.broadcast %cst_119 : f32 to vector<8x8xf32>
    %369 = arith.select %306, %367, %368 : vector<8x8xi1>, vector<8x8xf32>
    %cst_120 = arith.constant dense<0xFF800000> : vector<8xf32>
    %370 = vector.multi_reduction <maximumf>, %369, %cst_120 [1] : vector<8x8xf32> to vector<8xf32>
    %371 = vector.shape_cast %370 : vector<8xf32> to vector<8x1xf32>
    %372 = vector.broadcast %371 : vector<8x1xf32> to vector<8x8xf32>
    %373 = arith.subf %369, %372 : vector<8x8xf32>
    %374 = math.exp %373 : vector<8x8xf32>
    %cst_121 = arith.constant dense<0.000000e+00> : vector<8xf32>
    %375 = vector.multi_reduction <add>, %374, %cst_121 [1] : vector<8x8xf32> to vector<8xf32>
    %376 = vector.shape_cast %375 : vector<8xf32> to vector<8x1xf32>
    %377 = tpu.reciprocal %376 {approx = true} : vector<8x1xf32> -> vector<8x1xf32>
    %378 = vector.broadcast %377 : vector<8x1xf32> to vector<8x8xf32>
    %379 = arith.mulf %374, %378 : vector<8x8xf32>
    %380 = vector.extract_strided_slice %302 {offsets = [0, 24], sizes = [8, 8], strides = [1, 1]} : vector<8x32xf32> to vector<8x8xf32>
    %cst_122 = arith.constant dense<0.000000e+00> : vector<8x8xf32>
    %381 = tpu.matmul %379, %380, %cst_122 {dimension_numbers = #tpu.dot_dimension_numbers<[1], [0], [0], [1], [0, 0, 1, 1], [], []>} : vector<8x8xf32>, vector<8x8xf32>, vector<8x8xf32> -> vector<8x8xf32>
    %c0_123 = arith.constant 0 : index
    %c24_124 = arith.constant 24 : index
    %382 = vector.load %arg7[%c0_123, %c24_124] : memref<8x32xf32, #tpu.memory_space<vmem>>, vector<8x8xf32>
    tpu.vector_store %arg7[%c0_123, %c24_124], %381 {strides = array<i32>} : memref<8x32xf32, #tpu.memory_space<vmem>>, vector<8x8xf32>,
    %c0_125 = arith.constant 0 : index
    %c0_126 = arith.constant 0 : index
    %383 = vector.load %arg7[%c0_125, %c0_126] : memref<8x32xf32, #tpu.memory_space<vmem>>, vector<8x32xf32>
    %cst_127 = arith.constant dense<0.000000e+00> : vector<8x32xf32>
    %384 = tpu.matmul %383, %2, %cst_127 {dimension_numbers = #tpu.dot_dimension_numbers<[1], [0], [0], [1], [0, 0, 1, 1], [], []>} : vector<8x32xf32>, vector<32x32xf32>, vector<8x32xf32> -> vector<8x32xf32>
    %385 = vector.broadcast %8 : vector<1x32xf32> to vector<8x32xf32>
    %386 = arith.addf %384, %385 : vector<8x32xf32>
    %387 = arith.addf %293, %386 : vector<8x32xf32>
    %cst_128 = arith.constant dense<0.000000e+00> : vector<8xf32>
    %388 = vector.multi_reduction <add>, %387, %cst_128 [1] : vector<8x32xf32> to vector<8xf32>
    %389 = vector.shape_cast %388 : vector<8xf32> to vector<8x1xf32>
    %cst_129 = arith.constant 3.200000e+01 : f32
    %390 = vector.broadcast %cst_129 : f32 to vector<8x1xf32>
    %391 = arith.divf %389, %390 : vector<8x1xf32>
    %392 = vector.broadcast %391 : vector<8x1xf32> to vector<8x32xf32>
    %393 = arith.subf %387, %392 : vector<8x32xf32>
    %394 = arith.mulf %393, %393 : vector<8x32xf32>
    %cst_130 = arith.constant dense<0.000000e+00> : vector<8xf32>
    %395 = vector.multi_reduction <add>, %394, %cst_130 [1] : vector<8x32xf32> to vector<8xf32>
    %396 = vector.shape_cast %395 : vector<8xf32> to vector<8x1xf32>
    %cst_131 = arith.constant 0.0322580636 : f32
    %397 = vector.broadcast %cst_131 : f32 to vector<8x1xf32>
    %398 = arith.mulf %396, %397 : vector<8x1xf32>
    %399 = math.sqrt %398 : vector<8x1xf32>
    %cst_132 = arith.constant 9.99999997E-7 : f32
    %400 = vector.broadcast %cst_132 : f32 to vector<8x1xf32>
    %401 = arith.addf %399, %400 : vector<8x1xf32>
    %402 = tpu.reciprocal %401 : vector<8x1xf32> -> vector<8x1xf32>
    %403 = vector.broadcast %391 : vector<8x1xf32> to vector<8x32xf32>
    %404 = arith.subf %387, %403 : vector<8x32xf32>
    %405 = vector.broadcast %402 : vector<8x1xf32> to vector<8x32xf32>
    %406 = arith.mulf %404, %405 : vector<8x32xf32>
    %407 = vector.broadcast %11 : vector<1x32xf32> to vector<8x32xf32>
    %408 = arith.mulf %407, %406 : vector<8x32xf32>
    %409 = vector.broadcast %12 : vector<1x32xf32> to vector<8x32xf32>
    %410 = arith.addf %408, %409 : vector<8x32xf32>
    %411 = vector.extract_strided_slice %1 {offsets = [0, 0], sizes = [32, 32], strides = [1, 1]} : vector<32x96xf32> to vector<32x32xf32>
    %cst_133 = arith.constant dense<0.000000e+00> : vector<8x32xf32>
    %412 = tpu.matmul %410, %411, %cst_133 {dimension_numbers = #tpu.dot_dimension_numbers<[1], [0], [0], [1], [0, 0, 1, 1], [], []>} : vector<8x32xf32>, vector<32x32xf32>, vector<8x32xf32> -> vector<8x32xf32>
    %413 = vector.extract_strided_slice %7 {offsets = [0, 0], sizes = [1, 32], strides = [1, 1]} : vector<1x96xf32> to vector<1x32xf32>
    %414 = vector.broadcast %413 : vector<1x32xf32> to vector<8x32xf32>
    %415 = arith.addf %412, %414 : vector<8x32xf32>
    %416 = vector.extract_strided_slice %299 {offsets = [8, 32], sizes = [10, 32], strides = [1, 1]} : vector<18x96xf32> to vector<10x32xf32>
    %417 = vector.extract_strided_slice %299 {offsets = [8, 64], sizes = [10, 32], strides = [1, 1]} : vector<18x96xf32> to vector<10x32xf32>
    %418 = vector.extract_strided_slice %20 {offsets = [1, 0, 0], sizes = [1, 1, 10], strides = [1, 1, 1]} : vector<2x1x10xi32> to vector<1x1x10xi32>
    %419 = vector.shape_cast %418 : vector<1x1x10xi32> to vector<1x10xi32>
    %420 = vector.shape_cast %419 : vector<1x10xi32> to vector<1x10xi32>
    %421 = vector.broadcast %420 : vector<1x10xi32> to vector<8x10xi32>
    %c0_i32_134 = arith.constant 0 : i32
    %422 = vector.broadcast %c0_i32_134 : i32 to vector<8x10xi32>
    %423 = arith.cmpi ne, %421, %422 : vector<8x10xi32>
    %424 = vector.extract_strided_slice %415 {offsets = [0, 0], sizes = [8, 8], strides = [1, 1]} : vector<8x32xf32> to vector<8x8xf32>
    %425 = vector.extract_strided_slice %416 {offsets = [0, 0], sizes = [10, 8], strides = [1, 1]} : vector<10x32xf32> to vector<10x8xf32>
    %426 = tpu.transpose %425, [1, 0] : vector<10x8xf32> -> vector<8x10xf32>
    %cst_135 = arith.constant dense<0.000000e+00> : vector<8x10xf32>
    %427 = tpu.matmul %424, %426, %cst_135 {dimension_numbers = #tpu.dot_dimension_numbers<[1], [0], [0], [1], [0, 0, 1, 1], [], []>} : vector<8x8xf32>, vector<8x10xf32>, vector<8x10xf32> -> vector<8x10xf32>
    %cst_136 = arith.constant -1.000000e+09 : f32
    %428 = vector.broadcast %cst_136 : f32 to vector<8x10xf32>
    %429 = arith.select %423, %427, %428 : vector<8x10xi1>, vector<8x10xf32>
    %cst_137 = arith.constant dense<0xFF800000> : vector<8xf32>
    %430 = vector.multi_reduction <maximumf>, %429, %cst_137 [1] : vector<8x10xf32> to vector<8xf32>
    %431 = vector.shape_cast %430 : vector<8xf32> to vector<8x1xf32>
    %432 = vector.broadcast %431 : vector<8x1xf32> to vector<8x10xf32>
    %433 = arith.subf %429, %432 : vector<8x10xf32>
    %434 = math.exp %433 : vector<8x10xf32>
    %cst_138 = arith.constant dense<0.000000e+00> : vector<8xf32>
    %435 = vector.multi_reduction <add>, %434, %cst_138 [1] : vector<8x10xf32> to vector<8xf32>
    %436 = vector.shape_cast %435 : vector<8xf32> to vector<8x1xf32>
    %437 = tpu.reciprocal %436 {approx = true} : vector<8x1xf32> -> vector<8x1xf32>
    %438 = vector.broadcast %437 : vector<8x1xf32> to vector<8x10xf32>
    %439 = arith.mulf %434, %438 : vector<8x10xf32>
    %440 = vector.extract_strided_slice %417 {offsets = [0, 0], sizes = [10, 8], strides = [1, 1]} : vector<10x32xf32> to vector<10x8xf32>
    %cst_139 = arith.constant dense<0.000000e+00> : vector<8x8xf32>
    %441 = tpu.matmul %439, %440, %cst_139 {dimension_numbers = #tpu.dot_dimension_numbers<[1], [0], [0], [1], [0, 0, 1, 1], [], []>} : vector<8x10xf32>, vector<10x8xf32>, vector<8x8xf32> -> vector<8x8xf32>
    %c0_140 = arith.constant 0 : index
    %c0_141 = arith.constant 0 : index
    %442 = vector.load %arg7[%c0_140, %c0_141] : memref<8x32xf32, #tpu.memory_space<vmem>>, vector<8x8xf32>
    tpu.vector_store %arg7[%c0_140, %c0_141], %441 {strides = array<i32>} : memref<8x32xf32, #tpu.memory_space<vmem>>, vector<8x8xf32>,
    %443 = vector.extract_strided_slice %415 {offsets = [0, 8], sizes = [8, 8], strides = [1, 1]} : vector<8x32xf32> to vector<8x8xf32>
    %444 = vector.extract_strided_slice %416 {offsets = [0, 8], sizes = [10, 8], strides = [1, 1]} : vector<10x32xf32> to vector<10x8xf32>
    %445 = tpu.transpose %444, [1, 0] : vector<10x8xf32> -> vector<8x10xf32>
    %cst_142 = arith.constant dense<0.000000e+00> : vector<8x10xf32>
    %446 = tpu.matmul %443, %445, %cst_142 {dimension_numbers = #tpu.dot_dimension_numbers<[1], [0], [0], [1], [0, 0, 1, 1], [], []>} : vector<8x8xf32>, vector<8x10xf32>, vector<8x10xf32> -> vector<8x10xf32>
    %cst_143 = arith.constant -1.000000e+09 : f32
    %447 = vector.broadcast %cst_143 : f32 to vector<8x10xf32>
    %448 = arith.select %423, %446, %447 : vector<8x10xi1>, vector<8x10xf32>
    %cst_144 = arith.constant dense<0xFF800000> : vector<8xf32>
    %449 = vector.multi_reduction <maximumf>, %448, %cst_144 [1] : vector<8x10xf32> to vector<8xf32>
    %450 = vector.shape_cast %449 : vector<8xf32> to vector<8x1xf32>
    %451 = vector.broadcast %450 : vector<8x1xf32> to vector<8x10xf32>
    %452 = arith.subf %448, %451 : vector<8x10xf32>
    %453 = math.exp %452 : vector<8x10xf32>
    %cst_145 = arith.constant dense<0.000000e+00> : vector<8xf32>
    %454 = vector.multi_reduction <add>, %453, %cst_145 [1] : vector<8x10xf32> to vector<8xf32>
    %455 = vector.shape_cast %454 : vector<8xf32> to vector<8x1xf32>
    %456 = tpu.reciprocal %455 {approx = true} : vector<8x1xf32> -> vector<8x1xf32>
    %457 = vector.broadcast %456 : vector<8x1xf32> to vector<8x10xf32>
    %458 = arith.mulf %453, %457 : vector<8x10xf32>
    %459 = vector.extract_strided_slice %417 {offsets = [0, 8], sizes = [10, 8], strides = [1, 1]} : vector<10x32xf32> to vector<10x8xf32>
    %cst_146 = arith.constant dense<0.000000e+00> : vector<8x8xf32>
    %460 = tpu.matmul %458, %459, %cst_146 {dimension_numbers = #tpu.dot_dimension_numbers<[1], [0], [0], [1], [0, 0, 1, 1], [], []>} : vector<8x10xf32>, vector<10x8xf32>, vector<8x8xf32> -> vector<8x8xf32>
    %c0_147 = arith.constant 0 : index
    %c8_148 = arith.constant 8 : index
    %461 = vector.load %arg7[%c0_147, %c8_148] : memref<8x32xf32, #tpu.memory_space<vmem>>, vector<8x8xf32>
    tpu.vector_store %arg7[%c0_147, %c8_148], %460 {strides = array<i32>} : memref<8x32xf32, #tpu.memory_space<vmem>>, vector<8x8xf32>,
    %462 = vector.extract_strided_slice %415 {offsets = [0, 16], sizes = [8, 8], strides = [1, 1]} : vector<8x32xf32> to vector<8x8xf32>
    %463 = vector.extract_strided_slice %416 {offsets = [0, 16], sizes = [10, 8], strides = [1, 1]} : vector<10x32xf32> to vector<10x8xf32>
    %464 = tpu.transpose %463, [1, 0] : vector<10x8xf32> -> vector<8x10xf32>
    %cst_149 = arith.constant dense<0.000000e+00> : vector<8x10xf32>
    %465 = tpu.matmul %462, %464, %cst_149 {dimension_numbers = #tpu.dot_dimension_numbers<[1], [0], [0], [1], [0, 0, 1, 1], [], []>} : vector<8x8xf32>, vector<8x10xf32>, vector<8x10xf32> -> vector<8x10xf32>
    %cst_150 = arith.constant -1.000000e+09 : f32
    %466 = vector.broadcast %cst_150 : f32 to vector<8x10xf32>
    %467 = arith.select %423, %465, %466 : vector<8x10xi1>, vector<8x10xf32>
    %cst_151 = arith.constant dense<0xFF800000> : vector<8xf32>
    %468 = vector.multi_reduction <maximumf>, %467, %cst_151 [1] : vector<8x10xf32> to vector<8xf32>
    %469 = vector.shape_cast %468 : vector<8xf32> to vector<8x1xf32>
    %470 = vector.broadcast %469 : vector<8x1xf32> to vector<8x10xf32>
    %471 = arith.subf %467, %470 : vector<8x10xf32>
    %472 = math.exp %471 : vector<8x10xf32>
    %cst_152 = arith.constant dense<0.000000e+00> : vector<8xf32>
    %473 = vector.multi_reduction <add>, %472, %cst_152 [1] : vector<8x10xf32> to vector<8xf32>
    %474 = vector.shape_cast %473 : vector<8xf32> to vector<8x1xf32>
    %475 = tpu.reciprocal %474 {approx = true} : vector<8x1xf32> -> vector<8x1xf32>
    %476 = vector.broadcast %475 : vector<8x1xf32> to vector<8x10xf32>
    %477 = arith.mulf %472, %476 : vector<8x10xf32>
    %478 = vector.extract_strided_slice %417 {offsets = [0, 16], sizes = [10, 8], strides = [1, 1]} : vector<10x32xf32> to vector<10x8xf32>
    %cst_153 = arith.constant dense<0.000000e+00> : vector<8x8xf32>
    %479 = tpu.matmul %477, %478, %cst_153 {dimension_numbers = #tpu.dot_dimension_numbers<[1], [0], [0], [1], [0, 0, 1, 1], [], []>} : vector<8x10xf32>, vector<10x8xf32>, vector<8x8xf32> -> vector<8x8xf32>
    %c0_154 = arith.constant 0 : index
    %c16_155 = arith.constant 16 : index
    %480 = vector.load %arg7[%c0_154, %c16_155] : memref<8x32xf32, #tpu.memory_space<vmem>>, vector<8x8xf32>
    tpu.vector_store %arg7[%c0_154, %c16_155], %479 {strides = array<i32>} : memref<8x32xf32, #tpu.memory_space<vmem>>, vector<8x8xf32>,
    %481 = vector.extract_strided_slice %415 {offsets = [0, 24], sizes = [8, 8], strides = [1, 1]} : vector<8x32xf32> to vector<8x8xf32>
    %482 = vector.extract_strided_slice %416 {offsets = [0, 24], sizes = [10, 8], strides = [1, 1]} : vector<10x32xf32> to vector<10x8xf32>
    %483 = tpu.transpose %482, [1, 0] : vector<10x8xf32> -> vector<8x10xf32>
    %cst_156 = arith.constant dense<0.000000e+00> : vector<8x10xf32>
    %484 = tpu.matmul %481, %483, %cst_156 {dimension_numbers = #tpu.dot_dimension_numbers<[1], [0], [0], [1], [0, 0, 1, 1], [], []>} : vector<8x8xf32>, vector<8x10xf32>, vector<8x10xf32> -> vector<8x10xf32>
    %cst_157 = arith.constant -1.000000e+09 : f32
    %485 = vector.broadcast %cst_157 : f32 to vector<8x10xf32>
    %486 = arith.select %423, %484, %485 : vector<8x10xi1>, vector<8x10xf32>
    %cst_158 = arith.constant dense<0xFF800000> : vector<8xf32>
    %487 = vector.multi_reduction <maximumf>, %486, %cst_158 [1] : vector<8x10xf32> to vector<8xf32>
    %488 = vector.shape_cast %487 : vector<8xf32> to vector<8x1xf32>
    %489 = vector.broadcast %488 : vector<8x1xf32> to vector<8x10xf32>
    %490 = arith.subf %486, %489 : vector<8x10xf32>
    %491 = math.exp %490 : vector<8x10xf32>
    %cst_159 = arith.constant dense<0.000000e+00> : vector<8xf32>
    %492 = vector.multi_reduction <add>, %491, %cst_159 [1] : vector<8x10xf32> to vector<8xf32>
    %493 = vector.shape_cast %492 : vector<8xf32> to vector<8x1xf32>
    %494 = tpu.reciprocal %493 {approx = true} : vector<8x1xf32> -> vector<8x1xf32>
    %495 = vector.broadcast %494 : vector<8x1xf32> to vector<8x10xf32>
    %496 = arith.mulf %491, %495 : vector<8x10xf32>
    %497 = vector.extract_strided_slice %417 {offsets = [0, 24], sizes = [10, 8], strides = [1, 1]} : vector<10x32xf32> to vector<10x8xf32>
    %cst_160 = arith.constant dense<0.000000e+00> : vector<8x8xf32>
    %498 = tpu.matmul %496, %497, %cst_160 {dimension_numbers = #tpu.dot_dimension_numbers<[1], [0], [0], [1], [0, 0, 1, 1], [], []>} : vector<8x10xf32>, vector<10x8xf32>, vector<8x8xf32> -> vector<8x8xf32>
    %c0_161 = arith.constant 0 : index
    %c24_162 = arith.constant 24 : index
    %499 = vector.load %arg7[%c0_161, %c24_162] : memref<8x32xf32, #tpu.memory_space<vmem>>, vector<8x8xf32>
    tpu.vector_store %arg7[%c0_161, %c24_162], %498 {strides = array<i32>} : memref<8x32xf32, #tpu.memory_space<vmem>>, vector<8x8xf32>,
    %c0_163 = arith.constant 0 : index
    %c0_164 = arith.constant 0 : index
    %500 = vector.load %arg7[%c0_163, %c0_164] : memref<8x32xf32, #tpu.memory_space<vmem>>, vector<8x32xf32>
    %cst_165 = arith.constant dense<0.000000e+00> : vector<8x32xf32>
    %501 = tpu.matmul %500, %2, %cst_165 {dimension_numbers = #tpu.dot_dimension_numbers<[1], [0], [0], [1], [0, 0, 1, 1], [], []>} : vector<8x32xf32>, vector<32x32xf32>, vector<8x32xf32> -> vector<8x32xf32>
    %502 = vector.broadcast %8 : vector<1x32xf32> to vector<8x32xf32>
    %503 = arith.addf %501, %502 : vector<8x32xf32>
    %504 = arith.addf %410, %503 : vector<8x32xf32>
    %cst_166 = arith.constant dense<0.000000e+00> : vector<8xf32>
    %505 = vector.multi_reduction <add>, %504, %cst_166 [1] : vector<8x32xf32> to vector<8xf32>
    %506 = vector.shape_cast %505 : vector<8xf32> to vector<8x1xf32>
    %cst_167 = arith.constant 3.200000e+01 : f32
    %507 = vector.broadcast %cst_167 : f32 to vector<8x1xf32>
    %508 = arith.divf %506, %507 : vector<8x1xf32>
    %509 = vector.broadcast %508 : vector<8x1xf32> to vector<8x32xf32>
    %510 = arith.subf %504, %509 : vector<8x32xf32>
    %511 = arith.mulf %510, %510 : vector<8x32xf32>
    %cst_168 = arith.constant dense<0.000000e+00> : vector<8xf32>
    %512 = vector.multi_reduction <add>, %511, %cst_168 [1] : vector<8x32xf32> to vector<8xf32>
    %513 = vector.shape_cast %512 : vector<8xf32> to vector<8x1xf32>
    %cst_169 = arith.constant 0.0322580636 : f32
    %514 = vector.broadcast %cst_169 : f32 to vector<8x1xf32>
    %515 = arith.mulf %513, %514 : vector<8x1xf32>
    %516 = math.sqrt %515 : vector<8x1xf32>
    %cst_170 = arith.constant 9.99999997E-7 : f32
    %517 = vector.broadcast %cst_170 : f32 to vector<8x1xf32>
    %518 = arith.addf %516, %517 : vector<8x1xf32>
    %519 = tpu.reciprocal %518 : vector<8x1xf32> -> vector<8x1xf32>
    %520 = vector.broadcast %508 : vector<8x1xf32> to vector<8x32xf32>
    %521 = arith.subf %504, %520 : vector<8x32xf32>
    %522 = vector.broadcast %519 : vector<8x1xf32> to vector<8x32xf32>
    %523 = arith.mulf %521, %522 : vector<8x32xf32>
    %524 = vector.broadcast %13 : vector<1x32xf32> to vector<8x32xf32>
    %525 = arith.mulf %524, %523 : vector<8x32xf32>
    %526 = vector.broadcast %14 : vector<1x32xf32> to vector<8x32xf32>
    %527 = arith.addf %525, %526 : vector<8x32xf32>
    %cst_171 = arith.constant dense<0.000000e+00> : vector<8x64xf32>
    %528 = tpu.matmul %527, %3, %cst_171 {dimension_numbers = #tpu.dot_dimension_numbers<[1], [0], [0], [1], [0, 0, 1, 1], [], []>} : vector<8x32xf32>, vector<32x64xf32>, vector<8x64xf32> -> vector<8x64xf32>
    %529 = vector.broadcast %9 : vector<1x64xf32> to vector<8x64xf32>
    %530 = arith.addf %528, %529 : vector<8x64xf32>
    %cst_172 = arith.constant 0.000000e+00 : f32
    %531 = vector.broadcast %cst_172 : f32 to vector<8x64xf32>
    %532 = arith.maximumf %530, %531 : vector<8x64xf32>
    %cst_173 = arith.constant dense<0.000000e+00> : vector<8x32xf32>
    %533 = tpu.matmul %532, %4, %cst_173 {dimension_numbers = #tpu.dot_dimension_numbers<[1], [0], [0], [1], [0, 0, 1, 1], [], []>} : vector<8x64xf32>, vector<64x32xf32>, vector<8x32xf32> -> vector<8x32xf32>
    %534 = vector.broadcast %10 : vector<1x32xf32> to vector<8x32xf32>
    %535 = arith.addf %533, %534 : vector<8x32xf32>
    %536 = arith.addf %527, %535 : vector<8x32xf32>
    %cst_174 = arith.constant dense<0.000000e+00> : vector<8xf32>
    %537 = vector.multi_reduction <add>, %536, %cst_174 [1] : vector<8x32xf32> to vector<8xf32>
    %538 = vector.shape_cast %537 : vector<8xf32> to vector<8x1xf32>
    %cst_175 = arith.constant 3.200000e+01 : f32
    %539 = vector.broadcast %cst_175 : f32 to vector<8x1xf32>
    %540 = arith.divf %538, %539 : vector<8x1xf32>
    %541 = vector.broadcast %540 : vector<8x1xf32> to vector<8x32xf32>
    %542 = arith.subf %536, %541 : vector<8x32xf32>
    %543 = arith.mulf %542, %542 : vector<8x32xf32>
    %cst_176 = arith.constant dense<0.000000e+00> : vector<8xf32>
    %544 = vector.multi_reduction <add>, %543, %cst_176 [1] : vector<8x32xf32> to vector<8xf32>
    %545 = vector.shape_cast %544 : vector<8xf32> to vector<8x1xf32>
    %cst_177 = arith.constant 0.0322580636 : f32
    %546 = vector.broadcast %cst_177 : f32 to vector<8x1xf32>
    %547 = arith.mulf %545, %546 : vector<8x1xf32>
    %548 = math.sqrt %547 : vector<8x1xf32>
    %cst_178 = arith.constant 9.99999997E-7 : f32
    %549 = vector.broadcast %cst_178 : f32 to vector<8x1xf32>
    %550 = arith.addf %548, %549 : vector<8x1xf32>
    %551 = tpu.reciprocal %550 : vector<8x1xf32> -> vector<8x1xf32>
    %552 = vector.broadcast %540 : vector<8x1xf32> to vector<8x32xf32>
    %553 = arith.subf %536, %552 : vector<8x32xf32>
    %554 = vector.broadcast %551 : vector<8x1xf32> to vector<8x32xf32>
    %555 = arith.mulf %553, %554 : vector<8x32xf32>
    %556 = vector.broadcast %15 : vector<1x32xf32> to vector<8x32xf32>
    %557 = arith.mulf %556, %555 : vector<8x32xf32>
    %558 = vector.broadcast %16 : vector<1x32xf32> to vector<8x32xf32>
    %559 = arith.addf %557, %558 : vector<8x32xf32>
    %c1 = arith.constant 1 : index
    %c0_179 = arith.constant 0 : index
    %c0_180 = arith.constant 0 : index
    %560 = vector.load %arg6[%c1, %c0_179, %c0_180] : memref<2x8x32xf32, #tpu.memory_space<vmem>>, vector<1x8x32xf32>
    %561 = vector.shape_cast %560 : vector<1x8x32xf32> to vector<8x32xf32>
    %562 = vector.shape_cast %559 : vector<8x32xf32> to vector<1x8x32xf32>
    tpu.vector_store %arg6[%c1, %c0_179, %c0_180], %562 {strides = array<i32>} : memref<2x8x32xf32, #tpu.memory_space<vmem>>, vector<1x8x32xf32>,
    return
  }
  func.func @transform_0(%arg0: i32) -> (i32, i32, i32) {
    %c0_i32 = arith.constant 0 : i32
    %c0_i32_0 = arith.constant 0 : i32
    %c0_i32_1 = arith.constant 0 : i32
    %c0_i32_2 = arith.constant 0 : i32
    return %c0_i32, %c0_i32_0, %c0_i32_1 : i32, i32, i32
  }
  func.func @transform_1(%arg0: i32) -> (i32, i32, i32) {
    %c0_i32 = arith.constant 0 : i32
    %c0_i32_0 = arith.constant 0 : i32
    %c0_i32_1 = arith.constant 0 : i32
    %c0_i32_2 = arith.constant 0 : i32
    return %c0_i32, %c0_i32_0, %c0_i32_1 : i32, i32, i32
  }
  func.func @transform_2(%arg0: i32) -> (i32, i32, i32) {
    %c0_i32 = arith.constant 0 : i32
    %c0_i32_0 = arith.constant 0 : i32
    %c0_i32_1 = arith.constant 0 : i32
    %c0_i32_2 = arith.constant 0 : i32
    return %c0_i32, %c0_i32_0, %c0_i32_1 : i32, i32, i32
  }
  func.func @transform_3(%arg0: i32) -> (i32, i32, i32) {
    %c0_i32 = arith.constant 0 : i32
    %c0_i32_0 = arith.constant 0 : i32
    %c0_i32_1 = arith.constant 0 : i32
    %c0_i32_2 = arith.constant 0 : i32
    return %c0_i32, %c0_i32_0, %c0_i32_1 : i32, i32, i32
  }
  func.func @transform_4(%arg0: i32) -> (i32, i32) {
    %c0_i32 = arith.constant 0 : i32
    %c0_i32_0 = arith.constant 0 : i32
    %c0_i32_1 = arith.constant 0 : i32
    return %c0_i32, %c0_i32_0 : i32, i32
  }
  func.func @transform_5(%arg0: i32) -> (i32, i32, i32) {
    %c0_i32 = arith.constant 0 : i32
    %c0_i32_0 = arith.constant 0 : i32
    %c0_i32_1 = arith.constant 0 : i32
    %c0_i32_2 = arith.constant 0 : i32
    return %c0_i32, %c0_i32_0, %c0_i32_1 : i32, i32, i32
  }
}

</mosaic_0001>

<llo_original>
// kernel: tpu_custom_call.1
$region0: #{tpu_custom_call.1}
  #allocation0 [shape = 'u32[]', space=smem, size = 0x4, offset = 0x4, fixed_abs, tag = 'smem constant byte address 0x4 - core index']
  #allocation1 [shape = 'u32[72,128]{1,0:T(1,128)}', space=vmem, size = 0x9000, scoped, tag = 'internal scratch']
  #allocation2 [shape = 'f32[8,32]{1,0:T(8,128)}', space=vmem, size = 0x1000, scoped, tag = 'scratch operand']
  %s0 = inlined_call_operand.vmem [shape: f32[2,8,32], index: 0, kind: input, shape index: {}]
  %s1 = inlined_call_operand.vmem [shape: f32[2,10,32], index: 1, kind: input, shape index: {}]
  %s2 = inlined_call_operand.vmem [shape: s32[2,8,8], index: 2, kind: input, shape index: {}]
  %s3 = inlined_call_operand.vmem [shape: s32[2,1,10], index: 3, kind: input, shape index: {}]
  %s4 = inlined_call_operand.hbm [shape: f32[98,256], index: 4, kind: input, shape index: {}]
  %s5 = inlined_call_operand.hbm [shape: f32[2,8,32], index: 5, kind: output, shape index: {}]
  %s6 = sld [smem:[#allocation0]]
  $region34: #{tpu_custom_call.1} parent=0
    _
  %s8 = ssub.s32 1, %s6
  %s9 = scalar_select 0, %s8, %s6
  $region1: #{tpu_custom_call.1} parent=0
    #allocation3 [shape = 'u8[106496]{0}', space=vmem, size = 0x1a000, scoped, tag = 'input window, operand 4, single buffered']
    #allocation4 [shape = 's32[1]{0}', space=sflag, size = 0x4, scoped, tag = 'scoped memory for tpu_custom_call.1']
    #allocation5 [shape = 's32[1]{0}', space=sflag, size = 0x4, scoped, tag = 'scoped memory for tpu_custom_call.1']
    #allocation6 [shape = 'u8[8192]{0}', space=vmem, size = 0x2000, scoped, tag = 'output window, operand 0, single buffered']
    %10 = vsyncpa [#allocation4], 0
    %11 = vsyncpa [#allocation5], 0
    // Predicated region
    $region2: #{tpu_custom_call.1} parent=1 // pred_check
      _
    $region3: #{tpu_custom_call.1} parent=1 // pred_check_branch
      %13 = sbr.rel (0) target = $region5
    $region4: #{tpu_custom_call.1} parent=1 // pred_region
      _
    $region5: #{tpu_custom_call.1} parent=1 // pred_fallthru
      _
    // Predicated region
    $region6: #{tpu_custom_call.1} parent=1 // pred_check
      _
    $region7: #{tpu_custom_call.1} parent=1 // pred_check_branch
      %15 = sbr.rel (0) target = $region9
    $region8: #{tpu_custom_call.1} parent=1 // pred_region
      _
    $region9: #{tpu_custom_call.1} parent=1 // pred_fallthru
      _
    // Predicated region
    $region10: #{tpu_custom_call.1} parent=1 // pred_check
      _
    $region11: #{tpu_custom_call.1} parent=1 // pred_check_branch
      %17 = sbr.rel (0) target = $region13
    $region12: #{tpu_custom_call.1} parent=1 // pred_region
      _
    $region13: #{tpu_custom_call.1} parent=1 // pred_fallthru
      _
    // Predicated region
    $region14: #{tpu_custom_call.1} parent=1 // pred_check
      _
    $region15: #{tpu_custom_call.1} parent=1 // pred_check_branch
      %19 = sbr.rel (0) target = $region17
    $region16: #{tpu_custom_call.1} parent=1 // pred_region
      _
    $region17: #{tpu_custom_call.1} parent=1 // pred_fallthru
      _
    // Predicated region
    $region18: #{tpu_custom_call.1} parent=1 // pred_check
      _
    $region19: #{tpu_custom_call.1} parent=1 // pred_check_branch
      %21 = sbr.rel (0) target = $region21
    $region20: #{tpu_custom_call.1} parent=1 // pred_region
      %23 = vsyncadd [#allocation4], 0
      %s24 = sshll.u32 %s4, 4
      %s25 = int_to_ptr.hbm [resolvable:$true] %s24
      %s26 = sshll.u32 [#allocation3], 4
      %s27 = int_to_ptr.vmem [resolvable:$true] %s26
      %32 = dma.hbm_to_vmem [thread:$0]  %s25, 3328, %s27, [#allocation4], 256, 256, 16
    $region21: #{tpu_custom_call.1} parent=1 // pred_fallthru
      _
    // Predicated region
    $region22: #{tpu_custom_call.1} parent=1 // pred_check
      _
    $region23: #{tpu_custom_call.1} parent=1 // pred_check_branch
      %34 = sbr.rel (0) target = $region25
    $region24: #{tpu_custom_call.1} parent=1 // pred_region
      %36 = dma.done [#allocation4], 3328
    $region25: #{tpu_custom_call.1} parent=1 // pred_fallthru
      _
    %v37 = vld [vmem:[#allocation3] sm:$0xff]
    %v38 = vld [vmem:[#allocation3 + $0x8] sm:$0xff]
    %v39 = vld [vmem:[#allocation3 + $0x10] sm:$0xff]
    %v40 = vld [vmem:[#allocation3 + $0x18] sm:$0xff]
    %v41 = vld [vmem:[#allocation3 + $0x20] sm:$0xff]
    %v42 = vld [vmem:[#allocation3 + $0x28] sm:$0xff]
    %v43 = vld [vmem:[#allocation3 + $0x30] sm:$0xff]
    %v44 = vld [vmem:[#allocation3 + $0x38] sm:$0xff]
    %v45 = vld [vmem:[#allocation3 + $0x40] sm:$0xff]
    %v46 = vld [vmem:[#allocation3 + $0x50] sm:$0xff]
    %v47 = vld [vmem:[#allocation3 + $0x60] sm:$0xff]
    %v48 = vld [vmem:[#allocation3 + $0x70] sm:$0xff]
    %v49 = vld [vmem:[#allocation3 + $0x80] sm:$0xff]
    %v50 = vld [vmem:[#allocation3 + $0x90] sm:$0xff]
    %v51 = vld [vmem:[#allocation3 + $0xa0] sm:$0xff]
    %v52 = vld [vmem:[#allocation3 + $0xb0] sm:$0xff]
    %v53 = vld [vmem:[#allocation3 + $0xc0] sm:$0x3]
    %v54 = vld [vmem:[#allocation3 + $0xc8] sm:$0x3]
    %v55 = vld [vmem:[%s0] sm:$0xff]
    %v56 = vld [vmem:[%s0 + $0x8] sm:$0xff]
    %v57 = vld [vmem:[%s1] sm:$0xff]
    %v58 = vld [vmem:[%s1 + $0x8] sm:$0x3]
    %v59 = vld [vmem:[%s1 + $0x10] sm:$0xff]
    %v60 = vld [vmem:[%s1 + $0x18] sm:$0x3]
    %v61 = vld [vmem:[%s2] sm:$0xff]
    %v62 = vld [vmem:[%s2 + $0x8] sm:$0xff]
    %v63 = vld [vmem:[%s3] sm:$0x1]
    %v64 = vld [vmem:[%s3 + $0x1] sm:$0x1]
    %v65 = vperm.slane %v53, 0
    %vm66 = vcmask 261120
    %v68 = vsel %vm66, %v55, 0
    %v71 = vsel %vm66, %v57, 0
    %v74 = vsel %vm66, %v58, 0
    %76 = vmatpush.msra.mxu0 0.0
    %77 = vmatpush.msra.mxu0 0.0
    %78 = vmatpush.msra.mxu0 0.0
    %79 = vmatpush.msra.mxu0 0.0
    %80 = vmatpush.msra.mxu0 0.0
    %81 = vmatpush.msra.mxu0 0.0
    %82 = vmatpush.msra.mxu0 0.0
    %83 = vmatpush.msra.mxu0 0.0
    %84 = vmatpush.msra.mxu0 0.0
    %85 = vmatpush.msra.mxu0 0.0
    %86 = vmatpush.msra.mxu0 0.0
    %87 = vmatpush.msra.mxu0 0.0
    %88 = vmatpush.msra.mxu0 %v43
    %89 = vmatpush.msra.mxu0 %v41
    %90 = vmatpush.msra.mxu0 %v39
    %91 = vmatpush.msra.mxu0 %v37
    %92 = vmatmul.f32.gmra.mxu0 %v68
    %v93 = vpop.f32.mrf.mxu0
    %v94 = vadd.f32 %v65, %v93
    %95 = vmatmul.f32.gmra.mxu0 %v71
    %v96 = vpop.f32.mrf.mxu0
    %v97 = vadd.f32 %v65, %v96
    %98 = vmatmul.f32.gmra.mxu0 %v74
    %v99 = vpop.f32.mrf.mxu0
    %v100 = vadd.f32 %v65, %v99
    %101 = vdwg.mxu0
    %vm102 = vcmp.ne.s32.totalorder %v61, 0
    %104 = vrot.lane.b32.xlu0 %v94, 96
    %v105 = vpop.permute.xlu0 %104
    %vm106 = vcmask 64512
    %v107 = vsel %vm106, %v94, 0
    %v109 = vsel %vm106, %v105, 0
    %111 = vmatpush.xpose.msra.mxu0 0.0
    %112 = vmatpush.xpose.msra.mxu0 0.0
    %113 = vmatpush.xpose.msra.mxu0 0.0
    %114 = vmatpush.xpose.msra.mxu0 0.0
    %115 = vmatpush.xpose.msra.mxu0 0.0
    %116 = vmatpush.xpose.msra.mxu0 0.0
    %117 = vmatpush.xpose.msra.mxu0 0.0
    %118 = vmatpush.xpose.msra.mxu0 0.0
    %119 = vmatpush.xpose.msra.mxu0 0.0
    %120 = vmatpush.xpose.msra.mxu0 0.0
    %121 = vmatpush.xpose.msra.mxu0 0.0
    %122 = vmatpush.xpose.msra.mxu0 0.0
    %123 = vmatpush.xpose.msra.mxu0 0.0
    %124 = vmatpush.xpose.msra.mxu0 0.0
    %125 = vmatpush.xpose.msra.mxu0 0.0
    %126 = vmatpush.xpose.msra.mxu0 %v109
    %127 = vmatmul.f32.gmra.mxu0 %v107
    %v128 = vpop.f32.mrf.mxu0
    %v129 = vadd.f32 0.0, %v128
    %130 = vdwg.mxu0
    %v131 = vsel %vm102, %v129, -1e+09
    %v132 = vsel %vm106, %v131, -inf
    %133 = vmax.xlane.f32.xlu0 %v132
    %v134 = vpop.xlane.xlu0 %133
    %v135 = vsub.f32 %v131, %v134
    %v136 = vmul.f32 %v135, 1.442695
    %v137 = vpow.pop %v136
    %v138 = vsel %vm106, %v137, 0.0
    %139 = vadd.xlane.f32.xlu0 %v138
    %v140 = vpop.xlane.xlu0 %139
    %v141 = vrcp.pop %v140
    %v142 = vmul.f32 %v137, %v141
    %143 = vrot.lane.b32.xlu0 %v94, 64
    %v144 = vpop.permute.xlu0 %143
    %v147 = vsel %vm106, %v142, 0
    %149 = vmatpush.msra.mxu0 0.0
    %150 = vmatpush.msra.mxu0 0.0
    %151 = vmatpush.msra.mxu0 0.0
    %152 = vmatpush.msra.mxu0 0.0
    %153 = vmatpush.msra.mxu0 0.0
    %154 = vmatpush.msra.mxu0 0.0
    %155 = vmatpush.msra.mxu0 0.0
    %156 = vmatpush.msra.mxu0 0.0
    %157 = vmatpush.msra.mxu0 0.0
    %158 = vmatpush.msra.mxu0 0.0
    %159 = vmatpush.msra.mxu0 0.0
    %160 = vmatpush.msra.mxu0 0.0
    %161 = vmatpush.msra.mxu0 0.0
    %162 = vmatpush.msra.mxu0 0.0
    %163 = vmatpush.msra.mxu0 0.0
    %164 = vmatpush.msra.mxu0 %v144
    %165 = vmatmul.f32.gmra.mxu0 %v147
    %v166 = vpop.f32.mrf.mxu0
    %v167 = vadd.f32 0.0, %v166
    %168 = vdwg.mxu0
    %169 = vst.msk [vmem:[#allocation2] sm:$0xff] %vm106, %v167
    %170 = vrot.lane.b32.xlu0 %v94, 120
    %v171 = vpop.permute.xlu0 %170
    %172 = vrot.lane.b32.xlu0 %v94, 88
    %v173 = vpop.permute.xlu0 %172
    %v174 = vsel %vm106, %v171, 0
    %v176 = vsel %vm106, %v173, 0
    %178 = vmatpush.xpose.msra.mxu0 0.0
    %179 = vmatpush.xpose.msra.mxu0 0.0
    %180 = vmatpush.xpose.msra.mxu0 0.0
    %181 = vmatpush.xpose.msra.mxu0 0.0
    %182 = vmatpush.xpose.msra.mxu0 0.0
    %183 = vmatpush.xpose.msra.mxu0 0.0
    %184 = vmatpush.xpose.msra.mxu0 0.0
    %185 = vmatpush.xpose.msra.mxu0 0.0
    %186 = vmatpush.xpose.msra.mxu0 0.0
    %187 = vmatpush.xpose.msra.mxu0 0.0
    %188 = vmatpush.xpose.msra.mxu0 0.0
    %189 = vmatpush.xpose.msra.mxu0 0.0
    %190 = vmatpush.xpose.msra.mxu0 0.0
    %191 = vmatpush.xpose.msra.mxu0 0.0
    %192 = vmatpush.xpose.msra.mxu0 0.0
    %193 = vmatpush.xpose.msra.mxu0 %v176
    %194 = vmatmul.f32.gmra.mxu0 %v174
    %v195 = vpop.f32.mrf.mxu0
    %v196 = vadd.f32 0.0, %v195
    %197 = vdwg.mxu0
    %v198 = vsel %vm102, %v196, -1e+09
    %v199 = vsel %vm106, %v198, -inf
    %200 = vmax.xlane.f32.xlu0 %v199
    %v201 = vpop.xlane.xlu0 %200
    %v202 = vsub.f32 %v198, %v201
    %v203 = vmul.f32 %v202, 1.442695
    %v204 = vpow.pop %v203
    %v205 = vsel %vm106, %v204, 0.0
    %206 = vadd.xlane.f32.xlu0 %v205
    %v207 = vpop.xlane.xlu0 %206
    %v208 = vrcp.pop %v207
    %v209 = vmul.f32 %v204, %v208
    %210 = vrot.lane.b32.xlu0 %v94, 56
    %v211 = vpop.permute.xlu0 %210
    %v214 = vsel %vm106, %v209, 0
    %216 = vmatpush.msra.mxu0 0.0
    %217 = vmatpush.msra.mxu0 0.0
    %218 = vmatpush.msra.mxu0 0.0
    %219 = vmatpush.msra.mxu0 0.0
    %220 = vmatpush.msra.mxu0 0.0
    %221 = vmatpush.msra.mxu0 0.0
    %222 = vmatpush.msra.mxu0 0.0
    %223 = vmatpush.msra.mxu0 0.0
    %224 = vmatpush.msra.mxu0 0.0
    %225 = vmatpush.msra.mxu0 0.0
    %226 = vmatpush.msra.mxu0 0.0
    %227 = vmatpush.msra.mxu0 0.0
    %228 = vmatpush.msra.mxu0 0.0
    %229 = vmatpush.msra.mxu0 0.0
    %230 = vmatpush.msra.mxu0 0.0
    %231 = vmatpush.msra.mxu0 %v211
    %232 = vmatmul.f32.gmra.mxu0 %v214
    %v233 = vpop.f32.mrf.mxu0
    %v234 = vadd.f32 0.0, %v233
    %235 = vdwg.mxu0
    %237 = vrot.lane.b32.xlu0 %v234, 8
    %v238 = vpop.permute.xlu0 %237
    %vm240 = vcmask 130112
    %241 = vst.msk [vmem:[#allocation2] sm:$0xff] %vm240, %v238
    %242 = vrot.lane.b32.xlu0 %v94, 112
    %v243 = vpop.permute.xlu0 %242
    %244 = vrot.lane.b32.xlu0 %v94, 80
    %v245 = vpop.permute.xlu0 %244
    %v246 = vsel %vm106, %v243, 0
    %v248 = vsel %vm106, %v245, 0
    %250 = vmatpush.xpose.msra.mxu0 0.0
    %251 = vmatpush.xpose.msra.mxu0 0.0
    %252 = vmatpush.xpose.msra.mxu0 0.0
    %253 = vmatpush.xpose.msra.mxu0 0.0
    %254 = vmatpush.xpose.msra.mxu0 0.0
    %255 = vmatpush.xpose.msra.mxu0 0.0
    %256 = vmatpush.xpose.msra.mxu0 0.0
    %257 = vmatpush.xpose.msra.mxu0 0.0
    %258 = vmatpush.xpose.msra.mxu0 0.0
    %259 = vmatpush.xpose.msra.mxu0 0.0
    %260 = vmatpush.xpose.msra.mxu0 0.0
    %261 = vmatpush.xpose.msra.mxu0 0.0
    %262 = vmatpush.xpose.msra.mxu0 0.0
    %263 = vmatpush.xpose.msra.mxu0 0.0
    %264 = vmatpush.xpose.msra.mxu0 0.0
    %265 = vmatpush.xpose.msra.mxu0 %v248
    %266 = vmatmul.f32.gmra.mxu0 %v246
    %v267 = vpop.f32.mrf.mxu0
    %v268 = vadd.f32 0.0, %v267
    %269 = vdwg.mxu0
    %v270 = vsel %vm102, %v268, -1e+09
    %v271 = vsel %vm106, %v270, -inf
    %272 = vmax.xlane.f32.xlu0 %v271
    %v273 = vpop.xlane.xlu0 %272
    %v274 = vsub.f32 %v270, %v273
    %v275 = vmul.f32 %v274, 1.442695
    %v276 = vpow.pop %v275
    %v277 = vsel %vm106, %v276, 0.0
    %278 = vadd.xlane.f32.xlu0 %v277
    %v279 = vpop.xlane.xlu0 %278
    %v280 = vrcp.pop %v279
    %v281 = vmul.f32 %v276, %v280
    %282 = vrot.lane.b32.xlu0 %v94, 48
    %v283 = vpop.permute.xlu0 %282
    %v286 = vsel %vm106, %v281, 0
    %288 = vmatpush.msra.mxu0 0.0
    %289 = vmatpush.msra.mxu0 0.0
    %290 = vmatpush.msra.mxu0 0.0
    %291 = vmatpush.msra.mxu0 0.0
    %292 = vmatpush.msra.mxu0 0.0
    %293 = vmatpush.msra.mxu0 0.0
    %294 = vmatpush.msra.mxu0 0.0
    %295 = vmatpush.msra.mxu0 0.0
    %296 = vmatpush.msra.mxu0 0.0
    %297 = vmatpush.msra.mxu0 0.0
    %298 = vmatpush.msra.mxu0 0.0
    %299 = vmatpush.msra.mxu0 0.0
    %300 = vmatpush.msra.mxu0 0.0
    %301 = vmatpush.msra.mxu0 0.0
    %302 = vmatpush.msra.mxu0 0.0
    %303 = vmatpush.msra.mxu0 %v283
    %304 = vmatmul.f32.gmra.mxu0 %v286
    %v305 = vpop.f32.mrf.mxu0
    %v306 = vadd.f32 0.0, %v305
    %307 = vdwg.mxu0
    %309 = vrot.lane.b32.xlu0 %v306, 16
    %v310 = vpop.permute.xlu0 %309
    %vm312 = vcmask 195712
    %313 = vst.msk [vmem:[#allocation2] sm:$0xff] %vm312, %v310
    %314 = vrot.lane.b32.xlu0 %v94, 104
    %v315 = vpop.permute.xlu0 %314
    %316 = vrot.lane.b32.xlu0 %v94, 72
    %v317 = vpop.permute.xlu0 %316
    %v318 = vsel %vm106, %v315, 0
    %v320 = vsel %vm106, %v317, 0
    %322 = vmatpush.xpose.msra.mxu0 0.0
    %323 = vmatpush.xpose.msra.mxu0 0.0
    %324 = vmatpush.xpose.msra.mxu0 0.0
    %325 = vmatpush.xpose.msra.mxu0 0.0
    %326 = vmatpush.xpose.msra.mxu0 0.0
    %327 = vmatpush.xpose.msra.mxu0 0.0
    %328 = vmatpush.xpose.msra.mxu0 0.0
    %329 = vmatpush.xpose.msra.mxu0 0.0
    %330 = vmatpush.xpose.msra.mxu0 0.0
    %331 = vmatpush.xpose.msra.mxu0 0.0
    %332 = vmatpush.xpose.msra.mxu0 0.0
    %333 = vmatpush.xpose.msra.mxu0 0.0
    %334 = vmatpush.xpose.msra.mxu0 0.0
    %335 = vmatpush.xpose.msra.mxu0 0.0
    %336 = vmatpush.xpose.msra.mxu0 0.0
    %337 = vmatpush.xpose.msra.mxu0 %v320
    %338 = vmatmul.f32.gmra.mxu0 %v318
    %v339 = vpop.f32.mrf.mxu0
    %v340 = vadd.f32 0.0, %v339
    %341 = vdwg.mxu0
    %v342 = vsel %vm102, %v340, -1e+09
    %v343 = vsel %vm106, %v342, -inf
    %344 = vmax.xlane.f32.xlu0 %v343
    %v345 = vpop.xlane.xlu0 %344
    %v346 = vsub.f32 %v342, %v345
    %v347 = vmul.f32 %v346, 1.442695
    %v348 = vpow.pop %v347
    %v349 = vsel %vm106, %v348, 0.0
    %350 = vadd.xlane.f32.xlu0 %v349
    %v351 = vpop.xlane.xlu0 %350
    %v352 = vrcp.pop %v351
    %v353 = vmul.f32 %v348, %v352
    %354 = vrot.lane.b32.xlu0 %v94, 40
    %v355 = vpop.permute.xlu0 %354
    %v358 = vsel %vm106, %v353, 0
    %360 = vmatpush.msra.mxu0 0.0
    %361 = vmatpush.msra.mxu0 0.0
    %362 = vmatpush.msra.mxu0 0.0
    %363 = vmatpush.msra.mxu0 0.0
    %364 = vmatpush.msra.mxu0 0.0
    %365 = vmatpush.msra.mxu0 0.0
    %366 = vmatpush.msra.mxu0 0.0
    %367 = vmatpush.msra.mxu0 0.0
    %368 = vmatpush.msra.mxu0 0.0
    %369 = vmatpush.msra.mxu0 0.0
    %370 = vmatpush.msra.mxu0 0.0
    %371 = vmatpush.msra.mxu0 0.0
    %372 = vmatpush.msra.mxu0 0.0
    %373 = vmatpush.msra.mxu0 0.0
    %374 = vmatpush.msra.mxu0 0.0
    %375 = vmatpush.msra.mxu0 %v355
    %376 = vmatmul.f32.gmra.mxu0 %v358
    %v377 = vpop.f32.mrf.mxu0
    %v378 = vadd.f32 0.0, %v377
    %379 = vdwg.mxu0
    %381 = vrot.lane.b32.xlu0 %v378, 24
    %v382 = vpop.permute.xlu0 %381
    %vm384 = vcmask 261312
    %385 = vst.msk [vmem:[#allocation2] sm:$0xff] %vm384, %v382
    %v386 = vld [vmem:[#allocation2] sm:$0xff]
    %391 = vrot.lane.b32.xlu0 %v37, 32
    %v392 = vpop.permute.xlu0 %391
    %393 = vrot.lane.b32.xlu0 %v39, 32
    %v394 = vpop.permute.xlu0 %393
    %395 = vrot.lane.b32.xlu0 %v41, 32
    %v396 = vpop.permute.xlu0 %395
    %397 = vrot.lane.b32.xlu0 %v43, 32
    %v398 = vpop.permute.xlu0 %397
    %404 = vrot.lane.b32.xlu0 %v65, 32
    %v405 = vpop.permute.xlu0 %404
    %v408 = vsel %vm66, %v386, 0
    %410 = vmatpush.msra.mxu0 0.0
    %411 = vmatpush.msra.mxu0 0.0
    %412 = vmatpush.msra.mxu0 0.0
    %413 = vmatpush.msra.mxu0 0.0
    %414 = vmatpush.msra.mxu0 0.0
    %415 = vmatpush.msra.mxu0 0.0
    %416 = vmatpush.msra.mxu0 0.0
    %417 = vmatpush.msra.mxu0 0.0
    %418 = vmatpush.msra.mxu0 0.0
    %419 = vmatpush.msra.mxu0 0.0
    %420 = vmatpush.msra.mxu0 0.0
    %421 = vmatpush.msra.mxu0 0.0
    %422 = vmatpush.msra.mxu0 %v398
    %423 = vmatpush.msra.mxu0 %v396
    %424 = vmatpush.msra.mxu0 %v394
    %425 = vmatpush.msra.mxu0 %v392
    %426 = vmatmul.f32.gmra.mxu0 %v408
    %v427 = vpop.f32.mrf.mxu0
    %v428 = vadd.f32 %v405, %v427
    %429 = vdwg.mxu0
    %v430 = vadd.f32 %v55, %v428
    %v431 = vsel %vm66, %v430, 0.0
    %432 = vadd.xlane.f32.xlu0 %v431
    %v433 = vpop.xlane.xlu0 %432
    %v434 = vrcp.pop 32.0
    %v435 = vmul.f32 32.0, %v434
    %v436 = vsub.f32 1.0, %v435
    %v437 = vmul.f32 %v434, %v436
    %v438 = vadd.f32 %v434, %v437
    %vm439 = vweird.f32 %v434
    %v440 = vsel %vm439, %v434, %v438
    %v441 = vmul.f32 %v433, %v440
    %v442 = vsub.f32 %v430, %v441
    %v443 = vmul.f32 %v442, %v442
    %v444 = vsel %vm66, %v443, 0.0
    %445 = vadd.xlane.f32.xlu0 %v444
    %v446 = vpop.xlane.xlu0 %445
    %v447 = vmul.f32 %v446, 0.032258064
    %v448 = vrsqrt.pop %v447
    %v449 = vmul.f32 %v448, %v447
    %v450 = vmul.f32 %v449, %v448
    %v451 = vmul.f32 0.5, %v450
    %v452 = vsub.f32 1.5, %v451
    %v453 = vmul.f32 %v448, %v452
    %v454 = vmul.f32 %v447, %v453
    %vm455 = vcmp.eq.f32.partialorder %v447, inf
    %v456 = vsel %vm455, %v447, %v454
    %vm457 = vcmp.eq.f32.partialorder %v447, 0.0
    %v458 = vand.u32 %v447, 2147483648
    %v459 = vsel %vm457, %v458, %v456
    %v460 = vadd.f32 %v459, 1e-06
    %v461 = vrcp.pop %v460
    %v462 = vmul.f32 %v460, %v461
    %v463 = vsub.f32 1.0, %v462
    %v464 = vmul.f32 %v461, %v463
    %v465 = vadd.f32 %v461, %v464
    %vm466 = vweird.f32 %v460
    %vm467 = vweird.f32 %v461
    %vm468 = vmor %vm466, %vm467
    %v469 = vsel %vm468, %v461, %v465
    %v470 = vand.u32 2147483647, %v460
    %vm471 = vcmp.eq.f32.partialorder %v470, 8.507059e+37
    %v472 = vand.u32 %v460, 2147483648
    %v473 = vor.u32 1.1754944e-38, %v472
    %v474 = vsel %vm471, %v473, %v469
    %v475 = vmul.f32 %v442, %v474
    %v476 = vperm.slane %v54, 0
    %478 = vrot.lane.b32.xlu0 %v475, 96
    %v479 = vpop.permute.xlu0 %478
    %v481 = vmul.f32 %v476, %v479
    %v482 = vperm.slane %v53, 1
    %484 = vrot.lane.b32.xlu0 %v482, 96
    %v485 = vpop.permute.xlu0 %484
    %v487 = vadd.f32 %v481, %v485
    %489 = vrot.lane.b32.xlu0 %v487, 32
    %v490 = vpop.permute.xlu0 %489
    %v491 = vsel %vm66, %v490, 0
    %493 = vmatpush.msra.mxu0 0.0
    %494 = vmatpush.msra.mxu0 0.0
    %495 = vmatpush.msra.mxu0 0.0
    %496 = vmatpush.msra.mxu0 0.0
    %497 = vmatpush.msra.mxu0 0.0
    %498 = vmatpush.msra.mxu0 0.0
    %499 = vmatpush.msra.mxu0 0.0
    %500 = vmatpush.msra.mxu0 0.0
    %501 = vmatpush.msra.mxu0 0.0
    %502 = vmatpush.msra.mxu0 0.0
    %503 = vmatpush.msra.mxu0 0.0
    %504 = vmatpush.msra.mxu0 0.0
    %505 = vmatpush.msra.mxu0 %v43
    %506 = vmatpush.msra.mxu0 %v41
    %507 = vmatpush.msra.mxu0 %v39
    %508 = vmatpush.msra.mxu0 %v37
    %509 = vmatmul.f32.gmra.mxu0 %v491
    %v510 = vpop.f32.mrf.mxu0
    %v511 = vadd.f32 %v65, %v510
    %512 = vdwg.mxu0
    %v513 = vperm.slane %v63, 0
    %vm514 = vcmp.ne.s32.totalorder %v513, 0
    %517 = vrot.lane.b32.xlu0 %v97, 96
    %v518 = vpop.permute.xlu0 %517
    %519 = vrot.lane.b32.xlu0 %v100, 96
    %v520 = vpop.permute.xlu0 %519
    %v522 = vsel %vm106, %v511, 0
    %v524 = vsel %vm106, %v518, 0
    %v526 = vsel %vm106, %v520, 0
    %528 = vmatpush.xpose.msra.mxu0 0.0
    %529 = vmatpush.xpose.msra.mxu0 0.0
    %530 = vmatpush.xpose.msra.mxu0 0.0
    %531 = vmatpush.xpose.msra.mxu0 0.0
    %532 = vmatpush.xpose.msra.mxu0 0.0
    %533 = vmatpush.xpose.msra.mxu0 0.0
    %534 = vmatpush.xpose.msra.mxu0 0.0
    %535 = vmatpush.xpose.msra.mxu0 0.0
    %536 = vmatpush.xpose.msra.mxu0 0.0
    %537 = vmatpush.xpose.msra.mxu0 0.0
    %538 = vmatpush.xpose.msra.mxu0 0.0
    %539 = vmatpush.xpose.msra.mxu0 0.0
    %540 = vmatpush.xpose.msra.mxu0 0.0
    %541 = vmatpush.xpose.msra.mxu0 0.0
    %542 = vmatpush.xpose.msra.mxu0 %v526
    %543 = vmatpush.xpose.msra.mxu0 %v524
    %544 = vmatmul.f32.gmra.mxu0 %v522
    %v545 = vpop.f32.mrf.mxu0
    %v546 = vadd.f32 0.0, %v545
    %547 = vdwg.mxu0
    %v548 = vsel %vm514, %v546, -1e+09
    %vm549 = vcmask 80896
    %v550 = vsel %vm549, %v548, -inf
    %551 = vmax.xlane.f32.xlu0 %v550
    %v552 = vpop.xlane.xlu0 %551
    %v553 = vsub.f32 %v548, %v552
    %v554 = vmul.f32 %v553, 1.442695
    %v555 = vpow.pop %v554
    %v556 = vsel %vm549, %v555, 0.0
    %557 = vadd.xlane.f32.xlu0 %v556
    %v558 = vpop.xlane.xlu0 %557
    %v559 = vrcp.pop %v558
    %v560 = vmul.f32 %v555, %v559
    %561 = vrot.lane.b32.xlu0 %v97, 64
    %v562 = vpop.permute.xlu0 %561
    %563 = vrot.lane.b32.xlu0 %v100, 64
    %v564 = vpop.permute.xlu0 %563
    %v567 = vsel %vm549, %v560, 0
    %vm569 = vcmask 1041408
    %v570 = vsel %vm569, %v564, 0
    %572 = vmatpush.msra.mxu0 0.0
    %573 = vmatpush.msra.mxu0 0.0
    %574 = vmatpush.msra.mxu0 0.0
    %575 = vmatpush.msra.mxu0 0.0
    %576 = vmatpush.msra.mxu0 0.0
    %577 = vmatpush.msra.mxu0 0.0
    %578 = vmatpush.msra.mxu0 0.0
    %579 = vmatpush.msra.mxu0 0.0
    %580 = vmatpush.msra.mxu0 0.0
    %581 = vmatpush.msra.mxu0 0.0
    %582 = vmatpush.msra.mxu0 0.0
    %583 = vmatpush.msra.mxu0 0.0
    %584 = vmatpush.msra.mxu0 0.0
    %585 = vmatpush.msra.mxu0 0.0
    %586 = vmatpush.msra.mxu0 %v570
    %587 = vmatpush.msra.mxu0 %v562
    %588 = vmatmul.f32.gmra.mxu0 %v567
    %v589 = vpop.f32.mrf.mxu0
    %v590 = vadd.f32 0.0, %v589
    %591 = vdwg.mxu0
    %592 = vst.msk [vmem:[#allocation2] sm:$0xff] %vm106, %v590
    %593 = vrot.lane.b32.xlu0 %v511, 120
    %v594 = vpop.permute.xlu0 %593
    %595 = vrot.lane.b32.xlu0 %v97, 88
    %v596 = vpop.permute.xlu0 %595
    %597 = vrot.lane.b32.xlu0 %v100, 88
    %v598 = vpop.permute.xlu0 %597
    %v599 = vsel %vm106, %v594, 0
    %v601 = vsel %vm106, %v596, 0
    %v603 = vsel %vm106, %v598, 0
    %605 = vmatpush.xpose.msra.mxu0 0.0
    %606 = vmatpush.xpose.msra.mxu0 0.0
    %607 = vmatpush.xpose.msra.mxu0 0.0
    %608 = vmatpush.xpose.msra.mxu0 0.0
    %609 = vmatpush.xpose.msra.mxu0 0.0
    %610 = vmatpush.xpose.msra.mxu0 0.0
    %611 = vmatpush.xpose.msra.mxu0 0.0
    %612 = vmatpush.xpose.msra.mxu0 0.0
    %613 = vmatpush.xpose.msra.mxu0 0.0
    %614 = vmatpush.xpose.msra.mxu0 0.0
    %615 = vmatpush.xpose.msra.mxu0 0.0
    %616 = vmatpush.xpose.msra.mxu0 0.0
    %617 = vmatpush.xpose.msra.mxu0 0.0
    %618 = vmatpush.xpose.msra.mxu0 0.0
    %619 = vmatpush.xpose.msra.mxu0 %v603
    %620 = vmatpush.xpose.msra.mxu0 %v601
    %621 = vmatmul.f32.gmra.mxu0 %v599
    %v622 = vpop.f32.mrf.mxu0
    %v623 = vadd.f32 0.0, %v622
    %624 = vdwg.mxu0
    %v625 = vsel %vm514, %v623, -1e+09
    %v626 = vsel %vm549, %v625, -inf
    %627 = vmax.xlane.f32.xlu0 %v626
    %v628 = vpop.xlane.xlu0 %627
    %v629 = vsub.f32 %v625, %v628
    %v630 = vmul.f32 %v629, 1.442695
    %v631 = vpow.pop %v630
    %v632 = vsel %vm549, %v631, 0.0
    %633 = vadd.xlane.f32.xlu0 %v632
    %v634 = vpop.xlane.xlu0 %633
    %v635 = vrcp.pop %v634
    %v636 = vmul.f32 %v631, %v635
    %637 = vrot.lane.b32.xlu0 %v97, 56
    %v638 = vpop.permute.xlu0 %637
    %639 = vrot.lane.b32.xlu0 %v100, 56
    %v640 = vpop.permute.xlu0 %639
    %v643 = vsel %vm549, %v636, 0
    %v645 = vsel %vm569, %v640, 0
    %647 = vmatpush.msra.mxu0 0.0
    %648 = vmatpush.msra.mxu0 0.0
    %649 = vmatpush.msra.mxu0 0.0
    %650 = vmatpush.msra.mxu0 0.0
    %651 = vmatpush.msra.mxu0 0.0
    %652 = vmatpush.msra.mxu0 0.0
    %653 = vmatpush.msra.mxu0 0.0
    %654 = vmatpush.msra.mxu0 0.0
    %655 = vmatpush.msra.mxu0 0.0
    %656 = vmatpush.msra.mxu0 0.0
    %657 = vmatpush.msra.mxu0 0.0
    %658 = vmatpush.msra.mxu0 0.0
    %659 = vmatpush.msra.mxu0 0.0
    %660 = vmatpush.msra.mxu0 0.0
    %661 = vmatpush.msra.mxu0 %v645
    %662 = vmatpush.msra.mxu0 %v638
    %663 = vmatmul.f32.gmra.mxu0 %v643
    %v664 = vpop.f32.mrf.mxu0
    %v665 = vadd.f32 0.0, %v664
    %666 = vdwg.mxu0
    %668 = vrot.lane.b32.xlu0 %v665, 8
    %v669 = vpop.permute.xlu0 %668
    %671 = vst.msk [vmem:[#allocation2] sm:$0xff] %vm240, %v669
    %672 = vrot.lane.b32.xlu0 %v511, 112
    %v673 = vpop.permute.xlu0 %672
    %674 = vrot.lane.b32.xlu0 %v97, 80
    %v675 = vpop.permute.xlu0 %674
    %676 = vrot.lane.b32.xlu0 %v100, 80
    %v677 = vpop.permute.xlu0 %676
    %v678 = vsel %vm106, %v673, 0
    %v680 = vsel %vm106, %v675, 0
    %v682 = vsel %vm106, %v677, 0
    %684 = vmatpush.xpose.msra.mxu0 0.0
    %685 = vmatpush.xpose.msra.mxu0 0.0
    %686 = vmatpush.xpose.msra.mxu0 0.0
    %687 = vmatpush.xpose.msra.mxu0 0.0
    %688 = vmatpush.xpose.msra.mxu0 0.0
    %689 = vmatpush.xpose.msra.mxu0 0.0
    %690 = vmatpush.xpose.msra.mxu0 0.0
    %691 = vmatpush.xpose.msra.mxu0 0.0
    %692 = vmatpush.xpose.msra.mxu0 0.0
    %693 = vmatpush.xpose.msra.mxu0 0.0
    %694 = vmatpush.xpose.msra.mxu0 0.0
    %695 = vmatpush.xpose.msra.mxu0 0.0
    %696 = vmatpush.xpose.msra.mxu0 0.0
    %697 = vmatpush.xpose.msra.mxu0 0.0
    %698 = vmatpush.xpose.msra.mxu0 %v682
    %699 = vmatpush.xpose.msra.mxu0 %v680
    %700 = vmatmul.f32.gmra.mxu0 %v678
    %v701 = vpop.f32.mrf.mxu0
    %v702 = vadd.f32 0.0, %v701
    %703 = vdwg.mxu0
    %v704 = vsel %vm514, %v702, -1e+09
    %v705 = vsel %vm549, %v704, -inf
    %706 = vmax.xlane.f32.xlu0 %v705
    %v707 = vpop.xlane.xlu0 %706
    %v708 = vsub.f32 %v704, %v707
    %v709 = vmul.f32 %v708, 1.442695
    %v710 = vpow.pop %v709
    %v711 = vsel %vm549, %v710, 0.0
    %712 = vadd.xlane.f32.xlu0 %v711
    %v713 = vpop.xlane.xlu0 %712
    %v714 = vrcp.pop %v713
    %v715 = vmul.f32 %v710, %v714
    %716 = vrot.lane.b32.xlu0 %v97, 48
    %v717 = vpop.permute.xlu0 %716
    %718 = vrot.lane.b32.xlu0 %v100, 48
    %v719 = vpop.permute.xlu0 %718
    %v722 = vsel %vm549, %v715, 0
    %v724 = vsel %vm569, %v719, 0
    %726 = vmatpush.msra.mxu0 0.0
    %727 = vmatpush.msra.mxu0 0.0
    %728 = vmatpush.msra.mxu0 0.0
    %729 = vmatpush.msra.mxu0 0.0
    %730 = vmatpush.msra.mxu0 0.0
    %731 = vmatpush.msra.mxu0 0.0
    %732 = vmatpush.msra.mxu0 0.0
    %733 = vmatpush.msra.mxu0 0.0
    %734 = vmatpush.msra.mxu0 0.0
    %735 = vmatpush.msra.mxu0 0.0
    %736 = vmatpush.msra.mxu0 0.0
    %737 = vmatpush.msra.mxu0 0.0
    %738 = vmatpush.msra.mxu0 0.0
    %739 = vmatpush.msra.mxu0 0.0
    %740 = vmatpush.msra.mxu0 %v724
    %741 = vmatpush.msra.mxu0 %v717
    %742 = vmatmul.f32.gmra.mxu0 %v722
    %v743 = vpop.f32.mrf.mxu0
    %v744 = vadd.f32 0.0, %v743
    %745 = vdwg.mxu0
    %747 = vrot.lane.b32.xlu0 %v744, 16
    %v748 = vpop.permute.xlu0 %747
    %750 = vst.msk [vmem:[#allocation2] sm:$0xff] %vm312, %v748
    %751 = vrot.lane.b32.xlu0 %v511, 104
    %v752 = vpop.permute.xlu0 %751
    %753 = vrot.lane.b32.xlu0 %v97, 72
    %v754 = vpop.permute.xlu0 %753
    %755 = vrot.lane.b32.xlu0 %v100, 72
    %v756 = vpop.permute.xlu0 %755
    %v757 = vsel %vm106, %v752, 0
    %v759 = vsel %vm106, %v754, 0
    %v761 = vsel %vm106, %v756, 0
    %763 = vmatpush.xpose.msra.mxu0 0.0
    %764 = vmatpush.xpose.msra.mxu0 0.0
    %765 = vmatpush.xpose.msra.mxu0 0.0
    %766 = vmatpush.xpose.msra.mxu0 0.0
    %767 = vmatpush.xpose.msra.mxu0 0.0
    %768 = vmatpush.xpose.msra.mxu0 0.0
    %769 = vmatpush.xpose.msra.mxu0 0.0
    %770 = vmatpush.xpose.msra.mxu0 0.0
    %771 = vmatpush.xpose.msra.mxu0 0.0
    %772 = vmatpush.xpose.msra.mxu0 0.0
    %773 = vmatpush.xpose.msra.mxu0 0.0
    %774 = vmatpush.xpose.msra.mxu0 0.0
    %775 = vmatpush.xpose.msra.mxu0 0.0
    %776 = vmatpush.xpose.msra.mxu0 0.0
    %777 = vmatpush.xpose.msra.mxu0 %v761
    %778 = vmatpush.xpose.msra.mxu0 %v759
    %779 = vmatmul.f32.gmra.mxu0 %v757
    %v780 = vpop.f32.mrf.mxu0
    %v781 = vadd.f32 0.0, %v780
    %782 = vdwg.mxu0
    %v783 = vsel %vm514, %v781, -1e+09
    %v784 = vsel %vm549, %v783, -inf
    %785 = vmax.xlane.f32.xlu0 %v784
    %v786 = vpop.xlane.xlu0 %785
    %v787 = vsub.f32 %v783, %v786
    %v788 = vmul.f32 %v787, 1.442695
    %v789 = vpow.pop %v788
    %v790 = vsel %vm549, %v789, 0.0
    %791 = vadd.xlane.f32.xlu0 %v790
    %v792 = vpop.xlane.xlu0 %791
    %v793 = vrcp.pop %v792
    %v794 = vmul.f32 %v789, %v793
    %795 = vrot.lane.b32.xlu0 %v97, 40
    %v796 = vpop.permute.xlu0 %795
    %797 = vrot.lane.b32.xlu0 %v100, 40
    %v798 = vpop.permute.xlu0 %797
    %v801 = vsel %vm549, %v794, 0
    %v803 = vsel %vm569, %v798, 0
    %805 = vmatpush.msra.mxu0 0.0
    %806 = vmatpush.msra.mxu0 0.0
    %807 = vmatpush.msra.mxu0 0.0
    %808 = vmatpush.msra.mxu0 0.0
    %809 = vmatpush.msra.mxu0 0.0
    %810 = vmatpush.msra.mxu0 0.0
    %811 = vmatpush.msra.mxu0 0.0
    %812 = vmatpush.msra.mxu0 0.0
    %813 = vmatpush.msra.mxu0 0.0
    %814 = vmatpush.msra.mxu0 0.0
    %815 = vmatpush.msra.mxu0 0.0
    %816 = vmatpush.msra.mxu0 0.0
    %817 = vmatpush.msra.mxu0 0.0
    %818 = vmatpush.msra.mxu0 0.0
    %819 = vmatpush.msra.mxu0 %v803
    %820 = vmatpush.msra.mxu0 %v796
    %821 = vmatmul.f32.gmra.mxu0 %v801
    %v822 = vpop.f32.mrf.mxu0
    %v823 = vadd.f32 0.0, %v822
    %824 = vdwg.mxu0
    %826 = vrot.lane.b32.xlu0 %v823, 24
    %v827 = vpop.permute.xlu0 %826
    %829 = vst.msk [vmem:[#allocation2] sm:$0xff] %vm384, %v827
    %v830 = vld [vmem:[#allocation2] sm:$0xff]
    %v832 = vsel %vm66, %v830, 0
    %834 = vmatpush.msra.mxu0 0.0
    %835 = vmatpush.msra.mxu0 0.0
    %836 = vmatpush.msra.mxu0 0.0
    %837 = vmatpush.msra.mxu0 0.0
    %838 = vmatpush.msra.mxu0 0.0
    %839 = vmatpush.msra.mxu0 0.0
    %840 = vmatpush.msra.mxu0 0.0
    %841 = vmatpush.msra.mxu0 0.0
    %842 = vmatpush.msra.mxu0 0.0
    %843 = vmatpush.msra.mxu0 0.0
    %844 = vmatpush.msra.mxu0 0.0
    %845 = vmatpush.msra.mxu0 0.0
    %846 = vmatpush.msra.mxu0 %v398
    %847 = vmatpush.msra.mxu0 %v396
    %848 = vmatpush.msra.mxu0 %v394
    %849 = vmatpush.msra.mxu0 %v392
    %850 = vmatmul.f32.gmra.mxu0 %v832
    %v851 = vpop.f32.mrf.mxu0
    %v852 = vadd.f32 %v405, %v851
    %853 = vdwg.mxu0
    %855 = vrot.lane.b32.xlu0 %v852, 96
    %v856 = vpop.permute.xlu0 %855
    %v858 = vadd.f32 %v487, %v856
    %860 = vrot.lane.b32.xlu0 %v858, 32
    %v861 = vpop.permute.xlu0 %860
    %v863 = vsel %vm66, %v861, 0.0
    %864 = vadd.xlane.f32.xlu0 %v863
    %v865 = vpop.xlane.xlu0 %864
    %v866 = vmul.f32 %v865, %v440
    %v867 = vsub.f32 %v858, %v866
    %v868 = vmul.f32 %v867, %v867
    %870 = vrot.lane.b32.xlu0 %v868, 32
    %v871 = vpop.permute.xlu0 %870
    %v873 = vsel %vm66, %v871, 0.0
    %874 = vadd.xlane.f32.xlu0 %v873
    %v875 = vpop.xlane.xlu0 %874
    %v876 = vmul.f32 %v875, 0.032258064
    %v877 = vrsqrt.pop %v876
    %v878 = vmul.f32 %v877, %v876
    %v879 = vmul.f32 %v878, %v877
    %v880 = vmul.f32 0.5, %v879
    %v881 = vsub.f32 1.5, %v880
    %v882 = vmul.f32 %v877, %v881
    %v883 = vmul.f32 %v876, %v882
    %vm884 = vcmp.eq.f32.partialorder %v876, inf
    %v885 = vsel %vm884, %v876, %v883
    %vm886 = vcmp.eq.f32.partialorder %v876, 0.0
    %v887 = vand.u32 %v876, 2147483648
    %v888 = vsel %vm886, %v887, %v885
    %v889 = vadd.f32 %v888, 1e-06
    %v890 = vrcp.pop %v889
    %v891 = vmul.f32 %v889, %v890
    %v892 = vsub.f32 1.0, %v891
    %v893 = vmul.f32 %v890, %v892
    %v894 = vadd.f32 %v890, %v893
    %vm895 = vweird.f32 %v889
    %vm896 = vweird.f32 %v890
    %vm897 = vmor %vm895, %vm896
    %v898 = vsel %vm897, %v890, %v894
    %v899 = vand.u32 2147483647, %v889
    %vm900 = vcmp.eq.f32.partialorder %v899, 8.507059e+37
    %v901 = vand.u32 %v889, 2147483648
    %v902 = vor.u32 1.1754944e-38, %v901
    %v903 = vsel %vm900, %v902, %v898
    %v904 = vmul.f32 %v867, %v903
    %906 = vrot.lane.b32.xlu0 %v904, 64
    %v907 = vpop.permute.xlu0 %906
    %v909 = vmul.f32 %v482, %v907
    %v910 = vadd.f32 %v909, %v485
    %912 = vrot.lane.b32.xlu0 %v910, 96
    %v913 = vpop.permute.xlu0 %912
    %v914 = vsel %vm66, %v913, 0
    %916 = vmatpush.msra.mxu0 0.0
    %917 = vmatpush.msra.mxu0 0.0
    %918 = vmatpush.msra.mxu0 0.0
    %919 = vmatpush.msra.mxu0 0.0
    %920 = vmatpush.msra.mxu0 0.0
    %921 = vmatpush.msra.mxu0 0.0
    %922 = vmatpush.msra.mxu0 0.0
    %923 = vmatpush.msra.mxu0 0.0
    %924 = vmatpush.msra.mxu0 0.0
    %925 = vmatpush.msra.mxu0 0.0
    %926 = vmatpush.msra.mxu0 0.0
    %927 = vmatpush.msra.mxu0 0.0
    %928 = vmatpush.msra.mxu0 %v44
    %929 = vmatpush.msra.mxu0 %v42
    %930 = vmatpush.msra.mxu0 %v40
    %931 = vmatpush.msra.mxu0 %v38
    %932 = vmatmul.f32.gmra.mxu0 %v914
    %v933 = vpop.f32.mrf.mxu0
    %v934 = vadd.f32 %v476, %v933
    %935 = vdwg.mxu0
    %v936 = vmax.f32 %v934, 0.0
    %938 = vrot.lane.b32.xlu0 %v476, 64
    %v939 = vpop.permute.xlu0 %938
    %vm941 = vcmask 523264
    %v943 = vsel %vm941, %v936, 0
    %945 = vmatpush.msra.mxu0 0.0
    %946 = vmatpush.msra.mxu0 0.0
    %947 = vmatpush.msra.mxu0 0.0
    %948 = vmatpush.msra.mxu0 0.0
    %949 = vmatpush.msra.mxu0 0.0
    %950 = vmatpush.msra.mxu0 0.0
    %951 = vmatpush.msra.mxu0 0.0
    %952 = vmatpush.msra.mxu0 0.0
    %953 = vmatpush.msra.mxu0 %v52
    %954 = vmatpush.msra.mxu0 %v51
    %955 = vmatpush.msra.mxu0 %v50
    %956 = vmatpush.msra.mxu0 %v49
    %957 = vmatpush.msra.mxu0 %v48
    %958 = vmatpush.msra.mxu0 %v47
    %959 = vmatpush.msra.mxu0 %v46
    %960 = vmatpush.msra.mxu0 %v45
    %961 = vmatmul.f32.gmra.mxu0 %v943
    %v962 = vpop.f32.mrf.mxu0
    %v963 = vadd.f32 %v939, %v962
    %964 = vdwg.mxu0
    %966 = vrot.lane.b32.xlu0 %v963, 32
    %v967 = vpop.permute.xlu0 %966
    %v969 = vadd.f32 %v910, %v967
    %971 = vrot.lane.b32.xlu0 %v969, 96
    %v972 = vpop.permute.xlu0 %971
    %v974 = vsel %vm66, %v972, 0.0
    %975 = vadd.xlane.f32.xlu0 %v974
    %v976 = vpop.xlane.xlu0 %975
    %v977 = vmul.f32 %v976, %v440
    %v978 = vsub.f32 %v969, %v977
    %v979 = vmul.f32 %v978, %v978
    %981 = vrot.lane.b32.xlu0 %v979, 96
    %v982 = vpop.permute.xlu0 %981
    %v984 = vsel %vm66, %v982, 0.0
    %985 = vadd.xlane.f32.xlu0 %v984
    %v986 = vpop.xlane.xlu0 %985
    %v987 = vmul.f32 %v986, 0.032258064
    %v988 = vrsqrt.pop %v987
    %v989 = vmul.f32 %v988, %v987
    %v990 = vmul.f32 %v989, %v988
    %v991 = vmul.f32 0.5, %v990
    %v992 = vsub.f32 1.5, %v991
    %v993 = vmul.f32 %v988, %v992
    %v994 = vmul.f32 %v987, %v993
    %vm995 = vcmp.eq.f32.partialorder %v987, inf
    %v996 = vsel %vm995, %v987, %v994
    %vm997 = vcmp.eq.f32.partialorder %v987, 0.0
    %v998 = vand.u32 %v987, 2147483648
    %v999 = vsel %vm997, %v998, %v996
    %v1000 = vadd.f32 %v999, 1e-06
    %v1001 = vrcp.pop %v1000
    %v1002 = vmul.f32 %v1000, %v1001
    %v1003 = vsub.f32 1.0, %v1002
    %v1004 = vmul.f32 %v1001, %v1003
    %v1005 = vadd.f32 %v1001, %v1004
    %vm1006 = vweird.f32 %v1000
    %vm1007 = vweird.f32 %v1001
    %vm1008 = vmor %vm1006, %vm1007
    %v1009 = vsel %vm1008, %v1001, %v1005
    %v1010 = vand.u32 2147483647, %v1000
    %vm1011 = vcmp.eq.f32.partialorder %v1010, 8.507059e+37
    %v1012 = vand.u32 %v1000, 2147483648
    %v1013 = vor.u32 1.1754944e-38, %v1012
    %v1014 = vsel %vm1011, %v1013, %v1009
    %v1015 = vmul.f32 %v978, %v1014
    %1017 = vrot.lane.b32.xlu0 %v1015, 64
    %v1018 = vpop.permute.xlu0 %1017
    %v1020 = vmul.f32 %v482, %v1018
    %v1021 = vperm.slane %v54, 1
    %1023 = vrot.lane.b32.xlu0 %v1021, 96
    %v1024 = vpop.permute.xlu0 %1023
    %v1026 = vadd.f32 %v1020, %v1024
    %1028 = vrot.lane.b32.xlu0 %v1026, 32
    %v1029 = vpop.permute.xlu0 %1028
    %1031 = vst.msk [vmem:[#allocation6] sm:$0xff] %vm66, %v1029
    %v1033 = vsel %vm66, %v56, 0
    %v1036 = vsel %vm66, %v59, 0
    %v1039 = vsel %vm66, %v60, 0
    %1041 = vmatpush.msra.mxu0 0.0
    %1042 = vmatpush.msra.mxu0 0.0
    %1043 = vmatpush.msra.mxu0 0.0
    %1044 = vmatpush.msra.mxu0 0.0
    %1045 = vmatpush.msra.mxu0 0.0
    %1046 = vmatpush.msra.mxu0 0.0
    %1047 = vmatpush.msra.mxu0 0.0
    %1048 = vmatpush.msra.mxu0 0.0
    %1049 = vmatpush.msra.mxu0 0.0
    %1050 = vmatpush.msra.mxu0 0.0
    %1051 = vmatpush.msra.mxu0 0.0
    %1052 = vmatpush.msra.mxu0 0.0
    %1053 = vmatpush.msra.mxu0 %v43
    %1054 = vmatpush.msra.mxu0 %v41
    %1055 = vmatpush.msra.mxu0 %v39
    %1056 = vmatpush.msra.mxu0 %v37
    %1057 = vmatmul.f32.gmra.mxu0 %v1033
    %v1058 = vpop.f32.mrf.mxu0
    %v1059 = vadd.f32 %v65, %v1058
    %1060 = vmatmul.f32.gmra.mxu0 %v1036
    %v1061 = vpop.f32.mrf.mxu0
    %v1062 = vadd.f32 %v65, %v1061
    %1063 = vmatmul.f32.gmra.mxu0 %v1039
    %v1064 = vpop.f32.mrf.mxu0
    %v1065 = vadd.f32 %v65, %v1064
    %1066 = vdwg.mxu0
    %vm1067 = vcmp.ne.s32.totalorder %v62, 0
    %1069 = vrot.lane.b32.xlu0 %v1059, 96
    %v1070 = vpop.permute.xlu0 %1069
    %v1071 = vsel %vm106, %v1059, 0
    %v1073 = vsel %vm106, %v1070, 0
    %1075 = vmatpush.xpose.msra.mxu0 0.0
    %1076 = vmatpush.xpose.msra.mxu0 0.0
    %1077 = vmatpush.xpose.msra.mxu0 0.0
    %1078 = vmatpush.xpose.msra.mxu0 0.0
    %1079 = vmatpush.xpose.msra.mxu0 0.0
    %1080 = vmatpush.xpose.msra.mxu0 0.0
    %1081 = vmatpush.xpose.msra.mxu0 0.0
    %1082 = vmatpush.xpose.msra.mxu0 0.0
    %1083 = vmatpush.xpose.msra.mxu0 0.0
    %1084 = vmatpush.xpose.msra.mxu0 0.0
    %1085 = vmatpush.xpose.msra.mxu0 0.0
    %1086 = vmatpush.xpose.msra.mxu0 0.0
    %1087 = vmatpush.xpose.msra.mxu0 0.0
    %1088 = vmatpush.xpose.msra.mxu0 0.0
    %1089 = vmatpush.xpose.msra.mxu0 0.0
    %1090 = vmatpush.xpose.msra.mxu0 %v1073
    %1091 = vmatmul.f32.gmra.mxu0 %v1071
    %v1092 = vpop.f32.mrf.mxu0
    %v1093 = vadd.f32 0.0, %v1092
    %1094 = vdwg.mxu0
    %v1095 = vsel %vm1067, %v1093, -1e+09
    %v1096 = vsel %vm106, %v1095, -inf
    %1097 = vmax.xlane.f32.xlu0 %v1096
    %v1098 = vpop.xlane.xlu0 %1097
    %v1099 = vsub.f32 %v1095, %v1098
    %v1100 = vmul.f32 %v1099, 1.442695
    %v1101 = vpow.pop %v1100
    %v1102 = vsel %vm106, %v1101, 0.0
    %1103 = vadd.xlane.f32.xlu0 %v1102
    %v1104 = vpop.xlane.xlu0 %1103
    %v1105 = vrcp.pop %v1104
    %v1106 = vmul.f32 %v1101, %v1105
    %1107 = vrot.lane.b32.xlu0 %v1059, 64
    %v1108 = vpop.permute.xlu0 %1107
    %v1111 = vsel %vm106, %v1106, 0
    %1113 = vmatpush.msra.mxu0 0.0
    %1114 = vmatpush.msra.mxu0 0.0
    %1115 = vmatpush.msra.mxu0 0.0
    %1116 = vmatpush.msra.mxu0 0.0
    %1117 = vmatpush.msra.mxu0 0.0
    %1118 = vmatpush.msra.mxu0 0.0
    %1119 = vmatpush.msra.mxu0 0.0
    %1120 = vmatpush.msra.mxu0 0.0
    %1121 = vmatpush.msra.mxu0 0.0
    %1122 = vmatpush.msra.mxu0 0.0
    %1123 = vmatpush.msra.mxu0 0.0
    %1124 = vmatpush.msra.mxu0 0.0
    %1125 = vmatpush.msra.mxu0 0.0
    %1126 = vmatpush.msra.mxu0 0.0
    %1127 = vmatpush.msra.mxu0 0.0
    %1128 = vmatpush.msra.mxu0 %v1108
    %1129 = vmatmul.f32.gmra.mxu0 %v1111
    %v1130 = vpop.f32.mrf.mxu0
    %v1131 = vadd.f32 0.0, %v1130
    %1132 = vdwg.mxu0
    %1133 = vst.msk [vmem:[#allocation2] sm:$0xff] %vm106, %v1131
    %1134 = vrot.lane.b32.xlu0 %v1059, 120
    %v1135 = vpop.permute.xlu0 %1134
    %1136 = vrot.lane.b32.xlu0 %v1059, 88
    %v1137 = vpop.permute.xlu0 %1136
    %v1138 = vsel %vm106, %v1135, 0
    %v1140 = vsel %vm106, %v1137, 0
    %1142 = vmatpush.xpose.msra.mxu0 0.0
    %1143 = vmatpush.xpose.msra.mxu0 0.0
    %1144 = vmatpush.xpose.msra.mxu0 0.0
    %1145 = vmatpush.xpose.msra.mxu0 0.0
    %1146 = vmatpush.xpose.msra.mxu0 0.0
    %1147 = vmatpush.xpose.msra.mxu0 0.0
    %1148 = vmatpush.xpose.msra.mxu0 0.0
    %1149 = vmatpush.xpose.msra.mxu0 0.0
    %1150 = vmatpush.xpose.msra.mxu0 0.0
    %1151 = vmatpush.xpose.msra.mxu0 0.0
    %1152 = vmatpush.xpose.msra.mxu0 0.0
    %1153 = vmatpush.xpose.msra.mxu0 0.0
    %1154 = vmatpush.xpose.msra.mxu0 0.0
    %1155 = vmatpush.xpose.msra.mxu0 0.0
    %1156 = vmatpush.xpose.msra.mxu0 0.0
    %1157 = vmatpush.xpose.msra.mxu0 %v1140
    %1158 = vmatmul.f32.gmra.mxu0 %v1138
    %v1159 = vpop.f32.mrf.mxu0
    %v1160 = vadd.f32 0.0, %v1159
    %1161 = vdwg.mxu0
    %v1162 = vsel %vm1067, %v1160, -1e+09
    %v1163 = vsel %vm106, %v1162, -inf
    %1164 = vmax.xlane.f32.xlu0 %v1163
    %v1165 = vpop.xlane.xlu0 %1164
    %v1166 = vsub.f32 %v1162, %v1165
    %v1167 = vmul.f32 %v1166, 1.442695
    %v1168 = vpow.pop %v1167
    %v1169 = vsel %vm106, %v1168, 0.0
    %1170 = vadd.xlane.f32.xlu0 %v1169
    %v1171 = vpop.xlane.xlu0 %1170
    %v1172 = vrcp.pop %v1171
    %v1173 = vmul.f32 %v1168, %v1172
    %1174 = vrot.lane.b32.xlu0 %v1059, 56
    %v1175 = vpop.permute.xlu0 %1174
    %v1178 = vsel %vm106, %v1173, 0
    %1180 = vmatpush.msra.mxu0 0.0
    %1181 = vmatpush.msra.mxu0 0.0
    %1182 = vmatpush.msra.mxu0 0.0
    %1183 = vmatpush.msra.mxu0 0.0
    %1184 = vmatpush.msra.mxu0 0.0
    %1185 = vmatpush.msra.mxu0 0.0
    %1186 = vmatpush.msra.mxu0 0.0
    %1187 = vmatpush.msra.mxu0 0.0
    %1188 = vmatpush.msra.mxu0 0.0
    %1189 = vmatpush.msra.mxu0 0.0
    %1190 = vmatpush.msra.mxu0 0.0
    %1191 = vmatpush.msra.mxu0 0.0
    %1192 = vmatpush.msra.mxu0 0.0
    %1193 = vmatpush.msra.mxu0 0.0
    %1194 = vmatpush.msra.mxu0 0.0
    %1195 = vmatpush.msra.mxu0 %v1175
    %1196 = vmatmul.f32.gmra.mxu0 %v1178
    %v1197 = vpop.f32.mrf.mxu0
    %v1198 = vadd.f32 0.0, %v1197
    %1199 = vdwg.mxu0
    %1201 = vrot.lane.b32.xlu0 %v1198, 8
    %v1202 = vpop.permute.xlu0 %1201
    %1204 = vst.msk [vmem:[#allocation2] sm:$0xff] %vm240, %v1202
    %1205 = vrot.lane.b32.xlu0 %v1059, 112
    %v1206 = vpop.permute.xlu0 %1205
    %1207 = vrot.lane.b32.xlu0 %v1059, 80
    %v1208 = vpop.permute.xlu0 %1207
    %v1209 = vsel %vm106, %v1206, 0
    %v1211 = vsel %vm106, %v1208, 0
    %1213 = vmatpush.xpose.msra.mxu0 0.0
    %1214 = vmatpush.xpose.msra.mxu0 0.0
    %1215 = vmatpush.xpose.msra.mxu0 0.0
    %1216 = vmatpush.xpose.msra.mxu0 0.0
    %1217 = vmatpush.xpose.msra.mxu0 0.0
    %1218 = vmatpush.xpose.msra.mxu0 0.0
    %1219 = vmatpush.xpose.msra.mxu0 0.0
    %1220 = vmatpush.xpose.msra.mxu0 0.0
    %1221 = vmatpush.xpose.msra.mxu0 0.0
    %1222 = vmatpush.xpose.msra.mxu0 0.0
    %1223 = vmatpush.xpose.msra.mxu0 0.0
    %1224 = vmatpush.xpose.msra.mxu0 0.0
    %1225 = vmatpush.xpose.msra.mxu0 0.0
    %1226 = vmatpush.xpose.msra.mxu0 0.0
    %1227 = vmatpush.xpose.msra.mxu0 0.0
    %1228 = vmatpush.xpose.msra.mxu0 %v1211
    %1229 = vmatmul.f32.gmra.mxu0 %v1209
    %v1230 = vpop.f32.mrf.mxu0
    %v1231 = vadd.f32 0.0, %v1230
    %1232 = vdwg.mxu0
    %v1233 = vsel %vm1067, %v1231, -1e+09
    %v1234 = vsel %vm106, %v1233, -inf
    %1235 = vmax.xlane.f32.xlu0 %v1234
    %v1236 = vpop.xlane.xlu0 %1235
    %v1237 = vsub.f32 %v1233, %v1236
    %v1238 = vmul.f32 %v1237, 1.442695
    %v1239 = vpow.pop %v1238
    %v1240 = vsel %vm106, %v1239, 0.0
    %1241 = vadd.xlane.f32.xlu0 %v1240
    %v1242 = vpop.xlane.xlu0 %1241
    %v1243 = vrcp.pop %v1242
    %v1244 = vmul.f32 %v1239, %v1243
    %1245 = vrot.lane.b32.xlu0 %v1059, 48
    %v1246 = vpop.permute.xlu0 %1245
    %v1249 = vsel %vm106, %v1244, 0
    %1251 = vmatpush.msra.mxu0 0.0
    %1252 = vmatpush.msra.mxu0 0.0
    %1253 = vmatpush.msra.mxu0 0.0
    %1254 = vmatpush.msra.mxu0 0.0
    %1255 = vmatpush.msra.mxu0 0.0
    %1256 = vmatpush.msra.mxu0 0.0
    %1257 = vmatpush.msra.mxu0 0.0
    %1258 = vmatpush.msra.mxu0 0.0
    %1259 = vmatpush.msra.mxu0 0.0
    %1260 = vmatpush.msra.mxu0 0.0
    %1261 = vmatpush.msra.mxu0 0.0
    %1262 = vmatpush.msra.mxu0 0.0
    %1263 = vmatpush.msra.mxu0 0.0
    %1264 = vmatpush.msra.mxu0 0.0
    %1265 = vmatpush.msra.mxu0 0.0
    %1266 = vmatpush.msra.mxu0 %v1246
    %1267 = vmatmul.f32.gmra.mxu0 %v1249
    %v1268 = vpop.f32.mrf.mxu0
    %v1269 = vadd.f32 0.0, %v1268
    %1270 = vdwg.mxu0
    %1272 = vrot.lane.b32.xlu0 %v1269, 16
    %v1273 = vpop.permute.xlu0 %1272
    %1275 = vst.msk [vmem:[#allocation2] sm:$0xff] %vm312, %v1273
    %1276 = vrot.lane.b32.xlu0 %v1059, 104
    %v1277 = vpop.permute.xlu0 %1276
    %1278 = vrot.lane.b32.xlu0 %v1059, 72
    %v1279 = vpop.permute.xlu0 %1278
    %v1280 = vsel %vm106, %v1277, 0
    %v1282 = vsel %vm106, %v1279, 0
    %1284 = vmatpush.xpose.msra.mxu0 0.0
    %1285 = vmatpush.xpose.msra.mxu0 0.0
    %1286 = vmatpush.xpose.msra.mxu0 0.0
    %1287 = vmatpush.xpose.msra.mxu0 0.0
    %1288 = vmatpush.xpose.msra.mxu0 0.0
    %1289 = vmatpush.xpose.msra.mxu0 0.0
    %1290 = vmatpush.xpose.msra.mxu0 0.0
    %1291 = vmatpush.xpose.msra.mxu0 0.0
    %1292 = vmatpush.xpose.msra.mxu0 0.0
    %1293 = vmatpush.xpose.msra.mxu0 0.0
    %1294 = vmatpush.xpose.msra.mxu0 0.0
    %1295 = vmatpush.xpose.msra.mxu0 0.0
    %1296 = vmatpush.xpose.msra.mxu0 0.0
    %1297 = vmatpush.xpose.msra.mxu0 0.0
    %1298 = vmatpush.xpose.msra.mxu0 0.0
    %1299 = vmatpush.xpose.msra.mxu0 %v1282
    %1300 = vmatmul.f32.gmra.mxu0 %v1280
    %v1301 = vpop.f32.mrf.mxu0
    %v1302 = vadd.f32 0.0, %v1301
    %1303 = vdwg.mxu0
    %v1304 = vsel %vm1067, %v1302, -1e+09
    %v1305 = vsel %vm106, %v1304, -inf
    %1306 = vmax.xlane.f32.xlu0 %v1305
    %v1307 = vpop.xlane.xlu0 %1306
    %v1308 = vsub.f32 %v1304, %v1307
    %v1309 = vmul.f32 %v1308, 1.442695
    %v1310 = vpow.pop %v1309
    %v1311 = vsel %vm106, %v1310, 0.0
    %1312 = vadd.xlane.f32.xlu0 %v1311
    %v1313 = vpop.xlane.xlu0 %1312
    %v1314 = vrcp.pop %v1313
    %v1315 = vmul.f32 %v1310, %v1314
    %1316 = vrot.lane.b32.xlu0 %v1059, 40
    %v1317 = vpop.permute.xlu0 %1316
    %v1320 = vsel %vm106, %v1315, 0
    %1322 = vmatpush.msra.mxu0 0.0
    %1323 = vmatpush.msra.mxu0 0.0
    %1324 = vmatpush.msra.mxu0 0.0
    %1325 = vmatpush.msra.mxu0 0.0
    %1326 = vmatpush.msra.mxu0 0.0
    %1327 = vmatpush.msra.mxu0 0.0
    %1328 = vmatpush.msra.mxu0 0.0
    %1329 = vmatpush.msra.mxu0 0.0
    %1330 = vmatpush.msra.mxu0 0.0
    %1331 = vmatpush.msra.mxu0 0.0
    %1332 = vmatpush.msra.mxu0 0.0
    %1333 = vmatpush.msra.mxu0 0.0
    %1334 = vmatpush.msra.mxu0 0.0
    %1335 = vmatpush.msra.mxu0 0.0
    %1336 = vmatpush.msra.mxu0 0.0
    %1337 = vmatpush.msra.mxu0 %v1317
    %1338 = vmatmul.f32.gmra.mxu0 %v1320
    %v1339 = vpop.f32.mrf.mxu0
    %v1340 = vadd.f32 0.0, %v1339
    %1341 = vdwg.mxu0
    %1343 = vrot.lane.b32.xlu0 %v1340, 24
    %v1344 = vpop.permute.xlu0 %1343
    %1346 = vst.msk [vmem:[#allocation2] sm:$0xff] %vm384, %v1344
    %v1347 = vld [vmem:[#allocation2] sm:$0xff]
    %v1349 = vsel %vm66, %v1347, 0
    %1351 = vmatpush.msra.mxu0 0.0
    %1352 = vmatpush.msra.mxu0 0.0
    %1353 = vmatpush.msra.mxu0 0.0
    %1354 = vmatpush.msra.mxu0 0.0
    %1355 = vmatpush.msra.mxu0 0.0
    %1356 = vmatpush.msra.mxu0 0.0
    %1357 = vmatpush.msra.mxu0 0.0
    %1358 = vmatpush.msra.mxu0 0.0
    %1359 = vmatpush.msra.mxu0 0.0
    %1360 = vmatpush.msra.mxu0 0.0
    %1361 = vmatpush.msra.mxu0 0.0
    %1362 = vmatpush.msra.mxu0 0.0
    %1363 = vmatpush.msra.mxu0 %v398
    %1364 = vmatpush.msra.mxu0 %v396
    %1365 = vmatpush.msra.mxu0 %v394
    %1366 = vmatpush.msra.mxu0 %v392
    %1367 = vmatmul.f32.gmra.mxu0 %v1349
    %v1368 = vpop.f32.mrf.mxu0
    %v1369 = vadd.f32 %v405, %v1368
    %1370 = vdwg.mxu0
    %v1371 = vadd.f32 %v56, %v1369
    %v1372 = vsel %vm66, %v1371, 0.0
    %1373 = vadd.xlane.f32.xlu0 %v1372
    %v1374 = vpop.xlane.xlu0 %1373
    %v1375 = vmul.f32 %v1374, %v440
    %v1376 = vsub.f32 %v1371, %v1375
    %v1377 = vmul.f32 %v1376, %v1376
    %v1378 = vsel %vm66, %v1377, 0.0
    %1379 = vadd.xlane.f32.xlu0 %v1378
    %v1380 = vpop.xlane.xlu0 %1379
    %v1381 = vmul.f32 %v1380, 0.032258064
    %v1382 = vrsqrt.pop %v1381
    %v1383 = vmul.f32 %v1382, %v1381
    %v1384 = vmul.f32 %v1383, %v1382
    %v1385 = vmul.f32 0.5, %v1384
    %v1386 = vsub.f32 1.5, %v1385
    %v1387 = vmul.f32 %v1382, %v1386
    %v1388 = vmul.f32 %v1381, %v1387
    %vm1389 = vcmp.eq.f32.partialorder %v1381, inf
    %v1390 = vsel %vm1389, %v1381, %v1388
    %vm1391 = vcmp.eq.f32.partialorder %v1381, 0.0
    %v1392 = vand.u32 %v1381, 2147483648
    %v1393 = vsel %vm1391, %v1392, %v1390
    %v1394 = vadd.f32 %v1393, 1e-06
    %v1395 = vrcp.pop %v1394
    %v1396 = vmul.f32 %v1394, %v1395
    %v1397 = vsub.f32 1.0, %v1396
    %v1398 = vmul.f32 %v1395, %v1397
    %v1399 = vadd.f32 %v1395, %v1398
    %vm1400 = vweird.f32 %v1394
    %vm1401 = vweird.f32 %v1395
    %vm1402 = vmor %vm1400, %vm1401
    %v1403 = vsel %vm1402, %v1395, %v1399
    %v1404 = vand.u32 2147483647, %v1394
    %vm1405 = vcmp.eq.f32.partialorder %v1404, 8.507059e+37
    %v1406 = vand.u32 %v1394, 2147483648
    %v1407 = vor.u32 1.1754944e-38, %v1406
    %v1408 = vsel %vm1405, %v1407, %v1403
    %v1409 = vmul.f32 %v1376, %v1408
    %1411 = vrot.lane.b32.xlu0 %v1409, 96
    %v1412 = vpop.permute.xlu0 %1411
    %v1414 = vmul.f32 %v476, %v1412
    %v1415 = vadd.f32 %v1414, %v485
    %1417 = vrot.lane.b32.xlu0 %v1415, 32
    %v1418 = vpop.permute.xlu0 %1417
    %v1419 = vsel %vm66, %v1418, 0
    %1421 = vmatpush.msra.mxu0 0.0
    %1422 = vmatpush.msra.mxu0 0.0
    %1423 = vmatpush.msra.mxu0 0.0
    %1424 = vmatpush.msra.mxu0 0.0
    %1425 = vmatpush.msra.mxu0 0.0
    %1426 = vmatpush.msra.mxu0 0.0
    %1427 = vmatpush.msra.mxu0 0.0
    %1428 = vmatpush.msra.mxu0 0.0
    %1429 = vmatpush.msra.mxu0 0.0
    %1430 = vmatpush.msra.mxu0 0.0
    %1431 = vmatpush.msra.mxu0 0.0
    %1432 = vmatpush.msra.mxu0 0.0
    %1433 = vmatpush.msra.mxu0 %v43
    %1434 = vmatpush.msra.mxu0 %v41
    %1435 = vmatpush.msra.mxu0 %v39
    %1436 = vmatpush.msra.mxu0 %v37
    %1437 = vmatmul.f32.gmra.mxu0 %v1419
    %v1438 = vpop.f32.mrf.mxu0
    %v1439 = vadd.f32 %v65, %v1438
    %1440 = vdwg.mxu0
    %v1441 = vperm.slane %v64, 0
    %vm1442 = vcmp.ne.s32.totalorder %v1441, 0
    %1445 = vrot.lane.b32.xlu0 %v1062, 96
    %v1446 = vpop.permute.xlu0 %1445
    %1447 = vrot.lane.b32.xlu0 %v1065, 96
    %v1448 = vpop.permute.xlu0 %1447
    %v1450 = vsel %vm106, %v1439, 0
    %v1452 = vsel %vm106, %v1446, 0
    %v1454 = vsel %vm106, %v1448, 0
    %1456 = vmatpush.xpose.msra.mxu0 0.0
    %1457 = vmatpush.xpose.msra.mxu0 0.0
    %1458 = vmatpush.xpose.msra.mxu0 0.0
    %1459 = vmatpush.xpose.msra.mxu0 0.0
    %1460 = vmatpush.xpose.msra.mxu0 0.0
    %1461 = vmatpush.xpose.msra.mxu0 0.0
    %1462 = vmatpush.xpose.msra.mxu0 0.0
    %1463 = vmatpush.xpose.msra.mxu0 0.0
    %1464 = vmatpush.xpose.msra.mxu0 0.0
    %1465 = vmatpush.xpose.msra.mxu0 0.0
    %1466 = vmatpush.xpose.msra.mxu0 0.0
    %1467 = vmatpush.xpose.msra.mxu0 0.0
    %1468 = vmatpush.xpose.msra.mxu0 0.0
    %1469 = vmatpush.xpose.msra.mxu0 0.0
    %1470 = vmatpush.xpose.msra.mxu0 %v1454
    %1471 = vmatpush.xpose.msra.mxu0 %v1452
    %1472 = vmatmul.f32.gmra.mxu0 %v1450
    %v1473 = vpop.f32.mrf.mxu0
    %v1474 = vadd.f32 0.0, %v1473
    %1475 = vdwg.mxu0
    %v1476 = vsel %vm1442, %v1474, -1e+09
    %v1477 = vsel %vm549, %v1476, -inf
    %1478 = vmax.xlane.f32.xlu0 %v1477
    %v1479 = vpop.xlane.xlu0 %1478
    %v1480 = vsub.f32 %v1476, %v1479
    %v1481 = vmul.f32 %v1480, 1.442695
    %v1482 = vpow.pop %v1481
    %v1483 = vsel %vm549, %v1482, 0.0
    %1484 = vadd.xlane.f32.xlu0 %v1483
    %v1485 = vpop.xlane.xlu0 %1484
    %v1486 = vrcp.pop %v1485
    %v1487 = vmul.f32 %v1482, %v1486
    %1488 = vrot.lane.b32.xlu0 %v1062, 64
    %v1489 = vpop.permute.xlu0 %1488
    %1490 = vrot.lane.b32.xlu0 %v1065, 64
    %v1491 = vpop.permute.xlu0 %1490
    %v1494 = vsel %vm549, %v1487, 0
    %v1496 = vsel %vm569, %v1491, 0
    %1498 = vmatpush.msra.mxu0 0.0
    %1499 = vmatpush.msra.mxu0 0.0
    %1500 = vmatpush.msra.mxu0 0.0
    %1501 = vmatpush.msra.mxu0 0.0
    %1502 = vmatpush.msra.mxu0 0.0
    %1503 = vmatpush.msra.mxu0 0.0
    %1504 = vmatpush.msra.mxu0 0.0
    %1505 = vmatpush.msra.mxu0 0.0
    %1506 = vmatpush.msra.mxu0 0.0
    %1507 = vmatpush.msra.mxu0 0.0
    %1508 = vmatpush.msra.mxu0 0.0
    %1509 = vmatpush.msra.mxu0 0.0
    %1510 = vmatpush.msra.mxu0 0.0
    %1511 = vmatpush.msra.mxu0 0.0
    %1512 = vmatpush.msra.mxu0 %v1496
    %1513 = vmatpush.msra.mxu0 %v1489
    %1514 = vmatmul.f32.gmra.mxu0 %v1494
    %v1515 = vpop.f32.mrf.mxu0
    %v1516 = vadd.f32 0.0, %v1515
    %1517 = vdwg.mxu0
    %1518 = vst.msk [vmem:[#allocation2] sm:$0xff] %vm106, %v1516
    %1519 = vrot.lane.b32.xlu0 %v1439, 120
    %v1520 = vpop.permute.xlu0 %1519
    %1521 = vrot.lane.b32.xlu0 %v1062, 88
    %v1522 = vpop.permute.xlu0 %1521
    %1523 = vrot.lane.b32.xlu0 %v1065, 88
    %v1524 = vpop.permute.xlu0 %1523
    %v1525 = vsel %vm106, %v1520, 0
    %v1527 = vsel %vm106, %v1522, 0
    %v1529 = vsel %vm106, %v1524, 0
    %1531 = vmatpush.xpose.msra.mxu0 0.0
    %1532 = vmatpush.xpose.msra.mxu0 0.0
    %1533 = vmatpush.xpose.msra.mxu0 0.0
    %1534 = vmatpush.xpose.msra.mxu0 0.0
    %1535 = vmatpush.xpose.msra.mxu0 0.0
    %1536 = vmatpush.xpose.msra.mxu0 0.0
    %1537 = vmatpush.xpose.msra.mxu0 0.0
    %1538 = vmatpush.xpose.msra.mxu0 0.0
    %1539 = vmatpush.xpose.msra.mxu0 0.0
    %1540 = vmatpush.xpose.msra.mxu0 0.0
    %1541 = vmatpush.xpose.msra.mxu0 0.0
    %1542 = vmatpush.xpose.msra.mxu0 0.0
    %1543 = vmatpush.xpose.msra.mxu0 0.0
    %1544 = vmatpush.xpose.msra.mxu0 0.0
    %1545 = vmatpush.xpose.msra.mxu0 %v1529
    %1546 = vmatpush.xpose.msra.mxu0 %v1527
    %1547 = vmatmul.f32.gmra.mxu0 %v1525
    %v1548 = vpop.f32.mrf.mxu0
    %v1549 = vadd.f32 0.0, %v1548
    %1550 = vdwg.mxu0
    %v1551 = vsel %vm1442, %v1549, -1e+09
    %v1552 = vsel %vm549, %v1551, -inf
    %1553 = vmax.xlane.f32.xlu0 %v1552
    %v1554 = vpop.xlane.xlu0 %1553
    %v1555 = vsub.f32 %v1551, %v1554
    %v1556 = vmul.f32 %v1555, 1.442695
    %v1557 = vpow.pop %v1556
    %v1558 = vsel %vm549, %v1557, 0.0
    %1559 = vadd.xlane.f32.xlu0 %v1558
    %v1560 = vpop.xlane.xlu0 %1559
    %v1561 = vrcp.pop %v1560
    %v1562 = vmul.f32 %v1557, %v1561
    %1563 = vrot.lane.b32.xlu0 %v1062, 56
    %v1564 = vpop.permute.xlu0 %1563
    %1565 = vrot.lane.b32.xlu0 %v1065, 56
    %v1566 = vpop.permute.xlu0 %1565
    %v1569 = vsel %vm549, %v1562, 0
    %v1571 = vsel %vm569, %v1566, 0
    %1573 = vmatpush.msra.mxu0 0.0
    %1574 = vmatpush.msra.mxu0 0.0
    %1575 = vmatpush.msra.mxu0 0.0
    %1576 = vmatpush.msra.mxu0 0.0
    %1577 = vmatpush.msra.mxu0 0.0
    %1578 = vmatpush.msra.mxu0 0.0
    %1579 = vmatpush.msra.mxu0 0.0
    %1580 = vmatpush.msra.mxu0 0.0
    %1581 = vmatpush.msra.mxu0 0.0
    %1582 = vmatpush.msra.mxu0 0.0
    %1583 = vmatpush.msra.mxu0 0.0
    %1584 = vmatpush.msra.mxu0 0.0
    %1585 = vmatpush.msra.mxu0 0.0
    %1586 = vmatpush.msra.mxu0 0.0
    %1587 = vmatpush.msra.mxu0 %v1571
    %1588 = vmatpush.msra.mxu0 %v1564
    %1589 = vmatmul.f32.gmra.mxu0 %v1569
    %v1590 = vpop.f32.mrf.mxu0
    %v1591 = vadd.f32 0.0, %v1590
    %1592 = vdwg.mxu0
    %1594 = vrot.lane.b32.xlu0 %v1591, 8
    %v1595 = vpop.permute.xlu0 %1594
    %1597 = vst.msk [vmem:[#allocation2] sm:$0xff] %vm240, %v1595
    %1598 = vrot.lane.b32.xlu0 %v1439, 112
    %v1599 = vpop.permute.xlu0 %1598
    %1600 = vrot.lane.b32.xlu0 %v1062, 80
    %v1601 = vpop.permute.xlu0 %1600
    %1602 = vrot.lane.b32.xlu0 %v1065, 80
    %v1603 = vpop.permute.xlu0 %1602
    %v1604 = vsel %vm106, %v1599, 0
    %v1606 = vsel %vm106, %v1601, 0
    %v1608 = vsel %vm106, %v1603, 0
    %1610 = vmatpush.xpose.msra.mxu0 0.0
    %1611 = vmatpush.xpose.msra.mxu0 0.0
    %1612 = vmatpush.xpose.msra.mxu0 0.0
    %1613 = vmatpush.xpose.msra.mxu0 0.0
    %1614 = vmatpush.xpose.msra.mxu0 0.0
    %1615 = vmatpush.xpose.msra.mxu0 0.0
    %1616 = vmatpush.xpose.msra.mxu0 0.0
    %1617 = vmatpush.xpose.msra.mxu0 0.0
    %1618 = vmatpush.xpose.msra.mxu0 0.0
    %1619 = vmatpush.xpose.msra.mxu0 0.0
    %1620 = vmatpush.xpose.msra.mxu0 0.0
    %1621 = vmatpush.xpose.msra.mxu0 0.0
    %1622 = vmatpush.xpose.msra.mxu0 0.0
    %1623 = vmatpush.xpose.msra.mxu0 0.0
    %1624 = vmatpush.xpose.msra.mxu0 %v1608
    %1625 = vmatpush.xpose.msra.mxu0 %v1606
    %1626 = vmatmul.f32.gmra.mxu0 %v1604
    %v1627 = vpop.f32.mrf.mxu0
    %v1628 = vadd.f32 0.0, %v1627
    %1629 = vdwg.mxu0
    %v1630 = vsel %vm1442, %v1628, -1e+09
    %v1631 = vsel %vm549, %v1630, -inf
    %1632 = vmax.xlane.f32.xlu0 %v1631
    %v1633 = vpop.xlane.xlu0 %1632
    %v1634 = vsub.f32 %v1630, %v1633
    %v1635 = vmul.f32 %v1634, 1.442695
    %v1636 = vpow.pop %v1635
    %v1637 = vsel %vm549, %v1636, 0.0
    %1638 = vadd.xlane.f32.xlu0 %v1637
    %v1639 = vpop.xlane.xlu0 %1638
    %v1640 = vrcp.pop %v1639
    %v1641 = vmul.f32 %v1636, %v1640
    %1642 = vrot.lane.b32.xlu0 %v1062, 48
    %v1643 = vpop.permute.xlu0 %1642
    %1644 = vrot.lane.b32.xlu0 %v1065, 48
    %v1645 = vpop.permute.xlu0 %1644
    %v1648 = vsel %vm549, %v1641, 0
    %v1650 = vsel %vm569, %v1645, 0
    %1652 = vmatpush.msra.mxu0 0.0
    %1653 = vmatpush.msra.mxu0 0.0
    %1654 = vmatpush.msra.mxu0 0.0
    %1655 = vmatpush.msra.mxu0 0.0
    %1656 = vmatpush.msra.mxu0 0.0
    %1657 = vmatpush.msra.mxu0 0.0
    %1658 = vmatpush.msra.mxu0 0.0
    %1659 = vmatpush.msra.mxu0 0.0
    %1660 = vmatpush.msra.mxu0 0.0
    %1661 = vmatpush.msra.mxu0 0.0
    %1662 = vmatpush.msra.mxu0 0.0
    %1663 = vmatpush.msra.mxu0 0.0
    %1664 = vmatpush.msra.mxu0 0.0
    %1665 = vmatpush.msra.mxu0 0.0
    %1666 = vmatpush.msra.mxu0 %v1650
    %1667 = vmatpush.msra.mxu0 %v1643
    %1668 = vmatmul.f32.gmra.mxu0 %v1648
    %v1669 = vpop.f32.mrf.mxu0
    %v1670 = vadd.f32 0.0, %v1669
    %1671 = vdwg.mxu0
    %1673 = vrot.lane.b32.xlu0 %v1670, 16
    %v1674 = vpop.permute.xlu0 %1673
    %1676 = vst.msk [vmem:[#allocation2] sm:$0xff] %vm312, %v1674
    %1677 = vrot.lane.b32.xlu0 %v1439, 104
    %v1678 = vpop.permute.xlu0 %1677
    %1679 = vrot.lane.b32.xlu0 %v1062, 72
    %v1680 = vpop.permute.xlu0 %1679
    %1681 = vrot.lane.b32.xlu0 %v1065, 72
    %v1682 = vpop.permute.xlu0 %1681
    %v1683 = vsel %vm106, %v1678, 0
    %v1685 = vsel %vm106, %v1680, 0
    %v1687 = vsel %vm106, %v1682, 0
    %1689 = vmatpush.xpose.msra.mxu0 0.0
    %1690 = vmatpush.xpose.msra.mxu0 0.0
    %1691 = vmatpush.xpose.msra.mxu0 0.0
    %1692 = vmatpush.xpose.msra.mxu0 0.0
    %1693 = vmatpush.xpose.msra.mxu0 0.0
    %1694 = vmatpush.xpose.msra.mxu0 0.0
    %1695 = vmatpush.xpose.msra.mxu0 0.0
    %1696 = vmatpush.xpose.msra.mxu0 0.0
    %1697 = vmatpush.xpose.msra.mxu0 0.0
    %1698 = vmatpush.xpose.msra.mxu0 0.0
    %1699 = vmatpush.xpose.msra.mxu0 0.0
    %1700 = vmatpush.xpose.msra.mxu0 0.0
    %1701 = vmatpush.xpose.msra.mxu0 0.0
    %1702 = vmatpush.xpose.msra.mxu0 0.0
    %1703 = vmatpush.xpose.msra.mxu0 %v1687
    %1704 = vmatpush.xpose.msra.mxu0 %v1685
    %1705 = vmatmul.f32.gmra.mxu0 %v1683
    %v1706 = vpop.f32.mrf.mxu0
    %v1707 = vadd.f32 0.0, %v1706
    %1708 = vdwg.mxu0
    %v1709 = vsel %vm1442, %v1707, -1e+09
    %v1710 = vsel %vm549, %v1709, -inf
    %1711 = vmax.xlane.f32.xlu0 %v1710
    %v1712 = vpop.xlane.xlu0 %1711
    %v1713 = vsub.f32 %v1709, %v1712
    %v1714 = vmul.f32 %v1713, 1.442695
    %v1715 = vpow.pop %v1714
    %v1716 = vsel %vm549, %v1715, 0.0
    %1717 = vadd.xlane.f32.xlu0 %v1716
    %v1718 = vpop.xlane.xlu0 %1717
    %v1719 = vrcp.pop %v1718
    %v1720 = vmul.f32 %v1715, %v1719
    %1721 = vrot.lane.b32.xlu0 %v1062, 40
    %v1722 = vpop.permute.xlu0 %1721
    %1723 = vrot.lane.b32.xlu0 %v1065, 40
    %v1724 = vpop.permute.xlu0 %1723
    %v1727 = vsel %vm549, %v1720, 0
    %v1729 = vsel %vm569, %v1724, 0
    %1731 = vmatpush.msra.mxu0 0.0
    %1732 = vmatpush.msra.mxu0 0.0
    %1733 = vmatpush.msra.mxu0 0.0
    %1734 = vmatpush.msra.mxu0 0.0
    %1735 = vmatpush.msra.mxu0 0.0
    %1736 = vmatpush.msra.mxu0 0.0
    %1737 = vmatpush.msra.mxu0 0.0
    %1738 = vmatpush.msra.mxu0 0.0
    %1739 = vmatpush.msra.mxu0 0.0
    %1740 = vmatpush.msra.mxu0 0.0
    %1741 = vmatpush.msra.mxu0 0.0
    %1742 = vmatpush.msra.mxu0 0.0
    %1743 = vmatpush.msra.mxu0 0.0
    %1744 = vmatpush.msra.mxu0 0.0
    %1745 = vmatpush.msra.mxu0 %v1729
    %1746 = vmatpush.msra.mxu0 %v1722
    %1747 = vmatmul.f32.gmra.mxu0 %v1727
    %v1748 = vpop.f32.mrf.mxu0
    %v1749 = vadd.f32 0.0, %v1748
    %1750 = vdwg.mxu0
    %1752 = vrot.lane.b32.xlu0 %v1749, 24
    %v1753 = vpop.permute.xlu0 %1752
    %1755 = vst.msk [vmem:[#allocation2] sm:$0xff] %vm384, %v1753
    %v1756 = vld [vmem:[#allocation2] sm:$0xff]
    %v1758 = vsel %vm66, %v1756, 0
    %1760 = vmatpush.msra.mxu0 0.0
    %1761 = vmatpush.msra.mxu0 0.0
    %1762 = vmatpush.msra.mxu0 0.0
    %1763 = vmatpush.msra.mxu0 0.0
    %1764 = vmatpush.msra.mxu0 0.0
    %1765 = vmatpush.msra.mxu0 0.0
    %1766 = vmatpush.msra.mxu0 0.0
    %1767 = vmatpush.msra.mxu0 0.0
    %1768 = vmatpush.msra.mxu0 0.0
    %1769 = vmatpush.msra.mxu0 0.0
    %1770 = vmatpush.msra.mxu0 0.0
    %1771 = vmatpush.msra.mxu0 0.0
    %1772 = vmatpush.msra.mxu0 %v398
    %1773 = vmatpush.msra.mxu0 %v396
    %1774 = vmatpush.msra.mxu0 %v394
    %1775 = vmatpush.msra.mxu0 %v392
    %1776 = vmatmul.f32.gmra.mxu0 %v1758
    %v1777 = vpop.f32.mrf.mxu0
    %v1778 = vadd.f32 %v405, %v1777
    %1779 = vdwg.mxu0
    %1781 = vrot.lane.b32.xlu0 %v1778, 96
    %v1782 = vpop.permute.xlu0 %1781
    %v1784 = vadd.f32 %v1415, %v1782
    %1786 = vrot.lane.b32.xlu0 %v1784, 32
    %v1787 = vpop.permute.xlu0 %1786
    %v1789 = vsel %vm66, %v1787, 0.0
    %1790 = vadd.xlane.f32.xlu0 %v1789
    %v1791 = vpop.xlane.xlu0 %1790
    %v1792 = vmul.f32 %v1791, %v440
    %v1793 = vsub.f32 %v1784, %v1792
    %v1794 = vmul.f32 %v1793, %v1793
    %1796 = vrot.lane.b32.xlu0 %v1794, 32
    %v1797 = vpop.permute.xlu0 %1796
    %v1799 = vsel %vm66, %v1797, 0.0
    %1800 = vadd.xlane.f32.xlu0 %v1799
    %v1801 = vpop.xlane.xlu0 %1800
    %v1802 = vmul.f32 %v1801, 0.032258064
    %v1803 = vrsqrt.pop %v1802
    %v1804 = vmul.f32 %v1803, %v1802
    %v1805 = vmul.f32 %v1804, %v1803
    %v1806 = vmul.f32 0.5, %v1805
    %v1807 = vsub.f32 1.5, %v1806
    %v1808 = vmul.f32 %v1803, %v1807
    %v1809 = vmul.f32 %v1802, %v1808
    %vm1810 = vcmp.eq.f32.partialorder %v1802, inf
    %v1811 = vsel %vm1810, %v1802, %v1809
    %vm1812 = vcmp.eq.f32.partialorder %v1802, 0.0
    %v1813 = vand.u32 %v1802, 2147483648
    %v1814 = vsel %vm1812, %v1813, %v1811
    %v1815 = vadd.f32 %v1814, 1e-06
    %v1816 = vrcp.pop %v1815
    %v1817 = vmul.f32 %v1815, %v1816
    %v1818 = vsub.f32 1.0, %v1817
    %v1819 = vmul.f32 %v1816, %v1818
    %v1820 = vadd.f32 %v1816, %v1819
    %vm1821 = vweird.f32 %v1815
    %vm1822 = vweird.f32 %v1816
    %vm1823 = vmor %vm1821, %vm1822
    %v1824 = vsel %vm1823, %v1816, %v1820
    %v1825 = vand.u32 2147483647, %v1815
    %vm1826 = vcmp.eq.f32.partialorder %v1825, 8.507059e+37
    %v1827 = vand.u32 %v1815, 2147483648
    %v1828 = vor.u32 1.1754944e-38, %v1827
    %v1829 = vsel %vm1826, %v1828, %v1824
    %v1830 = vmul.f32 %v1793, %v1829
    %1832 = vrot.lane.b32.xlu0 %v1830, 64
    %v1833 = vpop.permute.xlu0 %1832
    %v1835 = vmul.f32 %v482, %v1833
    %v1836 = vadd.f32 %v1835, %v485
    %1838 = vrot.lane.b32.xlu0 %v1836, 96
    %v1839 = vpop.permute.xlu0 %1838
    %v1840 = vsel %vm66, %v1839, 0
    %1842 = vmatpush.msra.mxu0 0.0
    %1843 = vmatpush.msra.mxu0 0.0
    %1844 = vmatpush.msra.mxu0 0.0
    %1845 = vmatpush.msra.mxu0 0.0
    %1846 = vmatpush.msra.mxu0 0.0
    %1847 = vmatpush.msra.mxu0 0.0
    %1848 = vmatpush.msra.mxu0 0.0
    %1849 = vmatpush.msra.mxu0 0.0
    %1850 = vmatpush.msra.mxu0 0.0
    %1851 = vmatpush.msra.mxu0 0.0
    %1852 = vmatpush.msra.mxu0 0.0
    %1853 = vmatpush.msra.mxu0 0.0
    %1854 = vmatpush.msra.mxu0 %v44
    %1855 = vmatpush.msra.mxu0 %v42
    %1856 = vmatpush.msra.mxu0 %v40
    %1857 = vmatpush.msra.mxu0 %v38
    %1858 = vmatmul.f32.gmra.mxu0 %v1840
    %v1859 = vpop.f32.mrf.mxu0
    %v1860 = vadd.f32 %v476, %v1859
    %1861 = vdwg.mxu0
    %v1862 = vmax.f32 %v1860, 0.0
    %v1864 = vsel %vm941, %v1862, 0
    %1866 = vmatpush.msra.mxu0 0.0
    %1867 = vmatpush.msra.mxu0 0.0
    %1868 = vmatpush.msra.mxu0 0.0
    %1869 = vmatpush.msra.mxu0 0.0
    %1870 = vmatpush.msra.mxu0 0.0
    %1871 = vmatpush.msra.mxu0 0.0
    %1872 = vmatpush.msra.mxu0 0.0
    %1873 = vmatpush.msra.mxu0 0.0
    %1874 = vmatpush.msra.mxu0 %v52
    %1875 = vmatpush.msra.mxu0 %v51
    %1876 = vmatpush.msra.mxu0 %v50
    %1877 = vmatpush.msra.mxu0 %v49
    %1878 = vmatpush.msra.mxu0 %v48
    %1879 = vmatpush.msra.mxu0 %v47
    %1880 = vmatpush.msra.mxu0 %v46
    %1881 = vmatpush.msra.mxu0 %v45
    %1882 = vmatmul.f32.gmra.mxu0 %v1864
    %v1883 = vpop.f32.mrf.mxu0
    %v1884 = vadd.f32 %v939, %v1883
    %1885 = vdwg.mxu0
    %1887 = vrot.lane.b32.xlu0 %v1884, 32
    %v1888 = vpop.permute.xlu0 %1887
    %v1890 = vadd.f32 %v1836, %v1888
    %1892 = vrot.lane.b32.xlu0 %v1890, 96
    %v1893 = vpop.permute.xlu0 %1892
    %v1895 = vsel %vm66, %v1893, 0.0
    %1896 = vadd.xlane.f32.xlu0 %v1895
    %v1897 = vpop.xlane.xlu0 %1896
    %v1898 = vmul.f32 %v1897, %v440
    %v1899 = vsub.f32 %v1890, %v1898
    %v1900 = vmul.f32 %v1899, %v1899
    %1902 = vrot.lane.b32.xlu0 %v1900, 96
    %v1903 = vpop.permute.xlu0 %1902
    %v1905 = vsel %vm66, %v1903, 0.0
    %1906 = vadd.xlane.f32.xlu0 %v1905
    %v1907 = vpop.xlane.xlu0 %1906
    %v1908 = vmul.f32 %v1907, 0.032258064
    %v1909 = vrsqrt.pop %v1908
    %v1910 = vmul.f32 %v1909, %v1908
    %v1911 = vmul.f32 %v1910, %v1909
    %v1912 = vmul.f32 0.5, %v1911
    %v1913 = vsub.f32 1.5, %v1912
    %v1914 = vmul.f32 %v1909, %v1913
    %v1915 = vmul.f32 %v1908, %v1914
    %vm1916 = vcmp.eq.f32.partialorder %v1908, inf
    %v1917 = vsel %vm1916, %v1908, %v1915
    %vm1918 = vcmp.eq.f32.partialorder %v1908, 0.0
    %v1919 = vand.u32 %v1908, 2147483648
    %v1920 = vsel %vm1918, %v1919, %v1917
    %v1921 = vadd.f32 %v1920, 1e-06
    %v1922 = vrcp.pop %v1921
    %v1923 = vmul.f32 %v1921, %v1922
    %v1924 = vsub.f32 1.0, %v1923
    %v1925 = vmul.f32 %v1922, %v1924
    %v1926 = vadd.f32 %v1922, %v1925
    %vm1927 = vweird.f32 %v1921
    %vm1928 = vweird.f32 %v1922
    %vm1929 = vmor %vm1927, %vm1928
    %v1930 = vsel %vm1929, %v1922, %v1926
    %v1931 = vand.u32 2147483647, %v1921
    %vm1932 = vcmp.eq.f32.partialorder %v1931, 8.507059e+37
    %v1933 = vand.u32 %v1921, 2147483648
    %v1934 = vor.u32 1.1754944e-38, %v1933
    %v1935 = vsel %vm1932, %v1934, %v1930
    %v1936 = vmul.f32 %v1899, %v1935
    %1938 = vrot.lane.b32.xlu0 %v1936, 64
    %v1939 = vpop.permute.xlu0 %1938
    %v1941 = vmul.f32 %v482, %v1939
    %v1942 = vadd.f32 %v1941, %v1024
    %1944 = vrot.lane.b32.xlu0 %v1942, 32
    %v1945 = vpop.permute.xlu0 %1944
    %s1947 = scalar_lea.vmem [#allocation6], 8
    %1948 = vst.msk [vmem:[%s1947] sm:$0xff] %vm66, %v1945
    // Predicated region
    $region26: #{tpu_custom_call.1} parent=1 // pred_check
      _
    $region27: #{tpu_custom_call.1} parent=1 // pred_check_branch
      %1950 = sbr.rel (0) target = $region29
    $region28: #{tpu_custom_call.1} parent=1 // pred_region
      %1952 = vsyncadd [#allocation5], 0
      %s1953 = sshll.u32 [#allocation6], 4
      %s1954 = int_to_ptr.vmem [resolvable:$true] %s1953
      %s1955 = sshll.u32 %s5, 4
      %s1956 = int_to_ptr.hbm [resolvable:$true] %s1955
      %1961 = dma.vmem_to_hbm [thread:$0]  %s1954, 256, %s1956, [#allocation5], 128, 128, 8
    $region29: #{tpu_custom_call.1} parent=1 // pred_fallthru
      _
    // Predicated region
    $region30: #{tpu_custom_call.1} parent=1 // pred_check
      _
    $region31: #{tpu_custom_call.1} parent=1 // pred_check_branch
      %1963 = sbr.rel (0) target = $region33
    $region32: #{tpu_custom_call.1} parent=1 // pred_region
      %1965 = dma.done [#allocation5], 256
    $region33: #{tpu_custom_call.1} parent=1 // pred_fallthru
      _
    %1966 = vsyncpa [#allocation4], 1
    %1967 = vsyncpa [#allocation5], 1

</llo_original>
